<compile_context>
chip_gen: v7x
topology: tpu7x:2x2x1
jax: 0.10.0
libtpu: 0.0.40
codegen_flags: <defaults>
</compile_context>

<pallas_src>
import functools

import numpy as np

import jax
import jax.numpy as jnp
from jax import lax
from jax.experimental import pallas as pl
from jax.experimental.pallas import tpu as pltpu


# -----------------------------------------------------------------------------
# Banded-weight construction (wrapper side, runs once per call on tiny data).
#
# For a 3x3 SAME conv, output row y only needs padded input rows y..y+2, so per
# dy the conv along W is a matmul:   out[y, (x, co)] = pad[y+dy, (j, ci)] @ W_dy
# with W_dy[(j, ci), (x, co)] = w[dy, j-x, ci, co] for 0 <= j-x <= 2, else 0.
# Output columns are ordered (pair, x_half, co) with x = 2*x_half + pair so the
# 2x1 x-max-pool becomes max of the two contiguous lane halves.
# -----------------------------------------------------------------------------
def _banded_conv_weight(w_hwio, w_out, w_pad, rows_channel_major):
    kh, kw, cin, cout = w_hwio.shape          # (3, 3, Cin, Cout)
    sh = np.zeros((kw, w_pad, w_out), np.float32)
    for dx in range(kw):
        sh[dx, np.arange(w_out) + dx, np.arange(w_out)] = 1.0
    sh = jnp.asarray(sh)
    if rows_channel_major:                     # rows ordered (ci, j)
        e = jnp.einsum("djx,ydco->ycjxo", sh, w_hwio)        # (3, Cin, Wp, Wo, Co)
        e = e.reshape(kh, cin, w_pad, w_out // 2, 2, cout)
        e = e.transpose(0, 1, 2, 4, 3, 5)                     # (.., j, pair, x_half, co)
    else:                                      # rows ordered (j, ci)
        e = jnp.einsum("djx,ydco->yjcxo", sh, w_hwio)         # (3, Wp, Cin, Wo, Co)
        e = e.reshape(kh, w_pad, cin, w_out // 2, 2, cout)
        e = e.transpose(0, 1, 2, 4, 3, 5)
    return e.reshape(kh, w_pad * cin, w_out * cout)


# -----------------------------------------------------------------------------
# Fully fused kernel: one batch block (bb images) -> logits (1, bb, 10).
# -----------------------------------------------------------------------------
def _cnn_kernel(x_ref, wb1_ref, b1t_ref, wb2_ref, b2t_ref,
                wfc1_ref, bfc1_ref, wfc2_ref, bfc2_ref,
                o_ref, pad1_ref, pad2_ref, *, bb):
    # x_ref   : (bb, 3, 32, 32) f32   raw NCHW input block
    # wb1_ref : (3, 102, 512)   bf16  banded conv1 weights, rows (ci, j), cols (pair, x/2, co)
    # b1t_ref : (1, 256)        f32   conv1 bias tiled over x/2
    # wb2_ref : (3, 288, 512)   bf16  banded conv2 weights, rows (j, ci), cols (pair, x/2, co)
    # b2t_ref : (1, 256)        f32   conv2 bias tiled over x/2
    # wfc1_ref: (8, 256, 128)   bf16  fc1 weight, rows permuted to (h, w, c)
    # bfc1_ref: (1, 128)        f32
    # wfc2_ref: (128, 10)       bf16
    # bfc2_ref: (1, 10)         f32
    # o_ref   : (1, bb, 10)     f32
    # pad1_ref: (bb, 34, 102)   bf16  VMEM scratch, lanes = (ci, padded x)
    # pad2_ref: (bb, 18, 288)   bf16  VMEM scratch, lanes = (padded x, ci)
    f32 = jnp.float32
    bf16 = jnp.bfloat16

    # ---------------- conv1 (3 -> 16) ----------------------------------------
    # Zero only the 1-pixel border every step (interior fully overwritten); this
    # stays correct even when the parallel batch axis is split across cores.
    zrow = jnp.zeros((bb, 1, 102), bf16)
    pad1_ref[:, 0:1, :] = zrow
    pad1_ref[:, 33:34, :] = zrow
    zcol = jnp.zeros((bb, 34, 1), bf16)
    for ci in range(3):
        base = ci * 34
        pad1_ref[:, :, base:base + 1] = zcol
        pad1_ref[:, :, base + 33:base + 34] = zcol
        pad1_ref[:, 1:33, base + 1:base + 33] = x_ref[:, ci].astype(bf16)

    acc1 = None
    for dy in range(3):
        lhs = pad1_ref[:, dy:dy + 32, :].reshape(bb * 32, 102)
        part = jnp.dot(lhs, wb1_ref[dy], preferred_element_type=f32)
        acc1 = part if acc1 is None else acc1 + part            # (bb*32, 512)

    a = acc1.reshape(bb, 16, 2, 512)
    a = jnp.maximum(a[:, :, 0, :], a[:, :, 1, :])               # 2x1 pool over H
    a = jnp.maximum(a[:, :, 0:256], a[:, :, 256:512])           # 1x2 pool over W (lane halves)
    h1 = jnp.maximum(a + b1t_ref[...], 0.0)                     # bias + ReLU  (bb, 16, 256)

    # ---------------- conv2 (16 -> 32) ----------------------------------------
    zrow2 = jnp.zeros((bb, 1, 288), bf16)
    pad2_ref[:, 0:1, :] = zrow2
    pad2_ref[:, 17:18, :] = zrow2
    zcol2 = jnp.zeros((bb, 18, 16), bf16)
    pad2_ref[:, :, 0:16] = zcol2
    pad2_ref[:, :, 272:288] = zcol2
    pad2_ref[:, 1:17, 16:272] = h1.astype(bf16)                 # channels-in-lanes interior

    acc2 = None
    for dy in range(3):
        lhs = pad2_ref[:, dy:dy + 16, :].reshape(bb * 16, 288)
        part = jnp.dot(lhs, wb2_ref[dy], preferred_element_type=f32)
        acc2 = part if acc2 is None else acc2 + part            # (bb*16, 512)

    c = acc2.reshape(bb, 8, 2, 512)
    c = jnp.maximum(c[:, :, 0, :], c[:, :, 1, :])               # pool over H
    c = jnp.maximum(c[:, :, 0:256], c[:, :, 256:512])           # pool over W
    h2 = jnp.maximum(c + b2t_ref[...], 0.0).astype(bf16)        # (bb, 8, 256) = (y, (x, c))

    # ---------------- fc1 + ReLU + fc2 ----------------------------------------
    # fc1 contracts the (y, x, c) flatten; instead of a lane<->sublane reshape we
    # sum 8 per-row matmuls (wfc1 rows were pre-permuted to (h, w, c) order).
    hf = None
    for y in range(8):
        part = jnp.dot(h2[:, y, :], wfc1_ref[y], preferred_element_type=f32)
        hf = part if hf is None else hf + part                  # (bb, 128)
    hf = jnp.maximum(hf + bfc1_ref[...], 0.0).astype(bf16)
    logits = jnp.dot(hf, wfc2_ref[...], preferred_element_type=f32)
    o_ref[...] = (logits + bfc2_ref[...]).reshape(1, bb, 10)


# -----------------------------------------------------------------------------
# Wrapper
# -----------------------------------------------------------------------------
def _pick_batch_block(B, cap=8):
    """Largest divisor of B that is <= cap and leaves >=2 grid steps (v7x)."""
    if B <= 1:
        return max(B, 1)
    target = min(cap, max(1, B // 2))
    for bb in range(target, 0, -1):
        if B % bb == 0:
            return bb
    return 1


@jax.jit
def simple_cnn_forward(x_nchw, params):
    B, C, H, W = x_nchw.shape
    assert (C, H, W) == (3, 32, 32), "SimpleCNN expects 3x32x32 inputs"

    bb = _pick_batch_block(B)
    nb = B // bb

    # ---- one-time weight preprocessing (param-only, tiny) --------------------
    wb1 = _banded_conv_weight(params["w_conv1"], w_out=32, w_pad=34,
                              rows_channel_major=True).astype(jnp.bfloat16)   # (3,102,512)
    wb2 = _banded_conv_weight(params["w_conv2"], w_out=16, w_pad=18,
                              rows_channel_major=False).astype(jnp.bfloat16)  # (3,288,512)
    b1t = jnp.tile(params["b_conv1"].astype(jnp.float32), 16).reshape(1, 256)
    b2t = jnp.tile(params["b_conv2"].astype(jnp.float32), 8).reshape(1, 256)
    # Fold torch's NCHW flatten (c, h, w) into a row permutation of w_fc1 so the
    # kernel's (y, x, c) layout feeds fc1 directly.
    wfc1 = (params["w_fc1"].reshape(32, 8, 8, 128).transpose(1, 2, 0, 3)
            .reshape(8, 256, 128).astype(jnp.bfloat16))
    bfc1 = params["b_fc1"].reshape(1, 128).astype(jnp.float32)
    wfc2 = params["w_fc2"].astype(jnp.bfloat16)
    bfc2 = params["b_fc2"].reshape(1, 10).astype(jnp.float32)

    out = pl.pallas_call(
        functools.partial(_cnn_kernel, bb=bb),
        out_shape=jax.ShapeDtypeStruct((nb, bb, 10), jnp.float32),
        grid_spec=pltpu.PrefetchScalarGridSpec(
            num_scalar_prefetch=0,
            grid=(nb,),
            in_specs=[
                pl.BlockSpec((bb, 3, 32, 32), lambda i: (i, 0, 0, 0)),
                pl.BlockSpec((3, 102, 512), lambda i: (0, 0, 0)),
                pl.BlockSpec((1, 256), lambda i: (0, 0)),
                pl.BlockSpec((3, 288, 512), lambda i: (0, 0, 0)),
                pl.BlockSpec((1, 256), lambda i: (0, 0)),
                pl.BlockSpec((8, 256, 128), lambda i: (0, 0, 0)),
                pl.BlockSpec((1, 128), lambda i: (0, 0)),
                pl.BlockSpec((128, 10), lambda i: (0, 0)),
                pl.BlockSpec((1, 10), lambda i: (0, 0)),
            ],
            out_specs=pl.BlockSpec((1, bb, 10), lambda i: (i, 0, 0)),
            scratch_shapes=[
                pltpu.VMEM((bb, 34, 102), jnp.bfloat16),   # padded conv1 input, lanes (ci, x)
                pltpu.VMEM((bb, 18, 288), jnp.bfloat16),   # padded conv2 input, lanes (x, ci)
            ],
        ),
        compiler_params=pltpu.CompilerParams(
            dimension_semantics=("parallel",)),            # v7x: batch blocks across both TCs
    )(x_nchw.astype(jnp.float32), wb1, b1t, wb2, b2t, wfc1, bfc1, wfc2, bfc2)

    return out.reshape(B, 10)


# -----------------------------------------------------------------------------
# Pure-JAX reference (same bf16-matmul / f32-accumulate numerics as the kernel)
# -----------------------------------------------------------------------------
def reference_forward(x_nchw, params):
    x = jnp.transpose(x_nchw, (0, 2, 3, 1))

    def conv_block(x, w, b):
        y = lax.conv_general_dilated(
            x.astype(jnp.bfloat16), w.astype(jnp.bfloat16),
            window_strides=(1, 1), padding="SAME",
            dimension_numbers=("NHWC", "HWIO", "NHWC"),
            preferred_element_type=jnp.float32)
        y = jnp.maximum(y + b, 0.0)
        B, H, W, C = y.shape
        return y.reshape(B, H // 2, 2, W // 2, 2, C).max(axis=(2, 4))

    x = conv_block(x, params["w_conv1"], params["b_conv1"])
    x = conv_block(x, params["w_conv2"], params["b_conv2"])
    x = jnp.transpose(x, (0, 3, 1, 2)).reshape(x.shape[0], -1)   # torch NCHW flatten
    h = jnp.maximum(
        jnp.dot(x.astype(jnp.bfloat16), params["w_fc1"].astype(jnp.bfloat16),
                preferred_element_type=jnp.float32) + params["b_fc1"], 0.0)
    return jnp.dot(h.astype(jnp.bfloat16), params["w_fc2"].astype(jnp.bfloat16),
                   preferred_element_type=jnp.float32) + params["b_fc2"]


def init_params(key):
    ks = jax.random.split(key, 8)
    return {
        # conv weights stored as HWIO (torch OIHW transposed)
        "w_conv1": jax.random.normal(ks[0], (3, 3, 3, 16), jnp.float32) * 0.1,
        "b_conv1": jax.random.normal(ks[1], (16,), jnp.float32) * 0.01,
        "w_conv2": jax.random.normal(ks[2], (3, 3, 16, 32), jnp.float32) * 0.05,
        "b_conv2": jax.random.normal(ks[3], (32,), jnp.float32) * 0.01,
        # fc weights stored as (in, out) == torch weight.T, rows in torch (c,h,w) order
        "w_fc1": jax.random.normal(ks[4], (32 * 8 * 8, 128), jnp.float32) * 0.02,
        "b_fc1": jax.random.normal(ks[5], (128,), jnp.float32) * 0.01,
        "w_fc2": jax.random.normal(ks[6], (128, 10), jnp.float32) * 0.05,
        "b_fc2": jax.random.normal(ks[7], (10,), jnp.float32) * 0.01,
    }


if __name__ == "__main__":
    key = jax.random.PRNGKey(0)
    pkey, xkey = jax.random.split(key)
    params = init_params(pkey)

    # batch=2, channels=3, spatial=32x32 (the 32*8*8 flatten implies 32x32 input)
    x = jax.random.normal(xkey, (2, 3, 32, 32), jnp.float32)

    out = jax.block_until_ready(simple_cnn_forward(x, params))
    ref = jax.block_until_ready(reference_forward(x, params))

    assert out.shape == (2, 10), out.shape
    max_err = float(jnp.max(jnp.abs(out - ref)))
    assert jnp.allclose(out, ref, rtol=2e-2, atol=2e-2), (
        "mismatch vs reference: max abs err = %e" % max_err)

    print("KERNEL_OK")
</pallas_src>

<mosaic_0001>
module attributes {stable_mosaic.version = 11 : i64} {
  func.func @_cnn_kernel(%arg0: i32, %arg1: memref<1x3x32x32xf32, #tpu.memory_space<vmem>>, %arg2: memref<3x102x512xbf16, #tpu.memory_space<vmem>>, %arg3: memref<1x256xf32, #tpu.memory_space<vmem>>, %arg4: memref<3x288x512xbf16, #tpu.memory_space<vmem>>, %arg5: memref<1x256xf32, #tpu.memory_space<vmem>>, %arg6: memref<8x256x128xbf16, #tpu.memory_space<vmem>>, %arg7: memref<1x128xf32, #tpu.memory_space<vmem>>, %arg8: memref<128x10xbf16, #tpu.memory_space<vmem>>, %arg9: memref<1x10xf32, #tpu.memory_space<vmem>>, %arg10: memref<1x1x10xf32, #tpu.memory_space<vmem>>, %arg11: memref<1x34x102xbf16, #tpu.memory_space<vmem>>, %arg12: memref<1x18x288xbf16, #tpu.memory_space<vmem>>) attributes {dimension_semantics = [#tpu.dimension_semantics<parallel>], iteration_bounds = array<i64: 2>, scalar_prefetch = 0 : i64, scratch_operands = 2 : i64, tpu.core_type = #tpu.core_type<tc>, window_params = [{transform_indices = @transform_0, window_bounds = array<i64: 1, 3, 32, 32>}, {pipeline_mode = #tpu.pipeline_mode<synchronous>, transform_indices = @transform_1, window_bounds = array<i64: 3, 102, 512>}, {pipeline_mode = #tpu.pipeline_mode<synchronous>, transform_indices = @transform_2, window_bounds = array<i64: 1, 256>}, {pipeline_mode = #tpu.pipeline_mode<synchronous>, transform_indices = @transform_3, window_bounds = array<i64: 3, 288, 512>}, {pipeline_mode = #tpu.pipeline_mode<synchronous>, transform_indices = @transform_4, window_bounds = array<i64: 1, 256>}, {pipeline_mode = #tpu.pipeline_mode<synchronous>, transform_indices = @transform_5, window_bounds = array<i64: 8, 256, 128>}, {pipeline_mode = #tpu.pipeline_mode<synchronous>, transform_indices = @transform_6, window_bounds = array<i64: 1, 128>}, {pipeline_mode = #tpu.pipeline_mode<synchronous>, transform_indices = @transform_7, window_bounds = array<i64: 128, 10>}, {pipeline_mode = #tpu.pipeline_mode<synchronous>, transform_indices = @transform_8, window_bounds = array<i64: 1, 10>}, {transform_indices = @transform_9, window_bounds = array<i64: 1, 1, 10>}]} {
    %cst = arith.constant 0.000000e+00 : bf16
    %0 = vector.broadcast %cst : bf16 to vector<1x1x102xbf16>
    %c0 = arith.constant 0 : index
    %c0_0 = arith.constant 0 : index
    %c0_1 = arith.constant 0 : index
    %1 = vector.load %arg11[%c0, %c0_0, %c0_1] : memref<1x34x102xbf16, #tpu.memory_space<vmem>>, vector<1x1x102xbf16>
    tpu.vector_store %arg11[%c0, %c0_0, %c0_1], %0 {strides = array<i32>} : memref<1x34x102xbf16, #tpu.memory_space<vmem>>, vector<1x1x102xbf16>,
    %c0_2 = arith.constant 0 : index
    %c33 = arith.constant 33 : index
    %c0_3 = arith.constant 0 : index
    %2 = vector.load %arg11[%c0_2, %c33, %c0_3] : memref<1x34x102xbf16, #tpu.memory_space<vmem>>, vector<1x1x102xbf16>
    tpu.vector_store %arg11[%c0_2, %c33, %c0_3], %0 {strides = array<i32>} : memref<1x34x102xbf16, #tpu.memory_space<vmem>>, vector<1x1x102xbf16>,
    %cst_4 = arith.constant 0.000000e+00 : bf16
    %3 = vector.broadcast %cst_4 : bf16 to vector<1x34x1xbf16>
    %c0_5 = arith.constant 0 : index
    %c0_6 = arith.constant 0 : index
    %c0_7 = arith.constant 0 : index
    %4 = vector.load %arg11[%c0_5, %c0_6, %c0_7] : memref<1x34x102xbf16, #tpu.memory_space<vmem>>, vector<1x34x1xbf16>
    tpu.vector_store %arg11[%c0_5, %c0_6, %c0_7], %3 {strides = array<i32>} : memref<1x34x102xbf16, #tpu.memory_space<vmem>>, vector<1x34x1xbf16>,
    %c0_8 = arith.constant 0 : index
    %c0_9 = arith.constant 0 : index
    %c33_10 = arith.constant 33 : index
    %5 = vector.load %arg11[%c0_8, %c0_9, %c33_10] : memref<1x34x102xbf16, #tpu.memory_space<vmem>>, vector<1x34x1xbf16>
    tpu.vector_store %arg11[%c0_8, %c0_9, %c33_10], %3 {strides = array<i32>} : memref<1x34x102xbf16, #tpu.memory_space<vmem>>, vector<1x34x1xbf16>,
    %c0_11 = arith.constant 0 : index
    %c0_12 = arith.constant 0 : index
    %c0_13 = arith.constant 0 : index
    %c0_14 = arith.constant 0 : index
    %6 = vector.load %arg1[%c0_11, %c0_12, %c0_13, %c0_14] : memref<1x3x32x32xf32, #tpu.memory_space<vmem>>, vector<1x1x32x32xf32>
    %7 = vector.shape_cast %6 : vector<1x1x32x32xf32> to vector<1x32x32xf32>
    %8 = arith.truncf %7 : vector<1x32x32xf32> to vector<1x32x32xbf16>
    %c0_15 = arith.constant 0 : index
    %c1 = arith.constant 1 : index
    %c1_16 = arith.constant 1 : index
    %9 = vector.load %arg11[%c0_15, %c1, %c1_16] : memref<1x34x102xbf16, #tpu.memory_space<vmem>>, vector<1x32x32xbf16>
    tpu.vector_store %arg11[%c0_15, %c1, %c1_16], %8 {strides = array<i32>} : memref<1x34x102xbf16, #tpu.memory_space<vmem>>, vector<1x32x32xbf16>,
    %c0_17 = arith.constant 0 : index
    %c0_18 = arith.constant 0 : index
    %c34 = arith.constant 34 : index
    %10 = vector.load %arg11[%c0_17, %c0_18, %c34] : memref<1x34x102xbf16, #tpu.memory_space<vmem>>, vector<1x34x1xbf16>
    tpu.vector_store %arg11[%c0_17, %c0_18, %c34], %3 {strides = array<i32>} : memref<1x34x102xbf16, #tpu.memory_space<vmem>>, vector<1x34x1xbf16>,
    %c0_19 = arith.constant 0 : index
    %c0_20 = arith.constant 0 : index
    %c67 = arith.constant 67 : index
    %11 = vector.load %arg11[%c0_19, %c0_20, %c67] : memref<1x34x102xbf16, #tpu.memory_space<vmem>>, vector<1x34x1xbf16>
    tpu.vector_store %arg11[%c0_19, %c0_20, %c67], %3 {strides = array<i32>} : memref<1x34x102xbf16, #tpu.memory_space<vmem>>, vector<1x34x1xbf16>,
    %c0_21 = arith.constant 0 : index
    %c1_22 = arith.constant 1 : index
    %c0_23 = arith.constant 0 : index
    %c0_24 = arith.constant 0 : index
    %12 = vector.load %arg1[%c0_21, %c1_22, %c0_23, %c0_24] : memref<1x3x32x32xf32, #tpu.memory_space<vmem>>, vector<1x1x32x32xf32>
    %13 = vector.shape_cast %12 : vector<1x1x32x32xf32> to vector<1x32x32xf32>
    %14 = arith.truncf %13 : vector<1x32x32xf32> to vector<1x32x32xbf16>
    %c0_25 = arith.constant 0 : index
    %c1_26 = arith.constant 1 : index
    %c35 = arith.constant 35 : index
    %15 = vector.load %arg11[%c0_25, %c1_26, %c35] : memref<1x34x102xbf16, #tpu.memory_space<vmem>>, vector<1x32x32xbf16>
    tpu.vector_store %arg11[%c0_25, %c1_26, %c35], %14 {strides = array<i32>} : memref<1x34x102xbf16, #tpu.memory_space<vmem>>, vector<1x32x32xbf16>,
    %c0_27 = arith.constant 0 : index
    %c0_28 = arith.constant 0 : index
    %c68 = arith.constant 68 : index
    %16 = vector.load %arg11[%c0_27, %c0_28, %c68] : memref<1x34x102xbf16, #tpu.memory_space<vmem>>, vector<1x34x1xbf16>
    tpu.vector_store %arg11[%c0_27, %c0_28, %c68], %3 {strides = array<i32>} : memref<1x34x102xbf16, #tpu.memory_space<vmem>>, vector<1x34x1xbf16>,
    %c0_29 = arith.constant 0 : index
    %c0_30 = arith.constant 0 : index
    %c101 = arith.constant 101 : index
    %17 = vector.load %arg11[%c0_29, %c0_30, %c101] : memref<1x34x102xbf16, #tpu.memory_space<vmem>>, vector<1x34x1xbf16>
    tpu.vector_store %arg11[%c0_29, %c0_30, %c101], %3 {strides = array<i32>} : memref<1x34x102xbf16, #tpu.memory_space<vmem>>, vector<1x34x1xbf16>,
    %c0_31 = arith.constant 0 : index
    %c2 = arith.constant 2 : index
    %c0_32 = arith.constant 0 : index
    %c0_33 = arith.constant 0 : index
    %18 = vector.load %arg1[%c0_31, %c2, %c0_32, %c0_33] : memref<1x3x32x32xf32, #tpu.memory_space<vmem>>, vector<1x1x32x32xf32>
    %19 = vector.shape_cast %18 : vector<1x1x32x32xf32> to vector<1x32x32xf32>
    %20 = arith.truncf %19 : vector<1x32x32xf32> to vector<1x32x32xbf16>
    %c0_34 = arith.constant 0 : index
    %c1_35 = arith.constant 1 : index
    %c69 = arith.constant 69 : index
    %21 = vector.load %arg11[%c0_34, %c1_35, %c69] : memref<1x34x102xbf16, #tpu.memory_space<vmem>>, vector<1x32x32xbf16>
    tpu.vector_store %arg11[%c0_34, %c1_35, %c69], %20 {strides = array<i32>} : memref<1x34x102xbf16, #tpu.memory_space<vmem>>, vector<1x32x32xbf16>,
    %c0_36 = arith.constant 0 : index
    %c0_37 = arith.constant 0 : index
    %c0_38 = arith.constant 0 : index
    %22 = vector.load %arg11[%c0_36, %c0_37, %c0_38] : memref<1x34x102xbf16, #tpu.memory_space<vmem>>, vector<1x32x102xbf16>
    %23 = vector.shape_cast %22 : vector<1x32x102xbf16> to vector<32x102xbf16>
    %c0_39 = arith.constant 0 : index
    %c0_40 = arith.constant 0 : index
    %c0_41 = arith.constant 0 : index
    %24 = vector.load %arg2[%c0_39, %c0_40, %c0_41] : memref<3x102x512xbf16, #tpu.memory_space<vmem>>, vector<1x102x512xbf16>
    %25 = vector.shape_cast %24 : vector<1x102x512xbf16> to vector<102x512xbf16>
    %cst_42 = arith.constant dense<0.000000e+00> : vector<32x512xf32>
    %26 = tpu.matmul %23, %25, %cst_42 {dimension_numbers = #tpu.dot_dimension_numbers<[1], [0], [0], [1], [0, 0, 1, 1], [], []>} : vector<32x102xbf16>, vector<102x512xbf16>, vector<32x512xf32> -> vector<32x512xf32>
    %c0_43 = arith.constant 0 : index
    %c1_44 = arith.constant 1 : index
    %c0_45 = arith.constant 0 : index
    %27 = vector.load %arg11[%c0_43, %c1_44, %c0_45] : memref<1x34x102xbf16, #tpu.memory_space<vmem>>, vector<1x32x102xbf16>
    %28 = vector.shape_cast %27 : vector<1x32x102xbf16> to vector<32x102xbf16>
    %c1_46 = arith.constant 1 : index
    %c0_47 = arith.constant 0 : index
    %c0_48 = arith.constant 0 : index
    %29 = vector.load %arg2[%c1_46, %c0_47, %c0_48] : memref<3x102x512xbf16, #tpu.memory_space<vmem>>, vector<1x102x512xbf16>
    %30 = vector.shape_cast %29 : vector<1x102x512xbf16> to vector<102x512xbf16>
    %cst_49 = arith.constant dense<0.000000e+00> : vector<32x512xf32>
    %31 = tpu.matmul %28, %30, %cst_49 {dimension_numbers = #tpu.dot_dimension_numbers<[1], [0], [0], [1], [0, 0, 1, 1], [], []>} : vector<32x102xbf16>, vector<102x512xbf16>, vector<32x512xf32> -> vector<32x512xf32>
    %32 = arith.addf %26, %31 : vector<32x512xf32>
    %c0_50 = arith.constant 0 : index
    %c2_51 = arith.constant 2 : index
    %c0_52 = arith.constant 0 : index
    %33 = vector.load %arg11[%c0_50, %c2_51, %c0_52] : memref<1x34x102xbf16, #tpu.memory_space<vmem>>, vector<1x32x102xbf16>
    %34 = vector.shape_cast %33 : vector<1x32x102xbf16> to vector<32x102xbf16>
    %c2_53 = arith.constant 2 : index
    %c0_54 = arith.constant 0 : index
    %c0_55 = arith.constant 0 : index
    %35 = vector.load %arg2[%c2_53, %c0_54, %c0_55] : memref<3x102x512xbf16, #tpu.memory_space<vmem>>, vector<1x102x512xbf16>
    %36 = vector.shape_cast %35 : vector<1x102x512xbf16> to vector<102x512xbf16>
    %cst_56 = arith.constant dense<0.000000e+00> : vector<32x512xf32>
    %37 = tpu.matmul %34, %36, %cst_56 {dimension_numbers = #tpu.dot_dimension_numbers<[1], [0], [0], [1], [0, 0, 1, 1], [], []>} : vector<32x102xbf16>, vector<102x512xbf16>, vector<32x512xf32> -> vector<32x512xf32>
    %38 = arith.addf %32, %37 : vector<32x512xf32>
    %39 = vector.shape_cast %38 : vector<32x512xf32> to vector<1x16x2x512xf32>
    %40 = vector.extract_strided_slice %39 {offsets = [0, 0, 0, 0], sizes = [1, 16, 1, 512], strides = [1, 1, 1, 1]} : vector<1x16x2x512xf32> to vector<1x16x1x512xf32>
    %41 = vector.shape_cast %40 : vector<1x16x1x512xf32> to vector<1x16x512xf32>
    %42 = vector.extract_strided_slice %39 {offsets = [0, 0, 1, 0], sizes = [1, 16, 1, 512], strides = [1, 1, 1, 1]} : vector<1x16x2x512xf32> to vector<1x16x1x512xf32>
    %43 = vector.shape_cast %42 : vector<1x16x1x512xf32> to vector<1x16x512xf32>
    %44 = arith.maximumf %41, %43 : vector<1x16x512xf32>
    %45 = vector.extract_strided_slice %44 {offsets = [0, 0, 0], sizes = [1, 16, 256], strides = [1, 1, 1]} : vector<1x16x512xf32> to vector<1x16x256xf32>
    %46 = vector.extract_strided_slice %44 {offsets = [0, 0, 256], sizes = [1, 16, 256], strides = [1, 1, 1]} : vector<1x16x512xf32> to vector<1x16x256xf32>
    %47 = arith.maximumf %45, %46 : vector<1x16x256xf32>
    %c0_57 = arith.constant 0 : index
    %c0_58 = arith.constant 0 : index
    %48 = vector.load %arg3[%c0_57, %c0_58] : memref<1x256xf32, #tpu.memory_space<vmem>>, vector<1x256xf32>
    %49 = vector.shape_cast %48 : vector<1x256xf32> to vector<1x1x256xf32>
    %50 = vector.broadcast %49 : vector<1x1x256xf32> to vector<1x16x256xf32>
    %51 = arith.addf %47, %50 : vector<1x16x256xf32>
    %cst_59 = arith.constant 0.000000e+00 : f32
    %52 = vector.broadcast %cst_59 : f32 to vector<1x16x256xf32>
    %53 = arith.maximumf %51, %52 : vector<1x16x256xf32>
    %cst_60 = arith.constant 0.000000e+00 : bf16
    %54 = vector.broadcast %cst_60 : bf16 to vector<1x1x288xbf16>
    %c0_61 = arith.constant 0 : index
    %c0_62 = arith.constant 0 : index
    %c0_63 = arith.constant 0 : index
    %55 = vector.load %arg12[%c0_61, %c0_62, %c0_63] : memref<1x18x288xbf16, #tpu.memory_space<vmem>>, vector<1x1x288xbf16>
    tpu.vector_store %arg12[%c0_61, %c0_62, %c0_63], %54 {strides = array<i32>} : memref<1x18x288xbf16, #tpu.memory_space<vmem>>, vector<1x1x288xbf16>,
    %c0_64 = arith.constant 0 : index
    %c17 = arith.constant 17 : index
    %c0_65 = arith.constant 0 : index
    %56 = vector.load %arg12[%c0_64, %c17, %c0_65] : memref<1x18x288xbf16, #tpu.memory_space<vmem>>, vector<1x1x288xbf16>
    tpu.vector_store %arg12[%c0_64, %c17, %c0_65], %54 {strides = array<i32>} : memref<1x18x288xbf16, #tpu.memory_space<vmem>>, vector<1x1x288xbf16>,
    %cst_66 = arith.constant 0.000000e+00 : bf16
    %57 = vector.broadcast %cst_66 : bf16 to vector<1x18x16xbf16>
    %c0_67 = arith.constant 0 : index
    %c0_68 = arith.constant 0 : index
    %c0_69 = arith.constant 0 : index
    %58 = vector.load %arg12[%c0_67, %c0_68, %c0_69] : memref<1x18x288xbf16, #tpu.memory_space<vmem>>, vector<1x18x16xbf16>
    tpu.vector_store %arg12[%c0_67, %c0_68, %c0_69], %57 {strides = array<i32>} : memref<1x18x288xbf16, #tpu.memory_space<vmem>>, vector<1x18x16xbf16>,
    %c0_70 = arith.constant 0 : index
    %c0_71 = arith.constant 0 : index
    %c272 = arith.constant 272 : index
    %59 = vector.load %arg12[%c0_70, %c0_71, %c272] : memref<1x18x288xbf16, #tpu.memory_space<vmem>>, vector<1x18x16xbf16>
    tpu.vector_store %arg12[%c0_70, %c0_71, %c272], %57 {strides = array<i32>} : memref<1x18x288xbf16, #tpu.memory_space<vmem>>, vector<1x18x16xbf16>,
    %60 = arith.truncf %53 : vector<1x16x256xf32> to vector<1x16x256xbf16>
    %c0_72 = arith.constant 0 : index
    %c1_73 = arith.constant 1 : index
    %c16 = arith.constant 16 : index
    %61 = vector.load %arg12[%c0_72, %c1_73, %c16] : memref<1x18x288xbf16, #tpu.memory_space<vmem>>, vector<1x16x256xbf16>
    tpu.vector_store %arg12[%c0_72, %c1_73, %c16], %60 {strides = array<i32>} : memref<1x18x288xbf16, #tpu.memory_space<vmem>>, vector<1x16x256xbf16>,
    %c0_74 = arith.constant 0 : index
    %c0_75 = arith.constant 0 : index
    %c0_76 = arith.constant 0 : index
    %62 = vector.load %arg12[%c0_74, %c0_75, %c0_76] : memref<1x18x288xbf16, #tpu.memory_space<vmem>>, vector<1x16x288xbf16>
    %63 = vector.shape_cast %62 : vector<1x16x288xbf16> to vector<16x288xbf16>
    %c0_77 = arith.constant 0 : index
    %c0_78 = arith.constant 0 : index
    %c0_79 = arith.constant 0 : index
    %64 = vector.load %arg4[%c0_77, %c0_78, %c0_79] : memref<3x288x512xbf16, #tpu.memory_space<vmem>>, vector<1x288x512xbf16>
    %65 = vector.shape_cast %64 : vector<1x288x512xbf16> to vector<288x512xbf16>
    %cst_80 = arith.constant dense<0.000000e+00> : vector<16x512xf32>
    %66 = tpu.matmul %63, %65, %cst_80 {dimension_numbers = #tpu.dot_dimension_numbers<[1], [0], [0], [1], [0, 0, 1, 1], [], []>} : vector<16x288xbf16>, vector<288x512xbf16>, vector<16x512xf32> -> vector<16x512xf32>
    %c0_81 = arith.constant 0 : index
    %c1_82 = arith.constant 1 : index
    %c0_83 = arith.constant 0 : index
    %67 = vector.load %arg12[%c0_81, %c1_82, %c0_83] : memref<1x18x288xbf16, #tpu.memory_space<vmem>>, vector<1x16x288xbf16>
    %68 = vector.shape_cast %67 : vector<1x16x288xbf16> to vector<16x288xbf16>
    %c1_84 = arith.constant 1 : index
    %c0_85 = arith.constant 0 : index
    %c0_86 = arith.constant 0 : index
    %69 = vector.load %arg4[%c1_84, %c0_85, %c0_86] : memref<3x288x512xbf16, #tpu.memory_space<vmem>>, vector<1x288x512xbf16>
    %70 = vector.shape_cast %69 : vector<1x288x512xbf16> to vector<288x512xbf16>
    %cst_87 = arith.constant dense<0.000000e+00> : vector<16x512xf32>
    %71 = tpu.matmul %68, %70, %cst_87 {dimension_numbers = #tpu.dot_dimension_numbers<[1], [0], [0], [1], [0, 0, 1, 1], [], []>} : vector<16x288xbf16>, vector<288x512xbf16>, vector<16x512xf32> -> vector<16x512xf32>
    %72 = arith.addf %66, %71 : vector<16x512xf32>
    %c0_88 = arith.constant 0 : index
    %c2_89 = arith.constant 2 : index
    %c0_90 = arith.constant 0 : index
    %73 = vector.load %arg12[%c0_88, %c2_89, %c0_90] : memref<1x18x288xbf16, #tpu.memory_space<vmem>>, vector<1x16x288xbf16>
    %74 = vector.shape_cast %73 : vector<1x16x288xbf16> to vector<16x288xbf16>
    %c2_91 = arith.constant 2 : index
    %c0_92 = arith.constant 0 : index
    %c0_93 = arith.constant 0 : index
    %75 = vector.load %arg4[%c2_91, %c0_92, %c0_93] : memref<3x288x512xbf16, #tpu.memory_space<vmem>>, vector<1x288x512xbf16>
    %76 = vector.shape_cast %75 : vector<1x288x512xbf16> to vector<288x512xbf16>
    %cst_94 = arith.constant dense<0.000000e+00> : vector<16x512xf32>
    %77 = tpu.matmul %74, %76, %cst_94 {dimension_numbers = #tpu.dot_dimension_numbers<[1], [0], [0], [1], [0, 0, 1, 1], [], []>} : vector<16x288xbf16>, vector<288x512xbf16>, vector<16x512xf32> -> vector<16x512xf32>
    %78 = arith.addf %72, %77 : vector<16x512xf32>
    %79 = vector.shape_cast %78 : vector<16x512xf32> to vector<1x8x2x512xf32>
    %80 = vector.extract_strided_slice %79 {offsets = [0, 0, 0, 0], sizes = [1, 8, 1, 512], strides = [1, 1, 1, 1]} : vector<1x8x2x512xf32> to vector<1x8x1x512xf32>
    %81 = vector.shape_cast %80 : vector<1x8x1x512xf32> to vector<1x8x512xf32>
    %82 = vector.extract_strided_slice %79 {offsets = [0, 0, 1, 0], sizes = [1, 8, 1, 512], strides = [1, 1, 1, 1]} : vector<1x8x2x512xf32> to vector<1x8x1x512xf32>
    %83 = vector.shape_cast %82 : vector<1x8x1x512xf32> to vector<1x8x512xf32>
    %84 = arith.maximumf %81, %83 : vector<1x8x512xf32>
    %85 = vector.extract_strided_slice %84 {offsets = [0, 0, 0], sizes = [1, 8, 256], strides = [1, 1, 1]} : vector<1x8x512xf32> to vector<1x8x256xf32>
    %86 = vector.extract_strided_slice %84 {offsets = [0, 0, 256], sizes = [1, 8, 256], strides = [1, 1, 1]} : vector<1x8x512xf32> to vector<1x8x256xf32>
    %87 = arith.maximumf %85, %86 : vector<1x8x256xf32>
    %c0_95 = arith.constant 0 : index
    %c0_96 = arith.constant 0 : index
    %88 = vector.load %arg5[%c0_95, %c0_96] : memref<1x256xf32, #tpu.memory_space<vmem>>, vector<1x256xf32>
    %89 = vector.shape_cast %88 : vector<1x256xf32> to vector<1x1x256xf32>
    %90 = vector.broadcast %89 : vector<1x1x256xf32> to vector<1x8x256xf32>
    %91 = arith.addf %87, %90 : vector<1x8x256xf32>
    %cst_97 = arith.constant 0.000000e+00 : f32
    %92 = vector.broadcast %cst_97 : f32 to vector<1x8x256xf32>
    %93 = arith.maximumf %91, %92 : vector<1x8x256xf32>
    %94 = arith.truncf %93 : vector<1x8x256xf32> to vector<1x8x256xbf16>
    %95 = vector.extract_strided_slice %94 {offsets = [0, 0, 0], sizes = [1, 1, 256], strides = [1, 1, 1]} : vector<1x8x256xbf16> to vector<1x1x256xbf16>
    %96 = vector.shape_cast %95 : vector<1x1x256xbf16> to vector<1x256xbf16>
    %c0_98 = arith.constant 0 : index
    %c0_99 = arith.constant 0 : index
    %c0_100 = arith.constant 0 : index
    %97 = vector.load %arg6[%c0_98, %c0_99, %c0_100] : memref<8x256x128xbf16, #tpu.memory_space<vmem>>, vector<1x256x128xbf16>
    %98 = vector.shape_cast %97 : vector<1x256x128xbf16> to vector<256x128xbf16>
    %cst_101 = arith.constant dense<0.000000e+00> : vector<1x128xf32>
    %99 = tpu.matmul %96, %98, %cst_101 {dimension_numbers = #tpu.dot_dimension_numbers<[1], [0], [0], [1], [0, 0, 1, 1], [], []>} : vector<1x256xbf16>, vector<256x128xbf16>, vector<1x128xf32> -> vector<1x128xf32>
    %100 = vector.extract_strided_slice %94 {offsets = [0, 1, 0], sizes = [1, 1, 256], strides = [1, 1, 1]} : vector<1x8x256xbf16> to vector<1x1x256xbf16>
    %101 = vector.shape_cast %100 : vector<1x1x256xbf16> to vector<1x256xbf16>
    %c1_102 = arith.constant 1 : index
    %c0_103 = arith.constant 0 : index
    %c0_104 = arith.constant 0 : index
    %102 = vector.load %arg6[%c1_102, %c0_103, %c0_104] : memref<8x256x128xbf16, #tpu.memory_space<vmem>>, vector<1x256x128xbf16>
    %103 = vector.shape_cast %102 : vector<1x256x128xbf16> to vector<256x128xbf16>
    %cst_105 = arith.constant dense<0.000000e+00> : vector<1x128xf32>
    %104 = tpu.matmul %101, %103, %cst_105 {dimension_numbers = #tpu.dot_dimension_numbers<[1], [0], [0], [1], [0, 0, 1, 1], [], []>} : vector<1x256xbf16>, vector<256x128xbf16>, vector<1x128xf32> -> vector<1x128xf32>
    %105 = arith.addf %99, %104 : vector<1x128xf32>
    %106 = vector.extract_strided_slice %94 {offsets = [0, 2, 0], sizes = [1, 1, 256], strides = [1, 1, 1]} : vector<1x8x256xbf16> to vector<1x1x256xbf16>
    %107 = vector.shape_cast %106 : vector<1x1x256xbf16> to vector<1x256xbf16>
    %c2_106 = arith.constant 2 : index
    %c0_107 = arith.constant 0 : index
    %c0_108 = arith.constant 0 : index
    %108 = vector.load %arg6[%c2_106, %c0_107, %c0_108] : memref<8x256x128xbf16, #tpu.memory_space<vmem>>, vector<1x256x128xbf16>
    %109 = vector.shape_cast %108 : vector<1x256x128xbf16> to vector<256x128xbf16>
    %cst_109 = arith.constant dense<0.000000e+00> : vector<1x128xf32>
    %110 = tpu.matmul %107, %109, %cst_109 {dimension_numbers = #tpu.dot_dimension_numbers<[1], [0], [0], [1], [0, 0, 1, 1], [], []>} : vector<1x256xbf16>, vector<256x128xbf16>, vector<1x128xf32> -> vector<1x128xf32>
    %111 = arith.addf %105, %110 : vector<1x128xf32>
    %112 = vector.extract_strided_slice %94 {offsets = [0, 3, 0], sizes = [1, 1, 256], strides = [1, 1, 1]} : vector<1x8x256xbf16> to vector<1x1x256xbf16>
    %113 = vector.shape_cast %112 : vector<1x1x256xbf16> to vector<1x256xbf16>
    %c3 = arith.constant 3 : index
    %c0_110 = arith.constant 0 : index
    %c0_111 = arith.constant 0 : index
    %114 = vector.load %arg6[%c3, %c0_110, %c0_111] : memref<8x256x128xbf16, #tpu.memory_space<vmem>>, vector<1x256x128xbf16>
    %115 = vector.shape_cast %114 : vector<1x256x128xbf16> to vector<256x128xbf16>
    %cst_112 = arith.constant dense<0.000000e+00> : vector<1x128xf32>
    %116 = tpu.matmul %113, %115, %cst_112 {dimension_numbers = #tpu.dot_dimension_numbers<[1], [0], [0], [1], [0, 0, 1, 1], [], []>} : vector<1x256xbf16>, vector<256x128xbf16>, vector<1x128xf32> -> vector<1x128xf32>
    %117 = arith.addf %111, %116 : vector<1x128xf32>
    %118 = vector.extract_strided_slice %94 {offsets = [0, 4, 0], sizes = [1, 1, 256], strides = [1, 1, 1]} : vector<1x8x256xbf16> to vector<1x1x256xbf16>
    %119 = vector.shape_cast %118 : vector<1x1x256xbf16> to vector<1x256xbf16>
    %c4 = arith.constant 4 : index
    %c0_113 = arith.constant 0 : index
    %c0_114 = arith.constant 0 : index
    %120 = vector.load %arg6[%c4, %c0_113, %c0_114] : memref<8x256x128xbf16, #tpu.memory_space<vmem>>, vector<1x256x128xbf16>
    %121 = vector.shape_cast %120 : vector<1x256x128xbf16> to vector<256x128xbf16>
    %cst_115 = arith.constant dense<0.000000e+00> : vector<1x128xf32>
    %122 = tpu.matmul %119, %121, %cst_115 {dimension_numbers = #tpu.dot_dimension_numbers<[1], [0], [0], [1], [0, 0, 1, 1], [], []>} : vector<1x256xbf16>, vector<256x128xbf16>, vector<1x128xf32> -> vector<1x128xf32>
    %123 = arith.addf %117, %122 : vector<1x128xf32>
    %124 = vector.extract_strided_slice %94 {offsets = [0, 5, 0], sizes = [1, 1, 256], strides = [1, 1, 1]} : vector<1x8x256xbf16> to vector<1x1x256xbf16>
    %125 = vector.shape_cast %124 : vector<1x1x256xbf16> to vector<1x256xbf16>
    %c5 = arith.constant 5 : index
    %c0_116 = arith.constant 0 : index
    %c0_117 = arith.constant 0 : index
    %126 = vector.load %arg6[%c5, %c0_116, %c0_117] : memref<8x256x128xbf16, #tpu.memory_space<vmem>>, vector<1x256x128xbf16>
    %127 = vector.shape_cast %126 : vector<1x256x128xbf16> to vector<256x128xbf16>
    %cst_118 = arith.constant dense<0.000000e+00> : vector<1x128xf32>
    %128 = tpu.matmul %125, %127, %cst_118 {dimension_numbers = #tpu.dot_dimension_numbers<[1], [0], [0], [1], [0, 0, 1, 1], [], []>} : vector<1x256xbf16>, vector<256x128xbf16>, vector<1x128xf32> -> vector<1x128xf32>
    %129 = arith.addf %123, %128 : vector<1x128xf32>
    %130 = vector.extract_strided_slice %94 {offsets = [0, 6, 0], sizes = [1, 1, 256], strides = [1, 1, 1]} : vector<1x8x256xbf16> to vector<1x1x256xbf16>
    %131 = vector.shape_cast %130 : vector<1x1x256xbf16> to vector<1x256xbf16>
    %c6 = arith.constant 6 : index
    %c0_119 = arith.constant 0 : index
    %c0_120 = arith.constant 0 : index
    %132 = vector.load %arg6[%c6, %c0_119, %c0_120] : memref<8x256x128xbf16, #tpu.memory_space<vmem>>, vector<1x256x128xbf16>
    %133 = vector.shape_cast %132 : vector<1x256x128xbf16> to vector<256x128xbf16>
    %cst_121 = arith.constant dense<0.000000e+00> : vector<1x128xf32>
    %134 = tpu.matmul %131, %133, %cst_121 {dimension_numbers = #tpu.dot_dimension_numbers<[1], [0], [0], [1], [0, 0, 1, 1], [], []>} : vector<1x256xbf16>, vector<256x128xbf16>, vector<1x128xf32> -> vector<1x128xf32>
    %135 = arith.addf %129, %134 : vector<1x128xf32>
    %136 = vector.extract_strided_slice %94 {offsets = [0, 7, 0], sizes = [1, 1, 256], strides = [1, 1, 1]} : vector<1x8x256xbf16> to vector<1x1x256xbf16>
    %137 = vector.shape_cast %136 : vector<1x1x256xbf16> to vector<1x256xbf16>
    %c7 = arith.constant 7 : index
    %c0_122 = arith.constant 0 : index
    %c0_123 = arith.constant 0 : index
    %138 = vector.load %arg6[%c7, %c0_122, %c0_123] : memref<8x256x128xbf16, #tpu.memory_space<vmem>>, vector<1x256x128xbf16>
    %139 = vector.shape_cast %138 : vector<1x256x128xbf16> to vector<256x128xbf16>
    %cst_124 = arith.constant dense<0.000000e+00> : vector<1x128xf32>
    %140 = tpu.matmul %137, %139, %cst_124 {dimension_numbers = #tpu.dot_dimension_numbers<[1], [0], [0], [1], [0, 0, 1, 1], [], []>} : vector<1x256xbf16>, vector<256x128xbf16>, vector<1x128xf32> -> vector<1x128xf32>
    %141 = arith.addf %135, %140 : vector<1x128xf32>
    %c0_125 = arith.constant 0 : index
    %c0_126 = arith.constant 0 : index
    %142 = vector.load %arg7[%c0_125, %c0_126] : memref<1x128xf32, #tpu.memory_space<vmem>>, vector<1x128xf32>
    %143 = arith.addf %141, %142 : vector<1x128xf32>
    %cst_127 = arith.constant 0.000000e+00 : f32
    %144 = vector.broadcast %cst_127 : f32 to vector<1x128xf32>
    %145 = arith.maximumf %143, %144 : vector<1x128xf32>
    %146 = arith.truncf %145 : vector<1x128xf32> to vector<1x128xbf16>
    %c0_128 = arith.constant 0 : index
    %c0_129 = arith.constant 0 : index
    %147 = vector.load %arg8[%c0_128, %c0_129] : memref<128x10xbf16, #tpu.memory_space<vmem>>, vector<128x10xbf16>
    %cst_130 = arith.constant dense<0.000000e+00> : vector<1x10xf32>
    %148 = tpu.matmul %146, %147, %cst_130 {dimension_numbers = #tpu.dot_dimension_numbers<[1], [0], [0], [1], [0, 0, 1, 1], [], []>} : vector<1x128xbf16>, vector<128x10xbf16>, vector<1x10xf32> -> vector<1x10xf32>
    %c0_131 = arith.constant 0 : index
    %c0_132 = arith.constant 0 : index
    %149 = vector.load %arg9[%c0_131, %c0_132] : memref<1x10xf32, #tpu.memory_space<vmem>>, vector<1x10xf32>
    %150 = arith.addf %148, %149 : vector<1x10xf32>
    %151 = vector.shape_cast %150 : vector<1x10xf32> to vector<1x1x10xf32>
    %c0_133 = arith.constant 0 : index
    %c0_134 = arith.constant 0 : index
    %c0_135 = arith.constant 0 : index
    %152 = vector.load %arg10[%c0_133, %c0_134, %c0_135] : memref<1x1x10xf32, #tpu.memory_space<vmem>>, vector<1x1x10xf32>
    tpu.vector_store %arg10[%c0_133, %c0_134, %c0_135], %151 {strides = array<i32>} : memref<1x1x10xf32, #tpu.memory_space<vmem>>, vector<1x1x10xf32>,
    return
  }
  func.func @transform_0(%arg0: i32) -> (i32, i32, i32, i32) {
    %c0_i32 = arith.constant 0 : i32
    %c0_i32_0 = arith.constant 0 : i32
    %c0_i32_1 = arith.constant 0 : i32
    %c0_i32_2 = arith.constant 0 : i32
    return %arg0, %c0_i32, %c0_i32_0, %c0_i32_1 : i32, i32, i32, i32
  }
  func.func @transform_1(%arg0: i32) -> (i32, i32, i32) {
    %c0_i32 = arith.constant 0 : i32
    %c0_i32_0 = arith.constant 0 : i32
    %c0_i32_1 = arith.constant 0 : i32
    %c0_i32_2 = arith.constant 0 : i32
    return %c0_i32, %c0_i32_0, %c0_i32_1 : i32, i32, i32
  }
  func.func @transform_2(%arg0: i32) -> (i32, i32) {
    %c0_i32 = arith.constant 0 : i32
    %c0_i32_0 = arith.constant 0 : i32
    %c0_i32_1 = arith.constant 0 : i32
    return %c0_i32, %c0_i32_0 : i32, i32
  }
  func.func @transform_3(%arg0: i32) -> (i32, i32, i32) {
    %c0_i32 = arith.constant 0 : i32
    %c0_i32_0 = arith.constant 0 : i32
    %c0_i32_1 = arith.constant 0 : i32
    %c0_i32_2 = arith.constant 0 : i32
    return %c0_i32, %c0_i32_0, %c0_i32_1 : i32, i32, i32
  }
  func.func @transform_4(%arg0: i32) -> (i32, i32) {
    %c0_i32 = arith.constant 0 : i32
    %c0_i32_0 = arith.constant 0 : i32
    %c0_i32_1 = arith.constant 0 : i32
    return %c0_i32, %c0_i32_0 : i32, i32
  }
  func.func @transform_5(%arg0: i32) -> (i32, i32, i32) {
    %c0_i32 = arith.constant 0 : i32
    %c0_i32_0 = arith.constant 0 : i32
    %c0_i32_1 = arith.constant 0 : i32
    %c0_i32_2 = arith.constant 0 : i32
    return %c0_i32, %c0_i32_0, %c0_i32_1 : i32, i32, i32
  }
  func.func @transform_6(%arg0: i32) -> (i32, i32) {
    %c0_i32 = arith.constant 0 : i32
    %c0_i32_0 = arith.constant 0 : i32
    %c0_i32_1 = arith.constant 0 : i32
    return %c0_i32, %c0_i32_0 : i32, i32
  }
  func.func @transform_7(%arg0: i32) -> (i32, i32) {
    %c0_i32 = arith.constant 0 : i32
    %c0_i32_0 = arith.constant 0 : i32
    %c0_i32_1 = arith.constant 0 : i32
    return %c0_i32, %c0_i32_0 : i32, i32
  }
  func.func @transform_8(%arg0: i32) -> (i32, i32) {
    %c0_i32 = arith.constant 0 : i32
    %c0_i32_0 = arith.constant 0 : i32
    %c0_i32_1 = arith.constant 0 : i32
    return %c0_i32, %c0_i32_0 : i32, i32
  }
  func.func @transform_9(%arg0: i32) -> (i32, i32, i32) {
    %c0_i32 = arith.constant 0 : i32
    %c0_i32_0 = arith.constant 0 : i32
    %c0_i32_1 = arith.constant 0 : i32
    return %arg0, %c0_i32, %c0_i32_0 : i32, i32, i32
  }
}

</mosaic_0001>

<llo_original>
// kernel: tile.13
$region0: #{tile.13}
  #allocation0 [shape = 's32[1]{0}', space=sflag, size = 0x4, scoped, tag = 'scoped memory for tile.13']
  %s0 = inlined_call_operand.vmem [shape: f32[16], index: 0, kind: input, shape index: {}]
  %s1 = inlined_call_operand.vmem [shape: f32[16,16], index: 1, kind: output, shape index: {}]
  // Predicated region
  $region2: #{tile.13} parent=0 // pred_check
    _
  $region3: #{tile.13} parent=0 // pred_check_branch
    %3 = sbr.rel (0) target = $region5
  $region4: #{tile.13} parent=0 // pred_region
    _
  $region5: #{tile.13} parent=0 // pred_fallthru
    _
  %v4 = vld [vmem:[%s0] ss:$0 sm:$0xff]
  %5 = vst [vmem:[%s1] sm:$0xff] %v4
  %s6 = scalar_lea.vmem %s1, 8
  %7 = vst [vmem:[%s6] sm:$0xff] %v4

// kernel: tile.14
$region0: #{tile.14}
  %s0 = inlined_call_operand.vmem [shape: f32[16,16], index: 0, kind: input, shape index: {}]
  %s1 = inlined_call_operand.vmem [shape: f32[1,256], index: 1, kind: output, shape index: {}]
  $region1: #{tile.14} parent=0
    #allocation0 [shape = 'u8[8192]{0}', space=vmem, size = 0x2000, scoped, tag = 'scoped mem for output reshape']
    %s2 = smov 3
    %v3 = vld [vmem:[%s0] ss:$8 sm:%s2]
    %vm4 = vcmask 130048
    %5 = vst.msk [vmem:[#allocation0] ss:$8 sm:$0x3] %vm4, %v3
    %s6 = scalar_lea.vmem %s0, 7
    %s7 = smov 3
    %v8 = vld [vmem:[%s6] ss:$8 sm:%s7]
    %9 = vrot.lane.b32.xlu0 %v8, 112
    %v10 = vpop.permute.xlu0 %9
    %vm11 = vcmask 1048448
    %12 = vst.msk [vmem:[#allocation0] ss:$8 sm:$0x3] %vm11, %v10
    %s13 = scalar_lea.vmem %s0, 6
    %s14 = smov 3
    %v15 = vld [vmem:[%s13] ss:$8 sm:%s14]
    %16 = vrot.lane.b32.xlu0 %v15, 96
    %v17 = vpop.permute.xlu0 %16
    %vm18 = vcmask 917248
    %19 = vst.msk [vmem:[#allocation0] ss:$8 sm:$0x3] %vm18, %v17
    %s20 = scalar_lea.vmem %s0, 5
    %s21 = smov 3
    %v22 = vld [vmem:[%s20] ss:$8 sm:%s21]
    %23 = vrot.lane.b32.xlu0 %v22, 80
    %v24 = vpop.permute.xlu0 %23
    %vm25 = vcmask 786048
    %26 = vst.msk [vmem:[#allocation0] ss:$8 sm:$0x3] %vm25, %v24
    %s27 = scalar_lea.vmem %s0, 4
    %s28 = smov 3
    %v29 = vld [vmem:[%s27] ss:$8 sm:%s28]
    %30 = vrot.lane.b32.xlu0 %v29, 64
    %v31 = vpop.permute.xlu0 %30
    %vm32 = vcmask 654848
    %33 = vst.msk [vmem:[#allocation0] ss:$8 sm:$0x3] %vm32, %v31
    %s34 = scalar_lea.vmem %s0, 3
    %s35 = smov 3
    %v36 = vld [vmem:[%s34] ss:$8 sm:%s35]
    %37 = vrot.lane.b32.xlu0 %v36, 48
    %v38 = vpop.permute.xlu0 %37
    %vm39 = vcmask 523648
    %40 = vst.msk [vmem:[#allocation0] ss:$8 sm:$0x3] %vm39, %v38
    %s41 = scalar_lea.vmem %s0, 2
    %s42 = smov 3
    %v43 = vld [vmem:[%s41] ss:$8 sm:%s42]
    %44 = vrot.lane.b32.xlu0 %v43, 32
    %v45 = vpop.permute.xlu0 %44
    %vm46 = vcmask 392448
    %47 = vst.msk [vmem:[#allocation0] ss:$8 sm:$0x3] %vm46, %v45
    %s48 = scalar_lea.vmem %s0, 1
    %s49 = smov 3
    %v50 = vld [vmem:[%s48] ss:$8 sm:%s49]
    %51 = vrot.lane.b32.xlu0 %v50, 16
    %v52 = vpop.permute.xlu0 %51
    %vm53 = vcmask 261248
    %54 = vst.msk [vmem:[#allocation0] ss:$8 sm:$0x3] %vm53, %v52
    %s56 = sshllo.u32 0, 1
    %v58 = vld [vmem:[#allocation0] sm:%s56]
    %s59 = sshllo.u32 0, 1
    %60 = vst [vmem:[%s1] sm:%s59] %v58
    %s61 = scalar_lea.vmem [#allocation0], 8
    %v62 = vld [vmem:[%s61] sm:%s56]
    %s63 = sshllo.u32 0, 1
    %s64 = scalar_lea.vmem %s1, 1
    %65 = vst [vmem:[%s64] sm:%s63] %v62

// kernel: tile.18
$region0: #{tile.18}
  #allocation0 [shape = 's32[1]{0}', space=sflag, size = 0x4, scoped, tag = 'scoped memory for tile.18']
  %s0 = inlined_call_operand.vmem [shape: f32[32], index: 0, kind: input, shape index: {}]
  %s1 = inlined_call_operand.vmem [shape: f32[8,32], index: 1, kind: output, shape index: {}]
  // Predicated region
  $region2: #{tile.18} parent=0 // pred_check
    _
  $region3: #{tile.18} parent=0 // pred_check_branch
    %3 = sbr.rel (0) target = $region5
  $region4: #{tile.18} parent=0 // pred_region
    _
  $region5: #{tile.18} parent=0 // pred_fallthru
    _
  %v4 = vld [vmem:[%s0] ss:$0 sm:$0xff]
  %5 = vst [vmem:[%s1] sm:$0xff] %v4

// kernel: tile.19
$region0: #{tile.19}
  %s0 = inlined_call_operand.vmem [shape: f32[8,32], index: 0, kind: input, shape index: {}]
  %s1 = inlined_call_operand.vmem [shape: f32[1,256], index: 1, kind: output, shape index: {}]
  $region1: #{tile.19} parent=0
    #allocation0 [shape = 'u8[8192]{0}', space=vmem, size = 0x2000, scoped, tag = 'scoped mem for output reshape']
    %s2 = smov 3
    %v3 = vld [vmem:[%s0] ss:$4 sm:%s2]
    %vm4 = vcmask 261120
    %5 = vst.msk [vmem:[#allocation0] ss:$8 sm:$0x3] %vm4, %v3
    %s6 = scalar_lea.vmem %s0, 3
    %s7 = smov 3
    %v8 = vld [vmem:[%s6] ss:$4 sm:%s7]
    %9 = vrot.lane.b32.xlu0 %v8, 96
    %v10 = vpop.permute.xlu0 %9
    %vm11 = vcmask 1048320
    %12 = vst.msk [vmem:[#allocation0] ss:$8 sm:$0x3] %vm11, %v10
    %s13 = scalar_lea.vmem %s0, 2
    %s14 = smov 3
    %v15 = vld [vmem:[%s13] ss:$4 sm:%s14]
    %16 = vrot.lane.b32.xlu0 %v15, 64
    %v17 = vpop.permute.xlu0 %16
    %vm18 = vcmask 785920
    %19 = vst.msk [vmem:[#allocation0] ss:$8 sm:$0x3] %vm18, %v17
    %s20 = scalar_lea.vmem %s0, 1
    %s21 = smov 3
    %v22 = vld [vmem:[%s20] ss:$4 sm:%s21]
    %23 = vrot.lane.b32.xlu0 %v22, 32
    %v24 = vpop.permute.xlu0 %23
    %vm25 = vcmask 523520
    %26 = vst.msk [vmem:[#allocation0] ss:$8 sm:$0x3] %vm25, %v24
    %s28 = sshllo.u32 0, 1
    %v30 = vld [vmem:[#allocation0] sm:%s28]
    %s31 = sshllo.u32 0, 1
    %32 = vst [vmem:[%s1] sm:%s31] %v30
    %s33 = scalar_lea.vmem [#allocation0], 8
    %v34 = vld [vmem:[%s33] sm:%s28]
    %s35 = sshllo.u32 0, 1
    %s36 = scalar_lea.vmem %s1, 1
    %37 = vst [vmem:[%s36] sm:%s35] %v34

// kernel: simple_cnn_forward.1
$region0: #{simple_cnn_forward.1}
  #allocation0 [shape = 'u32[]', space=smem, size = 0x4, offset = 0x4, fixed_abs, tag = 'smem constant byte address 0x4 - core index']
  #allocation1 [shape = 'u32[144,128]{1,0:T(1,128)}', space=vmem, size = 0x12000, scoped, tag = 'internal scratch']
  #allocation2 [shape = 'bf16[1,34,102]{2,1,0:T(8,128)(2,1)}', space=vmem, size = 0x2800, scoped, tag = 'scratch operand']
  #allocation3 [shape = 'bf16[1,18,288]{2,1,0:T(8,128)(2,1)}', space=vmem, size = 0x4800, scoped, tag = 'scratch operand']
  %s0 = inlined_call_operand.vmem [shape: f32[2,3,32,32], index: 0, kind: input, shape index: {}]
  %s1 = inlined_call_operand.vmem [shape: bf16[3,102,512], index: 1, kind: input, shape index: {}]
  %s2 = inlined_call_operand.vmem [shape: f32[1,256], index: 2, kind: input, shape index: {}]
  %s3 = inlined_call_operand.vmem [shape: bf16[3,288,512], index: 3, kind: input, shape index: {}]
  %s4 = inlined_call_operand.vmem [shape: f32[1,256], index: 4, kind: input, shape index: {}]
  %s5 = inlined_call_operand.vmem [shape: bf16[8,256,128], index: 5, kind: input, shape index: {}]
  %s6 = inlined_call_operand.vmem [shape: f32[1,128], index: 6, kind: input, shape index: {}]
  %s7 = inlined_call_operand.vmem [shape: bf16[128,10], index: 7, kind: input, shape index: {}]
  %s8 = inlined_call_operand.vmem [shape: f32[1,10], index: 8, kind: input, shape index: {}]
  %s9 = inlined_call_operand.hbm [shape: f32[2,1,10], index: 9, kind: output, shape index: {}]
  %s10 = sld [smem:[#allocation0]]
  $region69: #{simple_cnn_forward.1} parent=0
    _
  %s12 = ssub.s32 1, %s10
  %s13 = scalar_select 0, %s12, %s10
  $region1: #{simple_cnn_forward.1} parent=0
    #allocation4 [shape = 'u8[1024]{0}', space=vmem, size = 0x400, scoped, tag = 'output window, operand 0']
    #allocation5 [shape = 's32[2]{0}', space=sflag, size = 0x8, scoped, tag = 'scoped memory for simple_cnn_forward.1']
    %14 = vsyncpa [#allocation5], 0
    %s15 = scalar_lea.sflag [#allocation5], 1
    %16 = vsyncpa %s15, 0
    loop: start=0, step=1, limit=4
    $region2: #{simple_cnn_forward.1} parent=1 // loop_pre_header
      _
    $region3: #{simple_cnn_forward.1} parent=1 // loop_header
      %s18 = sphi 0, %s22
      %p19 = scmp.ge.s32.totalorder %s18, 4
      %s28 = sphi 0, %s30
      %s31 = sphi 0, %s28
      %s32 = sphi 0, %s31
      %s48 = sphi 0, %s32
      %s52 = sphi 0, %s52
      %s54 = sphi 0, %s52
      %s55 = sphi 0, %s54
      %s69 = sphi 0, %s55
      %s73 = sphi 0, %s73
      %s75 = sphi 0, %s73
      %s76 = sphi 0, %s75
      %s90 = sphi 0, %s76
      %s94 = sphi 0, %s94
      %s96 = sphi 0, %s94
      %s97 = sphi 0, %s96
      %s111 = sphi 0, %s97
      %s115 = sphi 0, %s115
      %s117 = sphi 0, %s115
      %s118 = sphi 0, %s117
      %s132 = sphi 0, %s118
      %s136 = sphi 0, %s136
      %s138 = sphi 0, %s136
      %s139 = sphi 0, %s138
      %s153 = sphi 0, %s139
      %s157 = sphi 0, %s157
      %s159 = sphi 0, %s157
      %s160 = sphi 0, %s159
      %s174 = sphi 0, %s160
      %s178 = sphi 0, %s178
      %s180 = sphi 0, %s178
      %s181 = sphi 0, %s180
      %s195 = sphi 0, %s181
      %s199 = sphi 0, %s199
      %s201 = sphi 0, %s199
      %s202 = sphi 0, %s201
      %s216 = sphi 0, %s202
      %s222 = sphi 0, %s224
      %s225 = sphi 0, %s222
      %s226 = sphi 0, %s225
      %s242 = sphi 0, %s226
    $region4: #{simple_cnn_forward.1} parent=1 // loop_header_branch
      %21 = sbr.rel (%p19) target = $region8
    $region5: #{simple_cnn_forward.1} parent=1 // loop_body
      %s23 = ssub.s32 %s18, 1
      %s24 = ssub.s32 %s18, 2
      %s25 = sadd.s32 %s18, 1
      %s26 = ssub.s32 %s18, %s25
      %p27 = scmp.eq.s32.totalorder %s26, 0
      %s29 = sadd.s32 %s28, 1
      %s30 = scalar_select %p27, %s28, %s29
      %p33 = pneg %p27
      %p34 = scmp.eq.s32.totalorder %s18, 1
      %p35 = por %p33, %p34
      %p36 = scmp.ne.s32.totalorder %s28, %s31
      %p37 = scmp.eq.s32.totalorder %s18, 0
      %p38 = por %p36, %p37
      %p39 = scmp.ne.s32.totalorder %s28, %s31
      %p40 = scmp.eq.s32.totalorder %s23, 1
      %p41 = por %p39, %p40
      %p42 = scmp.ne.s32.totalorder %s31, %s32
      %p43 = scmp.eq.s32.totalorder %s23, 0
      %p44 = por %p42, %p43
      %p45 = scmp.ne.s32.totalorder %s31, %s32
      %p46 = scmp.eq.s32.totalorder %s24, 1
      %p47 = por %p45, %p46
      %p49 = scmp.ne.s32.totalorder %s32, %s48
      %p50 = scmp.eq.s32.totalorder %s24, 0
      %p51 = por %p49, %p50
      %s53 = sadd.s32 %s52, 1
      %p56 = scmp.eq.s32.totalorder %s18, 1
      %p57 = scmp.ne.s32.totalorder %s52, %s54
      %p58 = scmp.eq.s32.totalorder %s18, 0
      %p59 = por %p57, %p58
      %p60 = scmp.ne.s32.totalorder %s52, %s54
      %p61 = scmp.eq.s32.totalorder %s23, 1
      %p62 = por %p60, %p61
      %p63 = scmp.ne.s32.totalorder %s54, %s55
      %p64 = scmp.eq.s32.totalorder %s23, 0
      %p65 = por %p63, %p64
      %p66 = scmp.ne.s32.totalorder %s54, %s55
      %p67 = scmp.eq.s32.totalorder %s24, 1
      %p68 = por %p66, %p67
      %p70 = scmp.ne.s32.totalorder %s55, %s69
      %p71 = scmp.eq.s32.totalorder %s24, 0
      %p72 = por %p70, %p71
      %s74 = sadd.s32 %s73, 1
      %p77 = scmp.eq.s32.totalorder %s18, 1
      %p78 = scmp.ne.s32.totalorder %s73, %s75
      %p79 = scmp.eq.s32.totalorder %s18, 0
      %p80 = por %p78, %p79
      %p81 = scmp.ne.s32.totalorder %s73, %s75
      %p82 = scmp.eq.s32.totalorder %s23, 1
      %p83 = por %p81, %p82
      %p84 = scmp.ne.s32.totalorder %s75, %s76
      %p85 = scmp.eq.s32.totalorder %s23, 0
      %p86 = por %p84, %p85
      %p87 = scmp.ne.s32.totalorder %s75, %s76
      %p88 = scmp.eq.s32.totalorder %s24, 1
      %p89 = por %p87, %p88
      %p91 = scmp.ne.s32.totalorder %s76, %s90
      %p92 = scmp.eq.s32.totalorder %s24, 0
      %p93 = por %p91, %p92
      %s95 = sadd.s32 %s94, 1
      %p98 = scmp.eq.s32.totalorder %s18, 1
      %p99 = scmp.ne.s32.totalorder %s94, %s96
      %p100 = scmp.eq.s32.totalorder %s18, 0
      %p101 = por %p99, %p100
      %p102 = scmp.ne.s32.totalorder %s94, %s96
      %p103 = scmp.eq.s32.totalorder %s23, 1
      %p104 = por %p102, %p103
      %p105 = scmp.ne.s32.totalorder %s96, %s97
      %p106 = scmp.eq.s32.totalorder %s23, 0
      %p107 = por %p105, %p106
      %p108 = scmp.ne.s32.totalorder %s96, %s97
      %p109 = scmp.eq.s32.totalorder %s24, 1
      %p110 = por %p108, %p109
      %p112 = scmp.ne.s32.totalorder %s97, %s111
      %p113 = scmp.eq.s32.totalorder %s24, 0
      %p114 = por %p112, %p113
      %s116 = sadd.s32 %s115, 1
      %p119 = scmp.eq.s32.totalorder %s18, 1
      %p120 = scmp.ne.s32.totalorder %s115, %s117
      %p121 = scmp.eq.s32.totalorder %s18, 0
      %p122 = por %p120, %p121
      %p123 = scmp.ne.s32.totalorder %s115, %s117
      %p124 = scmp.eq.s32.totalorder %s23, 1
      %p125 = por %p123, %p124
      %p126 = scmp.ne.s32.totalorder %s117, %s118
      %p127 = scmp.eq.s32.totalorder %s23, 0
      %p128 = por %p126, %p127
      %p129 = scmp.ne.s32.totalorder %s117, %s118
      %p130 = scmp.eq.s32.totalorder %s24, 1
      %p131 = por %p129, %p130
      %p133 = scmp.ne.s32.totalorder %s118, %s132
      %p134 = scmp.eq.s32.totalorder %s24, 0
      %p135 = por %p133, %p134
      %s137 = sadd.s32 %s136, 1
      %p140 = scmp.eq.s32.totalorder %s18, 1
      %p141 = scmp.ne.s32.totalorder %s136, %s138
      %p142 = scmp.eq.s32.totalorder %s18, 0
      %p143 = por %p141, %p142
      %p144 = scmp.ne.s32.totalorder %s136, %s138
      %p145 = scmp.eq.s32.totalorder %s23, 1
      %p146 = por %p144, %p145
      %p147 = scmp.ne.s32.totalorder %s138, %s139
      %p148 = scmp.eq.s32.totalorder %s23, 0
      %p149 = por %p147, %p148
      %p150 = scmp.ne.s32.totalorder %s138, %s139
      %p151 = scmp.eq.s32.totalorder %s24, 1
      %p152 = por %p150, %p151
      %p154 = scmp.ne.s32.totalorder %s139, %s153
      %p155 = scmp.eq.s32.totalorder %s24, 0
      %p156 = por %p154, %p155
      %s158 = sadd.s32 %s157, 1
      %p161 = scmp.eq.s32.totalorder %s18, 1
      %p162 = scmp.ne.s32.totalorder %s157, %s159
      %p163 = scmp.eq.s32.totalorder %s18, 0
      %p164 = por %p162, %p163
      %p165 = scmp.ne.s32.totalorder %s157, %s159
      %p166 = scmp.eq.s32.totalorder %s23, 1
      %p167 = por %p165, %p166
      %p168 = scmp.ne.s32.totalorder %s159, %s160
      %p169 = scmp.eq.s32.totalorder %s23, 0
      %p170 = por %p168, %p169
      %p171 = scmp.ne.s32.totalorder %s159, %s160
      %p172 = scmp.eq.s32.totalorder %s24, 1
      %p173 = por %p171, %p172
      %p175 = scmp.ne.s32.totalorder %s160, %s174
      %p176 = scmp.eq.s32.totalorder %s24, 0
      %p177 = por %p175, %p176
      %s179 = sadd.s32 %s178, 1
      %p182 = scmp.eq.s32.totalorder %s18, 1
      %p183 = scmp.ne.s32.totalorder %s178, %s180
      %p184 = scmp.eq.s32.totalorder %s18, 0
      %p185 = por %p183, %p184
      %p186 = scmp.ne.s32.totalorder %s178, %s180
      %p187 = scmp.eq.s32.totalorder %s23, 1
      %p188 = por %p186, %p187
      %p189 = scmp.ne.s32.totalorder %s180, %s181
      %p190 = scmp.eq.s32.totalorder %s23, 0
      %p191 = por %p189, %p190
      %p192 = scmp.ne.s32.totalorder %s180, %s181
      %p193 = scmp.eq.s32.totalorder %s24, 1
      %p194 = por %p192, %p193
      %p196 = scmp.ne.s32.totalorder %s181, %s195
      %p197 = scmp.eq.s32.totalorder %s24, 0
      %p198 = por %p196, %p197
      %s200 = sadd.s32 %s199, 1
      %p203 = scmp.eq.s32.totalorder %s18, 1
      %p204 = scmp.ne.s32.totalorder %s199, %s201
      %p205 = scmp.eq.s32.totalorder %s18, 0
      %p206 = por %p204, %p205
      %p207 = scmp.ne.s32.totalorder %s199, %s201
      %p208 = scmp.eq.s32.totalorder %s23, 1
      %p209 = por %p207, %p208
      %p210 = scmp.ne.s32.totalorder %s201, %s202
      %p211 = scmp.eq.s32.totalorder %s23, 0
      %p212 = por %p210, %p211
      %p213 = scmp.ne.s32.totalorder %s201, %s202
      %p214 = scmp.eq.s32.totalorder %s24, 1
      %p215 = por %p213, %p214
      %p217 = scmp.ne.s32.totalorder %s202, %s216
      %p218 = scmp.eq.s32.totalorder %s24, 0
      %p219 = por %p217, %p218
      %s220 = ssub.s32 %s18, %s25
      %p221 = scmp.eq.s32.totalorder %s220, 0
      %s223 = sadd.s32 %s222, 1
      %s224 = scalar_select %p221, %s222, %s223
      %p227 = pneg %p221
      %p228 = scmp.eq.s32.totalorder %s18, 1
      %p229 = por %p227, %p228
      %p230 = scmp.ne.s32.totalorder %s222, %s225
      %p231 = scmp.eq.s32.totalorder %s18, 0
      %p232 = por %p230, %p231
      %p233 = scmp.ne.s32.totalorder %s222, %s225
      %p234 = scmp.eq.s32.totalorder %s23, 1
      %p235 = por %p233, %p234
      %p236 = scmp.ne.s32.totalorder %s225, %s226
      %p237 = scmp.eq.s32.totalorder %s23, 0
      %p238 = por %p236, %p237
      %p239 = scmp.ne.s32.totalorder %s225, %s226
      %p240 = scmp.eq.s32.totalorder %s24, 1
      %p241 = por %p239, %p240
      %p243 = scmp.ne.s32.totalorder %s226, %s242
      %p244 = scmp.eq.s32.totalorder %s24, 0
      %p245 = por %p243, %p244
      %p246 = scmp.le.s32.totalorder 1, %s18
      %p247 = scmp.lt.s32.totalorder %s18, 3
      %p248 = pnand %p246, %p247
      %p249 = pneg %p248
      // Predicated region
      $region9: #{simple_cnn_forward.1} parent=5 // pred_check
        _
      $region10: #{simple_cnn_forward.1} parent=5 // pred_check_branch
        %251 = sbr.rel (%p248) target = $region12
      $region11: #{simple_cnn_forward.1} parent=5 // pred_region
        %s252 = ssub.s32 %s18, 1
        // Predicated region
        $region13: #{simple_cnn_forward.1} parent=11 // pred_check
          %p253 = pneg %p65
        $region14: #{simple_cnn_forward.1} parent=11 // pred_check_branch
          %255 = sbr.rel (%p253) target = $region16
        $region15: #{simple_cnn_forward.1} parent=11 // pred_region
          _
        $region16: #{simple_cnn_forward.1} parent=11 // pred_fallthru
          _
        // Predicated region
        $region17: #{simple_cnn_forward.1} parent=11 // pred_check
          %p256 = pneg %p86
        $region18: #{simple_cnn_forward.1} parent=11 // pred_check_branch
          %258 = sbr.rel (%p256) target = $region20
        $region19: #{simple_cnn_forward.1} parent=11 // pred_region
          _
        $region20: #{simple_cnn_forward.1} parent=11 // pred_fallthru
          _
        // Predicated region
        $region21: #{simple_cnn_forward.1} parent=11 // pred_check
          %p259 = pneg %p107
        $region22: #{simple_cnn_forward.1} parent=11 // pred_check_branch
          %261 = sbr.rel (%p259) target = $region24
        $region23: #{simple_cnn_forward.1} parent=11 // pred_region
          _
        $region24: #{simple_cnn_forward.1} parent=11 // pred_fallthru
          _
        // Predicated region
        $region25: #{simple_cnn_forward.1} parent=11 // pred_check
          %p262 = pneg %p128
        $region26: #{simple_cnn_forward.1} parent=11 // pred_check_branch
          %264 = sbr.rel (%p262) target = $region28
        $region27: #{simple_cnn_forward.1} parent=11 // pred_region
          _
        $region28: #{simple_cnn_forward.1} parent=11 // pred_fallthru
          _
        // Predicated region
        $region29: #{simple_cnn_forward.1} parent=11 // pred_check
          %p265 = pneg %p149
        $region30: #{simple_cnn_forward.1} parent=11 // pred_check_branch
          %267 = sbr.rel (%p265) target = $region32
        $region31: #{simple_cnn_forward.1} parent=11 // pred_region
          _
        $region32: #{simple_cnn_forward.1} parent=11 // pred_fallthru
          _
        // Predicated region
        $region33: #{simple_cnn_forward.1} parent=11 // pred_check
          %p268 = pneg %p170
        $region34: #{simple_cnn_forward.1} parent=11 // pred_check_branch
          %270 = sbr.rel (%p268) target = $region36
        $region35: #{simple_cnn_forward.1} parent=11 // pred_region
          _
        $region36: #{simple_cnn_forward.1} parent=11 // pred_fallthru
          _
        // Predicated region
        $region37: #{simple_cnn_forward.1} parent=11 // pred_check
          %p271 = pneg %p191
        $region38: #{simple_cnn_forward.1} parent=11 // pred_check_branch
          %273 = sbr.rel (%p271) target = $region40
        $region39: #{simple_cnn_forward.1} parent=11 // pred_region
          _
        $region40: #{simple_cnn_forward.1} parent=11 // pred_fallthru
          _
        // Predicated region
        $region41: #{simple_cnn_forward.1} parent=11 // pred_check
          %p274 = pneg %p212
        $region42: #{simple_cnn_forward.1} parent=11 // pred_check_branch
          %276 = sbr.rel (%p274) target = $region44
        $region43: #{simple_cnn_forward.1} parent=11 // pred_region
          _
        $region44: #{simple_cnn_forward.1} parent=11 // pred_fallthru
          _
      $region12: #{simple_cnn_forward.1} parent=5 // pred_fallthru
        _
      %p277 = scmp.lt.s32.totalorder %s18, 2
      // Predicated region
      $region45: #{simple_cnn_forward.1} parent=5 // pred_check
        %p278 = pneg %p277
      $region46: #{simple_cnn_forward.1} parent=5 // pred_check_branch
        %280 = sbr.rel (%p278) target = $region48
      $region47: #{simple_cnn_forward.1} parent=5 // pred_region
        // Predicated region
        $region49: #{simple_cnn_forward.1} parent=47 // pred_check
          %p281 = pneg %p38
        $region50: #{simple_cnn_forward.1} parent=47 // pred_check_branch
          %283 = sbr.rel (%p281) target = $region52
        $region51: #{simple_cnn_forward.1} parent=47 // pred_region
          %p284 = scmp.lt.s32.totalorder %s18, 1
          %s285 = scalar_select %p284, %s18, 1
          %s286 = smul.addr %s285, 12
          %s287 = smul.addr %s286, 8
          %s288 = scalar_lea.vmem %s0, %s287
        $region52: #{simple_cnn_forward.1} parent=47 // pred_fallthru
          _
      $region48: #{simple_cnn_forward.1} parent=5 // pred_fallthru
        _
      %p289 = scmp.le.s32.totalorder 1, %s18
      %p290 = scmp.lt.s32.totalorder %s18, 3
      %p291 = pnand %p289, %p290
      %p292 = pneg %p291
      // Predicated region
      $region53: #{simple_cnn_forward.1} parent=5 // pred_check
        _
      $region54: #{simple_cnn_forward.1} parent=5 // pred_check_branch
        %294 = sbr.rel (%p291) target = $region56
      $region55: #{simple_cnn_forward.1} parent=5 // pred_region
        %s295 = ssub.s32 %s18, 1
        %p296 = scmp.lt.s32.totalorder %s23, 1
        %s297 = scalar_select %p296, %s23, 1
        %s298 = smul.addr %s297, 12
        %s299 = smul.addr %s298, 8
        %s300 = scalar_lea.vmem %s0, %s299
        %p301 = pneg %p44
        %p302 = pneg %p41
        %p303 = pneg %p65
        %p304 = pneg %p62
        %p305 = pneg %p86
        %p306 = pneg %p83
        %p307 = pneg %p107
        %p308 = pneg %p104
        %p309 = pneg %p128
        %p310 = pneg %p125
        %p311 = pneg %p149
        %p312 = pneg %p146
        %p313 = pneg %p170
        %p314 = pneg %p167
        %p315 = pneg %p191
        %p316 = pneg %p188
        %p317 = pneg %p212
        %p318 = pneg %p209
        %p319 = pneg %p238
        %p320 = pneg %p235
        %s321 = sand.u32 %s225, 1
        %s322 = scalar_lea.sflag [#allocation5], %s321
        %s323 = sand.u32 %s225, 1
        %s324 = scalar_lea.vmem [#allocation4], %s323
        %p325 = scmp.lt.s32.totalorder %s23, 1
        %s326 = scalar_select %p325, %s23, 1
        %s327 = smul.addr %s326, 12
        %s328 = smul.addr %s327, 8
        %s329 = scalar_lea.vmem %s0, %s328
        %vm331 = vcmask 827392
        %vm332 = vsmask.f32 256
        %vm333 = vmand %vm331, %vm332
        %v334 = vld [vmem:[#allocation2] sm:$0x1]
        %v335 = vsel %vm333, 0, %v334
        %336 = vst [vmem:[#allocation2] sm:$0x1] %v335
        %vm337 = vsmask.f32 7938
        %vm338 = vmand %vm331, %vm337
        %v339 = vld [vmem:[#allocation2 + $0x10] sm:$0x1]
        %v340 = vsel %vm338, 0, %v339
        %341 = vst [vmem:[#allocation2 + $0x10] sm:$0x1] %v340
        %vm342 = vcmask 3072
        %343 = vst.msk [vmem:[#allocation2] sm:$0xf] %vm342, 0
        %344 = vst.msk [vmem:[#allocation2 + $0x4] sm:$0xf] %vm342, 0
        %345 = vst.msk [vmem:[#allocation2 + $0x8] sm:$0xf] %vm342, 0
        %346 = vst.msk [vmem:[#allocation2 + $0xc] sm:$0xf] %vm342, 0
        %vm347 = vcmask 0
        %348 = vst.msk [vmem:[#allocation2 + $0x10] sm:$0x1] %vm347, 0
        %vm349 = vcmask 273672
        %350 = vst.msk [vmem:[#allocation2] sm:$0xf] %vm349, 0
        %351 = vst.msk [vmem:[#allocation2 + $0x4] sm:$0xf] %vm349, 0
        %352 = vst.msk [vmem:[#allocation2 + $0x8] sm:$0xf] %vm349, 0
        %353 = vst.msk [vmem:[#allocation2 + $0xc] sm:$0xf] %vm349, 0
        %vm354 = vcmask 270600
        %355 = vst.msk [vmem:[#allocation2 + $0x10] sm:$0x1] %vm354, 0
        %v356 = vld [vmem:[%s329] sm:$0xff]
        %v357 = vld [vmem:[%s329 + $0x8] sm:$0xff]
        %v358 = vld [vmem:[%s329 + $0x10] sm:$0xff]
        %v359 = vld [vmem:[%s329 + $0x18] sm:$0xff]
        %v360 = vpack.c.bf16 %v357, %v356
        %v361 = vpack.c.bf16 %v359, %v358
        %v364 = vunpack.c.l.b16 %v360
        %v365 = vunpack.c.h.b16 %v360
        %v366 = vunpack.c.l.b16 %v361
        %v367 = vunpack.c.h.b16 %v361
        %v368 = vpack.c.b16 %v364, %v364
        %v369 = vpack.c.b16 %v365, %v365
        %v370 = vpack.c.b16 %v366, %v366
        %v371 = vpack.c.b16 %v367, %v367
        %vm372 = vsmask.f32 4368
        %vm373 = vmor %vm332, %vm372
        %v375 = vshrl.u32 %v368, 16
        %v377 = vrot.slane %v375, 7
        %v378 = vshll.u32 %v368, 16
        %v380 = vor.u32 %v377, %v378
        %v381 = vrot.slane %v377, 4
        %v383 = vshrl.u32 %v369, 16
        %v385 = vrot.slane %v383, 7
        %v386 = vshll.u32 %v369, 16
        %v388 = vor.u32 %v385, %v386
        %v389 = vsel %vm373, %v381, %v388
        %v390 = vrot.slane %v385, 4
        %v392 = vshrl.u32 %v370, 16
        %v394 = vrot.slane %v392, 7
        %v395 = vshll.u32 %v370, 16
        %v397 = vor.u32 %v394, %v395
        %v398 = vsel %vm373, %v390, %v397
        %v399 = vrot.slane %v394, 4
        %v401 = vshrl.u32 %v371, 16
        %v403 = vrot.slane %v401, 7
        %v404 = vshll.u32 %v371, 16
        %v406 = vor.u32 %v403, %v404
        %v407 = vsel %vm373, %v399, %v406
        %v408 = vrot.slane %v403, 4
        %409 = vrot.lane.b32.xlu0 %v380, 1
        %v410 = vpop.permute.xlu0 %409
        %411 = vrot.lane.b32.xlu0 %v389, 1
        %v412 = vpop.permute.xlu0 %411
        %413 = vrot.lane.b32.xlu0 %v398, 1
        %v414 = vpop.permute.xlu0 %413
        %415 = vrot.lane.b32.xlu0 %v407, 1
        %v416 = vpop.permute.xlu0 %415
        %417 = vrot.lane.b32.xlu0 %v408, 1
        %v418 = vpop.permute.xlu0 %417
        %vm424 = vcmask 265224
        %vm425 = vmand %vm424, %vm337
        %v426 = vld [vmem:[#allocation2] sm:$0xf]
        %v427 = vsel %vm425, %v410, %v426
        %428 = vst [vmem:[#allocation2] sm:$0xf] %v427
        %vm429 = vcmask 265224
        %430 = vst.msk [vmem:[#allocation2 + $0x4] sm:$0xf] %vm429, %v412
        %431 = vst.msk [vmem:[#allocation2 + $0x8] sm:$0xf] %vm429, %v414
        %432 = vst.msk [vmem:[#allocation2 + $0xc] sm:$0xf] %vm429, %v416
        %vm433 = vcmask 262152
        %vm434 = vmand %vm433, %vm332
        %v435 = vld [vmem:[#allocation2 + $0x10] sm:$0x1]
        %v436 = vsel %vm434, %v418, %v435
        %437 = vst [vmem:[#allocation2 + $0x10] sm:$0x1] %v436
        %vm438 = vcmask 281872
        %439 = vst.msk [vmem:[#allocation2] sm:$0xf] %vm438, 0
        %440 = vst.msk [vmem:[#allocation2 + $0x4] sm:$0xf] %vm438, 0
        %441 = vst.msk [vmem:[#allocation2 + $0x8] sm:$0xf] %vm438, 0
        %442 = vst.msk [vmem:[#allocation2 + $0xc] sm:$0xf] %vm438, 0
        %vm443 = vcmask 278800
        %444 = vst.msk [vmem:[#allocation2 + $0x10] sm:$0x1] %vm443, 0
        %vm445 = vcmask 552472
        %446 = vst.msk [vmem:[#allocation2] sm:$0xf] %vm445, 0
        %447 = vst.msk [vmem:[#allocation2 + $0x4] sm:$0xf] %vm445, 0
        %448 = vst.msk [vmem:[#allocation2 + $0x8] sm:$0xf] %vm445, 0
        %449 = vst.msk [vmem:[#allocation2 + $0xc] sm:$0xf] %vm445, 0
        %vm450 = vcmask 549400
        %451 = vst.msk [vmem:[#allocation2 + $0x10] sm:$0x1] %vm450, 0
        %s452 = scalar_lea.vmem %s329, 32
        %v453 = vld [vmem:[%s452] sm:$0xff]
        %v454 = vld [vmem:[%s452 + $0x8] sm:$0xff]
        %v455 = vld [vmem:[%s452 + $0x10] sm:$0xff]
        %v456 = vld [vmem:[%s452 + $0x18] sm:$0xff]
        %v457 = vpack.c.bf16 %v454, %v453
        %v458 = vpack.c.bf16 %v456, %v455
        %v461 = vunpack.c.l.b16 %v457
        %v462 = vunpack.c.h.b16 %v457
        %v463 = vunpack.c.l.b16 %v458
        %v464 = vunpack.c.h.b16 %v458
        %v465 = vpack.c.b16 %v461, %v461
        %v466 = vpack.c.b16 %v462, %v462
        %v467 = vpack.c.b16 %v463, %v463
        %v468 = vpack.c.b16 %v464, %v464
        %v470 = vshrl.u32 %v465, 16
        %v472 = vrot.slane %v470, 7
        %v473 = vshll.u32 %v465, 16
        %v475 = vor.u32 %v472, %v473
        %v476 = vrot.slane %v472, 4
        %v478 = vshrl.u32 %v466, 16
        %v480 = vrot.slane %v478, 7
        %v481 = vshll.u32 %v466, 16
        %v483 = vor.u32 %v480, %v481
        %v484 = vsel %vm373, %v476, %v483
        %v485 = vrot.slane %v480, 4
        %v487 = vshrl.u32 %v467, 16
        %v489 = vrot.slane %v487, 7
        %v490 = vshll.u32 %v467, 16
        %v492 = vor.u32 %v489, %v490
        %v493 = vsel %vm373, %v485, %v492
        %v494 = vrot.slane %v489, 4
        %v496 = vshrl.u32 %v468, 16
        %v498 = vrot.slane %v496, 7
        %v499 = vshll.u32 %v468, 16
        %v501 = vor.u32 %v498, %v499
        %v502 = vsel %vm373, %v494, %v501
        %v503 = vrot.slane %v498, 4
        %504 = vrot.lane.b32.xlu0 %v475, 35
        %v505 = vpop.permute.xlu0 %504
        %506 = vrot.lane.b32.xlu0 %v484, 35
        %v507 = vpop.permute.xlu0 %506
        %508 = vrot.lane.b32.xlu0 %v493, 35
        %v509 = vpop.permute.xlu0 %508
        %510 = vrot.lane.b32.xlu0 %v502, 35
        %v511 = vpop.permute.xlu0 %510
        %512 = vrot.lane.b32.xlu0 %v503, 35
        %v513 = vpop.permute.xlu0 %512
        %vm519 = vcmask 544024
        %vm520 = vmand %vm519, %vm337
        %v521 = vld [vmem:[#allocation2] sm:$0xf]
        %v522 = vsel %vm520, %v505, %v521
        %523 = vst [vmem:[#allocation2] sm:$0xf] %v522
        %vm524 = vcmask 544024
        %525 = vst.msk [vmem:[#allocation2 + $0x4] sm:$0xf] %vm524, %v507
        %526 = vst.msk [vmem:[#allocation2 + $0x8] sm:$0xf] %vm524, %v509
        %527 = vst.msk [vmem:[#allocation2 + $0xc] sm:$0xf] %vm524, %v511
        %vm528 = vcmask 540952
        %vm529 = vmand %vm528, %vm332
        %v530 = vld [vmem:[#allocation2 + $0x10] sm:$0x1]
        %v531 = vsel %vm529, %v513, %v530
        %532 = vst [vmem:[#allocation2 + $0x10] sm:$0x1] %v531
        %vm533 = vcmask 560672
        %534 = vst.msk [vmem:[#allocation2] sm:$0xf] %vm533, 0
        %535 = vst.msk [vmem:[#allocation2 + $0x4] sm:$0xf] %vm533, 0
        %536 = vst.msk [vmem:[#allocation2 + $0x8] sm:$0xf] %vm533, 0
        %537 = vst.msk [vmem:[#allocation2 + $0xc] sm:$0xf] %vm533, 0
        %vm538 = vcmask 557600
        %539 = vst.msk [vmem:[#allocation2 + $0x10] sm:$0x1] %vm538, 0
        %vm540 = vcmask 831272
        %541 = vst.msk [vmem:[#allocation2] sm:$0xf] %vm540, 0
        %542 = vst.msk [vmem:[#allocation2 + $0x4] sm:$0xf] %vm540, 0
        %543 = vst.msk [vmem:[#allocation2 + $0x8] sm:$0xf] %vm540, 0
        %544 = vst.msk [vmem:[#allocation2 + $0xc] sm:$0xf] %vm540, 0
        %vm545 = vcmask 828200
        %546 = vst.msk [vmem:[#allocation2 + $0x10] sm:$0x1] %vm545, 0
        %s547 = scalar_lea.vmem %s329, 64
        %v548 = vld [vmem:[%s547] sm:$0xff]
        %v549 = vld [vmem:[%s547 + $0x8] sm:$0xff]
        %v550 = vld [vmem:[%s547 + $0x10] sm:$0xff]
        %v551 = vld [vmem:[%s547 + $0x18] sm:$0xff]
        %v552 = vpack.c.bf16 %v549, %v548
        %v553 = vpack.c.bf16 %v551, %v550
        %v556 = vunpack.c.l.b16 %v552
        %v557 = vunpack.c.h.b16 %v552
        %v558 = vunpack.c.l.b16 %v553
        %v559 = vunpack.c.h.b16 %v553
        %v560 = vpack.c.b16 %v556, %v556
        %v561 = vpack.c.b16 %v557, %v557
        %v562 = vpack.c.b16 %v558, %v558
        %v563 = vpack.c.b16 %v559, %v559
        %v565 = vshrl.u32 %v560, 16
        %v567 = vrot.slane %v565, 7
        %v568 = vshll.u32 %v560, 16
        %v570 = vor.u32 %v567, %v568
        %v571 = vrot.slane %v567, 4
        %v573 = vshrl.u32 %v561, 16
        %v575 = vrot.slane %v573, 7
        %v576 = vshll.u32 %v561, 16
        %v578 = vor.u32 %v575, %v576
        %v579 = vsel %vm373, %v571, %v578
        %v580 = vrot.slane %v575, 4
        %v582 = vshrl.u32 %v562, 16
        %v584 = vrot.slane %v582, 7
        %v585 = vshll.u32 %v562, 16
        %v587 = vor.u32 %v584, %v585
        %v588 = vsel %vm373, %v580, %v587
        %v589 = vrot.slane %v584, 4
        %v591 = vshrl.u32 %v563, 16
        %v593 = vrot.slane %v591, 7
        %v594 = vshll.u32 %v563, 16
        %v596 = vor.u32 %v593, %v594
        %v597 = vsel %vm373, %v589, %v596
        %v598 = vrot.slane %v593, 4
        %599 = vrot.lane.b32.xlu0 %v570, 69
        %v600 = vpop.permute.xlu0 %599
        %601 = vrot.lane.b32.xlu0 %v579, 69
        %v602 = vpop.permute.xlu0 %601
        %603 = vrot.lane.b32.xlu0 %v588, 69
        %v604 = vpop.permute.xlu0 %603
        %605 = vrot.lane.b32.xlu0 %v597, 69
        %v606 = vpop.permute.xlu0 %605
        %607 = vrot.lane.b32.xlu0 %v598, 69
        %v608 = vpop.permute.xlu0 %607
        %vm614 = vcmask 822824
        %vm615 = vmand %vm614, %vm337
        %v616 = vld [vmem:[#allocation2] sm:$0xf]
        %v617 = vsel %vm615, %v600, %v616
        %618 = vst [vmem:[#allocation2] sm:$0xf] %v617
        %vm619 = vcmask 822824
        %620 = vst.msk [vmem:[#allocation2 + $0x4] sm:$0xf] %vm619, %v602
        %621 = vst.msk [vmem:[#allocation2 + $0x8] sm:$0xf] %vm619, %v604
        %622 = vst.msk [vmem:[#allocation2 + $0xc] sm:$0xf] %vm619, %v606
        %vm623 = vcmask 819752
        %vm624 = vmand %vm623, %vm332
        %v625 = vld [vmem:[#allocation2 + $0x10] sm:$0x1]
        %v626 = vsel %vm624, %v608, %v625
        %627 = vst [vmem:[#allocation2 + $0x10] sm:$0x1] %v626
        %v628 = vld [vmem:[#allocation2] sm:$0xf]
        %v629 = vld [vmem:[#allocation2 + $0x4] sm:$0xf]
        %v630 = vld [vmem:[#allocation2 + $0x8] sm:$0xf]
        %v631 = vld [vmem:[#allocation2 + $0xc] sm:$0xf]
        %v632 = vld [vmem:[%s1] sm:$0xff]
        %v633 = vld [vmem:[%s1 + $0x8] sm:$0xff]
        %v634 = vld [vmem:[%s1 + $0x10] sm:$0xff]
        %v635 = vld [vmem:[%s1 + $0x18] sm:$0xff]
        %v636 = vld [vmem:[%s1 + $0x20] sm:$0xff]
        %v637 = vld [vmem:[%s1 + $0x28] sm:$0xff]
        %v638 = vld [vmem:[%s1 + $0x30] sm:$0xff]
        %v639 = vld [vmem:[%s1 + $0x38] sm:$0xff]
        %v640 = vld [vmem:[%s1 + $0x40] sm:$0xff]
        %v641 = vld [vmem:[%s1 + $0x48] sm:$0xff]
        %v642 = vld [vmem:[%s1 + $0x50] sm:$0xff]
        %v643 = vld [vmem:[%s1 + $0x58] sm:$0xff]
        %v644 = vld [vmem:[%s1 + $0x60] sm:$0xff]
        %v645 = vld [vmem:[%s1 + $0x68] sm:$0xff]
        %v646 = vld [vmem:[%s1 + $0x70] sm:$0xff]
        %v647 = vld [vmem:[%s1 + $0x78] sm:$0xff]
        %v648 = vld [vmem:[%s1 + $0x80] sm:$0xff]
        %v649 = vld [vmem:[%s1 + $0x88] sm:$0xff]
        %v650 = vld [vmem:[%s1 + $0x90] sm:$0xff]
        %v651 = vld [vmem:[%s1 + $0x98] sm:$0xff]
        %v652 = vld [vmem:[%s1 + $0xa0] sm:$0xff]
        %v653 = vld [vmem:[%s1 + $0xa8] sm:$0xff]
        %v654 = vld [vmem:[%s1 + $0xb0] sm:$0xff]
        %v655 = vld [vmem:[%s1 + $0xb8] sm:$0xff]
        %v656 = vld [vmem:[%s1 + $0xc0] sm:$0x77]
        %v657 = vld [vmem:[%s1 + $0xc8] sm:$0x77]
        %v658 = vld [vmem:[#allocation2 + $0x10] sm:$0x1]
        %s659 = scalar_lea.vmem %s1, 208
        %v660 = vld [vmem:[%s659] sm:$0xff]
        %v661 = vld [vmem:[%s659 + $0x8] sm:$0xff]
        %v662 = vld [vmem:[%s659 + $0x10] sm:$0xff]
        %v663 = vld [vmem:[%s659 + $0x18] sm:$0xff]
        %v664 = vld [vmem:[%s659 + $0x20] sm:$0xff]
        %v665 = vld [vmem:[%s659 + $0x28] sm:$0xff]
        %v666 = vld [vmem:[%s659 + $0x30] sm:$0xff]
        %v667 = vld [vmem:[%s659 + $0x38] sm:$0xff]
        %v668 = vld [vmem:[%s659 + $0x40] sm:$0xff]
        %v669 = vld [vmem:[%s659 + $0x48] sm:$0xff]
        %v670 = vld [vmem:[%s659 + $0x50] sm:$0xff]
        %v671 = vld [vmem:[%s659 + $0x58] sm:$0xff]
        %v672 = vld [vmem:[%s659 + $0x60] sm:$0xff]
        %v673 = vld [vmem:[%s659 + $0x68] sm:$0xff]
        %v674 = vld [vmem:[%s659 + $0x70] sm:$0xff]
        %v675 = vld [vmem:[%s659 + $0x78] sm:$0xff]
        %v676 = vld [vmem:[%s659 + $0x80] sm:$0xff]
        %v677 = vld [vmem:[%s659 + $0x88] sm:$0xff]
        %v678 = vld [vmem:[%s659 + $0x90] sm:$0xff]
        %v679 = vld [vmem:[%s659 + $0x98] sm:$0xff]
        %v680 = vld [vmem:[%s659 + $0xa0] sm:$0xff]
        %v681 = vld [vmem:[%s659 + $0xa8] sm:$0xff]
        %v682 = vld [vmem:[%s659 + $0xb0] sm:$0xff]
        %v683 = vld [vmem:[%s659 + $0xb8] sm:$0xff]
        %v684 = vld [vmem:[%s659 + $0xc0] sm:$0x77]
        %v685 = vld [vmem:[%s659 + $0xc8] sm:$0x77]
        %v691 = vunpack.c.l.b16 %v628
        %v692 = vunpack.c.l.b16 %v629
        %v693 = vunpack.c.l.b16 %v630
        %v694 = vunpack.c.l.b16 %v631
        %v695 = vunpack.c.l.b16 %v658
        %v696 = vpack.c.b16 %v692, %v691
        %v697 = vpack.c.b16 %v694, %v693
        %v698 = vpack.c.b16 %v695, %v695
        %vm699 = vsmask.f32 7424
        %v701 = vshrl.u32 %v696, 16
        %v703 = vshll.u32 %v696, 16
        %v705 = vrot.slane %v703, 1
        %v706 = vor.u32 %v701, %v705
        %v708 = vshll.u32 %v697, 16
        %v710 = vrot.slane %v708, 1
        %v711 = vsel %vm699, %v706, %v710
        %v712 = vshrl.u32 %v697, 16
        %v714 = vor.u32 %v712, %v710
        %v716 = vshll.u32 %v698, 16
        %v718 = vrot.slane %v716, 1
        %v719 = vsel %vm699, %v714, %v718
        %v746 = vunpack.c.l.b16 %v660
        %v747 = vunpack.c.h.b16 %v660
        %v748 = vunpack.c.l.b16 %v661
        %v749 = vunpack.c.h.b16 %v661
        %v750 = vunpack.c.l.b16 %v662
        %v751 = vunpack.c.h.b16 %v662
        %v752 = vunpack.c.l.b16 %v663
        %v753 = vunpack.c.h.b16 %v663
        %v754 = vunpack.c.l.b16 %v664
        %v755 = vunpack.c.h.b16 %v664
        %v756 = vunpack.c.l.b16 %v665
        %v757 = vunpack.c.h.b16 %v665
        %v758 = vunpack.c.l.b16 %v666
        %v759 = vunpack.c.h.b16 %v666
        %v760 = vunpack.c.l.b16 %v667
        %v761 = vunpack.c.h.b16 %v667
        %v762 = vunpack.c.l.b16 %v668
        %v763 = vunpack.c.h.b16 %v668
        %v764 = vunpack.c.l.b16 %v669
        %v765 = vunpack.c.h.b16 %v669
        %v766 = vunpack.c.l.b16 %v670
        %v767 = vunpack.c.h.b16 %v670
        %v768 = vunpack.c.l.b16 %v671
        %v769 = vunpack.c.h.b16 %v671
        %v770 = vunpack.c.l.b16 %v672
        %v771 = vunpack.c.h.b16 %v672
        %v772 = vunpack.c.l.b16 %v673
        %v773 = vunpack.c.h.b16 %v673
        %v774 = vunpack.c.l.b16 %v674
        %v775 = vunpack.c.h.b16 %v674
        %v776 = vunpack.c.l.b16 %v675
        %v777 = vunpack.c.h.b16 %v675
        %v778 = vunpack.c.l.b16 %v676
        %v779 = vunpack.c.h.b16 %v676
        %v780 = vunpack.c.l.b16 %v677
        %v781 = vunpack.c.h.b16 %v677
        %v782 = vunpack.c.l.b16 %v678
        %v783 = vunpack.c.h.b16 %v678
        %v784 = vunpack.c.l.b16 %v679
        %v785 = vunpack.c.h.b16 %v679
        %v786 = vunpack.c.l.b16 %v680
        %v787 = vunpack.c.h.b16 %v680
        %v788 = vunpack.c.l.b16 %v681
        %v789 = vunpack.c.h.b16 %v681
        %v790 = vunpack.c.l.b16 %v682
        %v791 = vunpack.c.h.b16 %v682
        %v792 = vunpack.c.l.b16 %v683
        %v793 = vunpack.c.h.b16 %v683
        %v794 = vunpack.c.l.b16 %v684
        %v795 = vunpack.c.h.b16 %v684
        %v796 = vunpack.c.l.b16 %v685
        %v797 = vunpack.c.h.b16 %v685
        %v798 = vpack.c.b16 %v750, %v746
        %v799 = vpack.c.b16 %v751, %v747
        %v800 = vpack.c.b16 %v752, %v748
        %v801 = vpack.c.b16 %v753, %v749
        %v802 = vpack.c.b16 %v758, %v754
        %v803 = vpack.c.b16 %v759, %v755
        %v804 = vpack.c.b16 %v760, %v756
        %v805 = vpack.c.b16 %v761, %v757
        %v806 = vpack.c.b16 %v766, %v762
        %v807 = vpack.c.b16 %v767, %v763
        %v808 = vpack.c.b16 %v768, %v764
        %v809 = vpack.c.b16 %v769, %v765
        %v810 = vpack.c.b16 %v774, %v770
        %v811 = vpack.c.b16 %v775, %v771
        %v812 = vpack.c.b16 %v776, %v772
        %v813 = vpack.c.b16 %v777, %v773
        %v814 = vpack.c.b16 %v782, %v778
        %v815 = vpack.c.b16 %v783, %v779
        %v816 = vpack.c.b16 %v784, %v780
        %v817 = vpack.c.b16 %v785, %v781
        %v818 = vpack.c.b16 %v790, %v786
        %v819 = vpack.c.b16 %v791, %v787
        %v820 = vpack.c.b16 %v792, %v788
        %v821 = vpack.c.b16 %v793, %v789
        %v822 = vpack.c.b16 %v794, %v794
        %v823 = vpack.c.b16 %v795, %v795
        %v824 = vpack.c.b16 %v796, %v796
        %v825 = vpack.c.b16 %v797, %v797
        %vm850 = vcmask 834560
        %v852 = vsel %vm850, %v711, 0
        %v855 = vsel %vm850, %v719, 0
        %vm857 = vcmask 1042432
        %v859 = vsel %vm857, %v822, 0
        %v862 = vsel %vm857, %v823, 0
        %v865 = vsel %vm857, %v824, 0
        %v868 = vsel %vm857, %v825, 0
        %870 = vmatprep.subr.bf16.mxu0 %v799
        %871 = vmatpush1.bf16.msra.mxu0 %v798
        %872 = vmatprep.subr.bf16.mxu0 %v803
        %873 = vmatpush1.bf16.msra.mxu0 %v802
        %874 = vmatprep.subr.bf16.mxu0 %v807
        %875 = vmatpush1.bf16.msra.mxu0 %v806
        %876 = vmatprep.subr.bf16.mxu0 %v811
        %877 = vmatpush1.bf16.msra.mxu0 %v810
        %878 = vmatprep.subr.bf16.mxu0 %v815
        %879 = vmatpush1.bf16.msra.mxu0 %v814
        %880 = vmatprep.subr.bf16.mxu0 %v819
        %881 = vmatpush1.bf16.msra.mxu0 %v818
        %882 = vmatprep.subr.bf16.mxu0 %v862
        %883 = vmatpush1.bf16.msra.mxu0 %v859
        %884 = vmatprep.subr.bf16.mxu0 0
        %885 = vmatpush1.bf16.msra.mxu0 0
        %886 = vmatprep.subr.bf16.mxu0 0
        %887 = vmatpush1.bf16.msra.mxu0 0
        %888 = vmatprep.subr.bf16.mxu0 0
        %889 = vmatpush1.bf16.msra.mxu0 0
        %890 = vmatprep.subr.bf16.mxu0 0
        %891 = vmatpush1.bf16.msra.mxu0 0
        %892 = vmatprep.subr.bf16.mxu0 0
        %893 = vmatpush1.bf16.msra.mxu0 0
        %894 = vmatprep.subr.bf16.mxu0 0
        %895 = vmatpush1.bf16.msra.mxu0 0
        %896 = vmatprep.subr.bf16.mxu0 0
        %897 = vmatpush1.bf16.msra.mxu0 0
        %898 = vmatprep.subr.bf16.mxu0 0
        %899 = vmatpush1.bf16.msra.mxu0 0
        %900 = vmatprep.subr.bf16.mxu0 0
        %901 = vmatpush1.bf16.msra.mxu0 0
        %902 = vmatprep.mubr.bf16.mxu0 0
        %903 = vmatmul.mubr.bf16.gmra.mrb[0].mxu0 %v852
        %v904 = vpop.f32.mrb[0].mxu0
        %v905 = vadd.f32 0.0, %v904
        %v906 = vpop.f32.mrb[0].mxu0
        %v907 = vadd.f32 0.0, %v906
        %v908 = vpop.f32.mrb[0].mxu0
        %v909 = vadd.f32 0.0, %v908
        %v910 = vpop.f32.mrb[0].mxu0
        %v911 = vadd.f32 0.0, %v910
        %912 = vmatprep.mubr.bf16.mxu0 0
        %913 = vmatmul.mubr.bf16.gmra.mrb[0].mxu0 %v855
        %v914 = vpop.f32.mrb[0].mxu0
        %v915 = vadd.f32 0.0, %v914
        %v916 = vpop.f32.mrb[0].mxu0
        %v917 = vadd.f32 0.0, %v916
        %v918 = vpop.f32.mrb[0].mxu0
        %v919 = vadd.f32 0.0, %v918
        %v920 = vpop.f32.mrb[0].mxu0
        %v921 = vadd.f32 0.0, %v920
        %922 = vdwg.mxu0
        %923 = vmatprep.subr.bf16.mxu0 %v801
        %924 = vmatpush1.bf16.msra.mxu0 %v800
        %925 = vmatprep.subr.bf16.mxu0 %v805
        %926 = vmatpush1.bf16.msra.mxu0 %v804
        %927 = vmatprep.subr.bf16.mxu0 %v809
        %928 = vmatpush1.bf16.msra.mxu0 %v808
        %929 = vmatprep.subr.bf16.mxu0 %v813
        %930 = vmatpush1.bf16.msra.mxu0 %v812
        %931 = vmatprep.subr.bf16.mxu0 %v817
        %932 = vmatpush1.bf16.msra.mxu0 %v816
        %933 = vmatprep.subr.bf16.mxu0 %v821
        %934 = vmatpush1.bf16.msra.mxu0 %v820
        %935 = vmatprep.subr.bf16.mxu0 %v868
        %936 = vmatpush1.bf16.msra.mxu0 %v865
        %937 = vmatprep.subr.bf16.mxu0 0
        %938 = vmatpush1.bf16.msra.mxu0 0
        %939 = vmatprep.subr.bf16.mxu0 0
        %940 = vmatpush1.bf16.msra.mxu0 0
        %941 = vmatprep.subr.bf16.mxu0 0
        %942 = vmatpush1.bf16.msra.mxu0 0
        %943 = vmatprep.subr.bf16.mxu0 0
        %944 = vmatpush1.bf16.msra.mxu0 0
        %945 = vmatprep.subr.bf16.mxu0 0
        %946 = vmatpush1.bf16.msra.mxu0 0
        %947 = vmatprep.subr.bf16.mxu0 0
        %948 = vmatpush1.bf16.msra.mxu0 0
        %949 = vmatprep.subr.bf16.mxu0 0
        %950 = vmatpush1.bf16.msra.mxu0 0
        %951 = vmatprep.subr.bf16.mxu0 0
        %952 = vmatpush1.bf16.msra.mxu0 0
        %953 = vmatprep.subr.bf16.mxu0 0
        %954 = vmatpush1.bf16.msra.mxu0 0
        %955 = vmatprep.mubr.bf16.mxu0 0
        %956 = vmatmul.mubr.bf16.gmra.mrb[0].mxu0 %v852
        %v957 = vpop.f32.mrb[0].mxu0
        %v958 = vadd.f32 0.0, %v957
        %v959 = vpop.f32.mrb[0].mxu0
        %v960 = vadd.f32 0.0, %v959
        %v961 = vpop.f32.mrb[0].mxu0
        %v962 = vadd.f32 0.0, %v961
        %v963 = vpop.f32.mrb[0].mxu0
        %v964 = vadd.f32 0.0, %v963
        %965 = vmatprep.mubr.bf16.mxu0 0
        %966 = vmatmul.mubr.bf16.gmra.mrb[0].mxu0 %v855
        %v967 = vpop.f32.mrb[0].mxu0
        %v968 = vadd.f32 0.0, %v967
        %v969 = vpop.f32.mrb[0].mxu0
        %v970 = vadd.f32 0.0, %v969
        %v971 = vpop.f32.mrb[0].mxu0
        %v972 = vadd.f32 0.0, %v971
        %v973 = vpop.f32.mrb[0].mxu0
        %v974 = vadd.f32 0.0, %v973
        %975 = vdwg.mxu0
        %v1002 = vunpack.c.l.b16 %v632
        %v1003 = vunpack.c.h.b16 %v632
        %v1004 = vunpack.c.l.b16 %v633
        %v1005 = vunpack.c.h.b16 %v633
        %v1006 = vunpack.c.l.b16 %v634
        %v1007 = vunpack.c.h.b16 %v634
        %v1008 = vunpack.c.l.b16 %v635
        %v1009 = vunpack.c.h.b16 %v635
        %v1010 = vunpack.c.l.b16 %v636
        %v1011 = vunpack.c.h.b16 %v636
        %v1012 = vunpack.c.l.b16 %v637
        %v1013 = vunpack.c.h.b16 %v637
        %v1014 = vunpack.c.l.b16 %v638
        %v1015 = vunpack.c.h.b16 %v638
        %v1016 = vunpack.c.l.b16 %v639
        %v1017 = vunpack.c.h.b16 %v639
        %v1018 = vunpack.c.l.b16 %v640
        %v1019 = vunpack.c.h.b16 %v640
        %v1020 = vunpack.c.l.b16 %v641
        %v1021 = vunpack.c.h.b16 %v641
        %v1022 = vunpack.c.l.b16 %v642
        %v1023 = vunpack.c.h.b16 %v642
        %v1024 = vunpack.c.l.b16 %v643
        %v1025 = vunpack.c.h.b16 %v643
        %v1026 = vunpack.c.l.b16 %v644
        %v1027 = vunpack.c.h.b16 %v644
        %v1028 = vunpack.c.l.b16 %v645
        %v1029 = vunpack.c.h.b16 %v645
        %v1030 = vunpack.c.l.b16 %v646
        %v1031 = vunpack.c.h.b16 %v646
        %v1032 = vunpack.c.l.b16 %v647
        %v1033 = vunpack.c.h.b16 %v647
        %v1034 = vunpack.c.l.b16 %v648
        %v1035 = vunpack.c.h.b16 %v648
        %v1036 = vunpack.c.l.b16 %v649
        %v1037 = vunpack.c.h.b16 %v649
        %v1038 = vunpack.c.l.b16 %v650
        %v1039 = vunpack.c.h.b16 %v650
        %v1040 = vunpack.c.l.b16 %v651
        %v1041 = vunpack.c.h.b16 %v651
        %v1042 = vunpack.c.l.b16 %v652
        %v1043 = vunpack.c.h.b16 %v652
        %v1044 = vunpack.c.l.b16 %v653
        %v1045 = vunpack.c.h.b16 %v653
        %v1046 = vunpack.c.l.b16 %v654
        %v1047 = vunpack.c.h.b16 %v654
        %v1048 = vunpack.c.l.b16 %v655
        %v1049 = vunpack.c.h.b16 %v655
        %v1050 = vunpack.c.l.b16 %v656
        %v1051 = vunpack.c.h.b16 %v656
        %v1052 = vunpack.c.l.b16 %v657
        %v1053 = vunpack.c.h.b16 %v657
        %v1054 = vpack.c.b16 %v1006, %v1002
        %v1055 = vpack.c.b16 %v1007, %v1003
        %v1056 = vpack.c.b16 %v1008, %v1004
        %v1057 = vpack.c.b16 %v1009, %v1005
        %v1058 = vpack.c.b16 %v1014, %v1010
        %v1059 = vpack.c.b16 %v1015, %v1011
        %v1060 = vpack.c.b16 %v1016, %v1012
        %v1061 = vpack.c.b16 %v1017, %v1013
        %v1062 = vpack.c.b16 %v1022, %v1018
        %v1063 = vpack.c.b16 %v1023, %v1019
        %v1064 = vpack.c.b16 %v1024, %v1020
        %v1065 = vpack.c.b16 %v1025, %v1021
        %v1066 = vpack.c.b16 %v1030, %v1026
        %v1067 = vpack.c.b16 %v1031, %v1027
        %v1068 = vpack.c.b16 %v1032, %v1028
        %v1069 = vpack.c.b16 %v1033, %v1029
        %v1070 = vpack.c.b16 %v1038, %v1034
        %v1071 = vpack.c.b16 %v1039, %v1035
        %v1072 = vpack.c.b16 %v1040, %v1036
        %v1073 = vpack.c.b16 %v1041, %v1037
        %v1074 = vpack.c.b16 %v1046, %v1042
        %v1075 = vpack.c.b16 %v1047, %v1043
        %v1076 = vpack.c.b16 %v1048, %v1044
        %v1077 = vpack.c.b16 %v1049, %v1045
        %v1078 = vpack.c.b16 %v1050, %v1050
        %v1079 = vpack.c.b16 %v1051, %v1051
        %v1080 = vpack.c.b16 %v1052, %v1052
        %v1081 = vpack.c.b16 %v1053, %v1053
        %v1106 = vsel %vm850, %v696, 0
        %v1108 = vsel %vm850, %v697, 0
        %v1111 = vsel %vm857, %v1078, 0
        %v1114 = vsel %vm857, %v1079, 0
        %v1117 = vsel %vm857, %v1080, 0
        %v1120 = vsel %vm857, %v1081, 0
        %1122 = vmatprep.subr.bf16.mxu0 %v1055
        %1123 = vmatpush1.bf16.msra.mxu0 %v1054
        %1124 = vmatprep.subr.bf16.mxu0 %v1059
        %1125 = vmatpush1.bf16.msra.mxu0 %v1058
        %1126 = vmatprep.subr.bf16.mxu0 %v1063
        %1127 = vmatpush1.bf16.msra.mxu0 %v1062
        %1128 = vmatprep.subr.bf16.mxu0 %v1067
        %1129 = vmatpush1.bf16.msra.mxu0 %v1066
        %1130 = vmatprep.subr.bf16.mxu0 %v1071
        %1131 = vmatpush1.bf16.msra.mxu0 %v1070
        %1132 = vmatprep.subr.bf16.mxu0 %v1075
        %1133 = vmatpush1.bf16.msra.mxu0 %v1074
        %1134 = vmatprep.subr.bf16.mxu0 %v1114
        %1135 = vmatpush1.bf16.msra.mxu0 %v1111
        %1136 = vmatprep.subr.bf16.mxu0 0
        %1137 = vmatpush1.bf16.msra.mxu0 0
        %1138 = vmatprep.subr.bf16.mxu0 0
        %1139 = vmatpush1.bf16.msra.mxu0 0
        %1140 = vmatprep.subr.bf16.mxu0 0
        %1141 = vmatpush1.bf16.msra.mxu0 0
        %1142 = vmatprep.subr.bf16.mxu0 0
        %1143 = vmatpush1.bf16.msra.mxu0 0
        %1144 = vmatprep.subr.bf16.mxu0 0
        %1145 = vmatpush1.bf16.msra.mxu0 0
        %1146 = vmatprep.subr.bf16.mxu0 0
        %1147 = vmatpush1.bf16.msra.mxu0 0
        %1148 = vmatprep.subr.bf16.mxu0 0
        %1149 = vmatpush1.bf16.msra.mxu0 0
        %1150 = vmatprep.subr.bf16.mxu0 0
        %1151 = vmatpush1.bf16.msra.mxu0 0
        %1152 = vmatprep.subr.bf16.mxu0 0
        %1153 = vmatpush1.bf16.msra.mxu0 0
        %1154 = vmatprep.mubr.bf16.mxu0 0
        %1155 = vmatmul.mubr.bf16.gmra.mrb[0].mxu0 %v1106
        %v1156 = vpop.f32.mrb[0].mxu0
        %v1157 = vadd.f32 %v905, %v1156
        %v1158 = vpop.f32.mrb[0].mxu0
        %v1159 = vadd.f32 %v907, %v1158
        %v1160 = vpop.f32.mrb[0].mxu0
        %v1161 = vadd.f32 %v909, %v1160
        %v1162 = vpop.f32.mrb[0].mxu0
        %v1163 = vadd.f32 %v911, %v1162
        %1164 = vmatprep.mubr.bf16.mxu0 0
        %1165 = vmatmul.mubr.bf16.gmra.mrb[0].mxu0 %v1108
        %v1166 = vpop.f32.mrb[0].mxu0
        %v1167 = vadd.f32 %v915, %v1166
        %v1168 = vpop.f32.mrb[0].mxu0
        %v1169 = vadd.f32 %v917, %v1168
        %v1170 = vpop.f32.mrb[0].mxu0
        %v1171 = vadd.f32 %v919, %v1170
        %v1172 = vpop.f32.mrb[0].mxu0
        %v1173 = vadd.f32 %v921, %v1172
        %1174 = vdwg.mxu0
        %1175 = vmatprep.subr.bf16.mxu0 %v1057
        %1176 = vmatpush1.bf16.msra.mxu0 %v1056
        %1177 = vmatprep.subr.bf16.mxu0 %v1061
        %1178 = vmatpush1.bf16.msra.mxu0 %v1060
        %1179 = vmatprep.subr.bf16.mxu0 %v1065
        %1180 = vmatpush1.bf16.msra.mxu0 %v1064
        %1181 = vmatprep.subr.bf16.mxu0 %v1069
        %1182 = vmatpush1.bf16.msra.mxu0 %v1068
        %1183 = vmatprep.subr.bf16.mxu0 %v1073
        %1184 = vmatpush1.bf16.msra.mxu0 %v1072
        %1185 = vmatprep.subr.bf16.mxu0 %v1077
        %1186 = vmatpush1.bf16.msra.mxu0 %v1076
        %1187 = vmatprep.subr.bf16.mxu0 %v1120
        %1188 = vmatpush1.bf16.msra.mxu0 %v1117
        %1189 = vmatprep.subr.bf16.mxu0 0
        %1190 = vmatpush1.bf16.msra.mxu0 0
        %1191 = vmatprep.subr.bf16.mxu0 0
        %1192 = vmatpush1.bf16.msra.mxu0 0
        %1193 = vmatprep.subr.bf16.mxu0 0
        %1194 = vmatpush1.bf16.msra.mxu0 0
        %1195 = vmatprep.subr.bf16.mxu0 0
        %1196 = vmatpush1.bf16.msra.mxu0 0
        %1197 = vmatprep.subr.bf16.mxu0 0
        %1198 = vmatpush1.bf16.msra.mxu0 0
        %1199 = vmatprep.subr.bf16.mxu0 0
        %1200 = vmatpush1.bf16.msra.mxu0 0
        %1201 = vmatprep.subr.bf16.mxu0 0
        %1202 = vmatpush1.bf16.msra.mxu0 0
        %1203 = vmatprep.subr.bf16.mxu0 0
        %1204 = vmatpush1.bf16.msra.mxu0 0
        %1205 = vmatprep.subr.bf16.mxu0 0
        %1206 = vmatpush1.bf16.msra.mxu0 0
        %1207 = vmatprep.mubr.bf16.mxu0 0
        %1208 = vmatmul.mubr.bf16.gmra.mrb[0].mxu0 %v1106
        %v1209 = vpop.f32.mrb[0].mxu0
        %v1210 = vadd.f32 %v958, %v1209
        %v1211 = vpop.f32.mrb[0].mxu0
        %v1212 = vadd.f32 %v960, %v1211
        %v1213 = vpop.f32.mrb[0].mxu0
        %v1214 = vadd.f32 %v962, %v1213
        %v1215 = vpop.f32.mrb[0].mxu0
        %v1216 = vadd.f32 %v964, %v1215
        %1217 = vmatprep.mubr.bf16.mxu0 0
        %1218 = vmatmul.mubr.bf16.gmra.mrb[0].mxu0 %v1108
        %v1219 = vpop.f32.mrb[0].mxu0
        %v1220 = vadd.f32 %v968, %v1219
        %v1221 = vpop.f32.mrb[0].mxu0
        %v1222 = vadd.f32 %v970, %v1221
        %v1223 = vpop.f32.mrb[0].mxu0
        %v1224 = vadd.f32 %v972, %v1223
        %v1225 = vpop.f32.mrb[0].mxu0
        %v1226 = vadd.f32 %v974, %v1225
        %1227 = vdwg.mxu0
        %v1228 = vld [vmem:[#allocation2] sm:$0xe]
        %s1229 = scalar_lea.vmem %s1, 416
        %v1230 = vld [vmem:[%s1229] sm:$0xff]
        %v1231 = vld [vmem:[%s1229 + $0x8] sm:$0xff]
        %v1232 = vld [vmem:[%s1229 + $0x10] sm:$0xff]
        %v1233 = vld [vmem:[%s1229 + $0x18] sm:$0xff]
        %v1234 = vld [vmem:[%s1229 + $0x20] sm:$0xff]
        %v1235 = vld [vmem:[%s1229 + $0x28] sm:$0xff]
        %v1236 = vld [vmem:[%s1229 + $0x30] sm:$0xff]
        %v1237 = vld [vmem:[%s1229 + $0x38] sm:$0xff]
        %v1238 = vld [vmem:[%s1229 + $0x40] sm:$0xff]
        %v1239 = vld [vmem:[%s1229 + $0x48] sm:$0xff]
        %v1240 = vld [vmem:[%s1229 + $0x50] sm:$0xff]
        %v1241 = vld [vmem:[%s1229 + $0x58] sm:$0xff]
        %v1242 = vld [vmem:[%s1229 + $0x60] sm:$0xff]
        %v1243 = vld [vmem:[%s1229 + $0x68] sm:$0xff]
        %v1244 = vld [vmem:[%s1229 + $0x70] sm:$0xff]
        %v1245 = vld [vmem:[%s1229 + $0x78] sm:$0xff]
        %v1246 = vld [vmem:[%s1229 + $0x80] sm:$0xff]
        %v1247 = vld [vmem:[%s1229 + $0x88] sm:$0xff]
        %v1248 = vld [vmem:[%s1229 + $0x90] sm:$0xff]
        %v1249 = vld [vmem:[%s1229 + $0x98] sm:$0xff]
        %v1250 = vld [vmem:[%s1229 + $0xa0] sm:$0xff]
        %v1251 = vld [vmem:[%s1229 + $0xa8] sm:$0xff]
        %v1252 = vld [vmem:[%s1229 + $0xb0] sm:$0xff]
        %v1253 = vld [vmem:[%s1229 + $0xb8] sm:$0xff]
        %v1254 = vld [vmem:[%s1229 + $0xc0] sm:$0x77]
        %v1255 = vld [vmem:[%s1229 + $0xc8] sm:$0x77]
        %v1257 = vunpack.c.l.b16 %v1228
        %v1258 = vpack.c.b16 %v692, %v1257
        %vm1259 = vcmask 1046528
        %v1260 = vrot.slane %v1258, 1
        %v1261 = vrot.slane %v697, 1
        %v1262 = vsel %vm1259, %v1260, %v1261
        %v1263 = vrot.slane %v698, 1
        %v1264 = vsel %vm1259, %v1261, %v1263
        %v1291 = vunpack.c.l.b16 %v1230
        %v1292 = vunpack.c.h.b16 %v1230
        %v1293 = vunpack.c.l.b16 %v1231
        %v1294 = vunpack.c.h.b16 %v1231
        %v1295 = vunpack.c.l.b16 %v1232
        %v1296 = vunpack.c.h.b16 %v1232
        %v1297 = vunpack.c.l.b16 %v1233
        %v1298 = vunpack.c.h.b16 %v1233
        %v1299 = vunpack.c.l.b16 %v1234
        %v1300 = vunpack.c.h.b16 %v1234
        %v1301 = vunpack.c.l.b16 %v1235
        %v1302 = vunpack.c.h.b16 %v1235
        %v1303 = vunpack.c.l.b16 %v1236
        %v1304 = vunpack.c.h.b16 %v1236
        %v1305 = vunpack.c.l.b16 %v1237
        %v1306 = vunpack.c.h.b16 %v1237
        %v1307 = vunpack.c.l.b16 %v1238
        %v1308 = vunpack.c.h.b16 %v1238
        %v1309 = vunpack.c.l.b16 %v1239
        %v1310 = vunpack.c.h.b16 %v1239
        %v1311 = vunpack.c.l.b16 %v1240
        %v1312 = vunpack.c.h.b16 %v1240
        %v1313 = vunpack.c.l.b16 %v1241
        %v1314 = vunpack.c.h.b16 %v1241
        %v1315 = vunpack.c.l.b16 %v1242
        %v1316 = vunpack.c.h.b16 %v1242
        %v1317 = vunpack.c.l.b16 %v1243
        %v1318 = vunpack.c.h.b16 %v1243
        %v1319 = vunpack.c.l.b16 %v1244
        %v1320 = vunpack.c.h.b16 %v1244
        %v1321 = vunpack.c.l.b16 %v1245
        %v1322 = vunpack.c.h.b16 %v1245
        %v1323 = vunpack.c.l.b16 %v1246
        %v1324 = vunpack.c.h.b16 %v1246
        %v1325 = vunpack.c.l.b16 %v1247
        %v1326 = vunpack.c.h.b16 %v1247
        %v1327 = vunpack.c.l.b16 %v1248
        %v1328 = vunpack.c.h.b16 %v1248
        %v1329 = vunpack.c.l.b16 %v1249
        %v1330 = vunpack.c.h.b16 %v1249
        %v1331 = vunpack.c.l.b16 %v1250
        %v1332 = vunpack.c.h.b16 %v1250
        %v1333 = vunpack.c.l.b16 %v1251
        %v1334 = vunpack.c.h.b16 %v1251
        %v1335 = vunpack.c.l.b16 %v1252
        %v1336 = vunpack.c.h.b16 %v1252
        %v1337 = vunpack.c.l.b16 %v1253
        %v1338 = vunpack.c.h.b16 %v1253
        %v1339 = vunpack.c.l.b16 %v1254
        %v1340 = vunpack.c.h.b16 %v1254
        %v1341 = vunpack.c.l.b16 %v1255
        %v1342 = vunpack.c.h.b16 %v1255
        %v1343 = vpack.c.b16 %v1295, %v1291
        %v1344 = vpack.c.b16 %v1296, %v1292
        %v1345 = vpack.c.b16 %v1297, %v1293
        %v1346 = vpack.c.b16 %v1298, %v1294
        %v1347 = vpack.c.b16 %v1303, %v1299
        %v1348 = vpack.c.b16 %v1304, %v1300
        %v1349 = vpack.c.b16 %v1305, %v1301
        %v1350 = vpack.c.b16 %v1306, %v1302
        %v1351 = vpack.c.b16 %v1311, %v1307
        %v1352 = vpack.c.b16 %v1312, %v1308
        %v1353 = vpack.c.b16 %v1313, %v1309
        %v1354 = vpack.c.b16 %v1314, %v1310
        %v1355 = vpack.c.b16 %v1319, %v1315
        %v1356 = vpack.c.b16 %v1320, %v1316
        %v1357 = vpack.c.b16 %v1321, %v1317
        %v1358 = vpack.c.b16 %v1322, %v1318
        %v1359 = vpack.c.b16 %v1327, %v1323
        %v1360 = vpack.c.b16 %v1328, %v1324
        %v1361 = vpack.c.b16 %v1329, %v1325
        %v1362 = vpack.c.b16 %v1330, %v1326
        %v1363 = vpack.c.b16 %v1335, %v1331
        %v1364 = vpack.c.b16 %v1336, %v1332
        %v1365 = vpack.c.b16 %v1337, %v1333
        %v1366 = vpack.c.b16 %v1338, %v1334
        %v1367 = vpack.c.b16 %v1339, %v1339
        %v1368 = vpack.c.b16 %v1340, %v1340
        %v1369 = vpack.c.b16 %v1341, %v1341
        %v1370 = vpack.c.b16 %v1342, %v1342
        %v1396 = vsel %vm850, %v1262, 0
        %v1399 = vsel %vm850, %v1264, 0
        %v1402 = vsel %vm857, %v1367, 0
        %v1405 = vsel %vm857, %v1368, 0
        %v1408 = vsel %vm857, %v1369, 0
        %v1411 = vsel %vm857, %v1370, 0
        %1413 = vmatprep.subr.bf16.mxu0 %v1344
        %1414 = vmatpush1.bf16.msra.mxu0 %v1343
        %1415 = vmatprep.subr.bf16.mxu0 %v1348
        %1416 = vmatpush1.bf16.msra.mxu0 %v1347
        %1417 = vmatprep.subr.bf16.mxu0 %v1352
        %1418 = vmatpush1.bf16.msra.mxu0 %v1351
        %1419 = vmatprep.subr.bf16.mxu0 %v1356
        %1420 = vmatpush1.bf16.msra.mxu0 %v1355
        %1421 = vmatprep.subr.bf16.mxu0 %v1360
        %1422 = vmatpush1.bf16.msra.mxu0 %v1359
        %1423 = vmatprep.subr.bf16.mxu0 %v1364
        %1424 = vmatpush1.bf16.msra.mxu0 %v1363
        %1425 = vmatprep.subr.bf16.mxu0 %v1405
        %1426 = vmatpush1.bf16.msra.mxu0 %v1402
        %1427 = vmatprep.subr.bf16.mxu0 0
        %1428 = vmatpush1.bf16.msra.mxu0 0
        %1429 = vmatprep.subr.bf16.mxu0 0
        %1430 = vmatpush1.bf16.msra.mxu0 0
        %1431 = vmatprep.subr.bf16.mxu0 0
        %1432 = vmatpush1.bf16.msra.mxu0 0
        %1433 = vmatprep.subr.bf16.mxu0 0
        %1434 = vmatpush1.bf16.msra.mxu0 0
        %1435 = vmatprep.subr.bf16.mxu0 0
        %1436 = vmatpush1.bf16.msra.mxu0 0
        %1437 = vmatprep.subr.bf16.mxu0 0
        %1438 = vmatpush1.bf16.msra.mxu0 0
        %1439 = vmatprep.subr.bf16.mxu0 0
        %1440 = vmatpush1.bf16.msra.mxu0 0
        %1441 = vmatprep.subr.bf16.mxu0 0
        %1442 = vmatpush1.bf16.msra.mxu0 0
        %1443 = vmatprep.subr.bf16.mxu0 0
        %1444 = vmatpush1.bf16.msra.mxu0 0
        %1445 = vmatprep.mubr.bf16.mxu0 0
        %1446 = vmatmul.mubr.bf16.gmra.mrb[0].mxu0 %v1396
        %v1447 = vpop.f32.mrb[0].mxu0
        %v1448 = vadd.f32 0.0, %v1447
        %v1449 = vpop.f32.mrb[0].mxu0
        %v1450 = vadd.f32 0.0, %v1449
        %v1451 = vpop.f32.mrb[0].mxu0
        %v1452 = vadd.f32 0.0, %v1451
        %v1453 = vpop.f32.mrb[0].mxu0
        %v1454 = vadd.f32 0.0, %v1453
        %1455 = vmatprep.mubr.bf16.mxu0 0
        %1456 = vmatmul.mubr.bf16.gmra.mrb[0].mxu0 %v1399
        %v1457 = vpop.f32.mrb[0].mxu0
        %v1458 = vadd.f32 0.0, %v1457
        %v1459 = vpop.f32.mrb[0].mxu0
        %v1460 = vadd.f32 0.0, %v1459
        %v1461 = vpop.f32.mrb[0].mxu0
        %v1462 = vadd.f32 0.0, %v1461
        %v1463 = vpop.f32.mrb[0].mxu0
        %v1464 = vadd.f32 0.0, %v1463
        %1465 = vdwg.mxu0
        %1466 = vmatprep.subr.bf16.mxu0 %v1346
        %1467 = vmatpush1.bf16.msra.mxu0 %v1345
        %1468 = vmatprep.subr.bf16.mxu0 %v1350
        %1469 = vmatpush1.bf16.msra.mxu0 %v1349
        %1470 = vmatprep.subr.bf16.mxu0 %v1354
        %1471 = vmatpush1.bf16.msra.mxu0 %v1353
        %1472 = vmatprep.subr.bf16.mxu0 %v1358
        %1473 = vmatpush1.bf16.msra.mxu0 %v1357
        %1474 = vmatprep.subr.bf16.mxu0 %v1362
        %1475 = vmatpush1.bf16.msra.mxu0 %v1361
        %1476 = vmatprep.subr.bf16.mxu0 %v1366
        %1477 = vmatpush1.bf16.msra.mxu0 %v1365
        %1478 = vmatprep.subr.bf16.mxu0 %v1411
        %1479 = vmatpush1.bf16.msra.mxu0 %v1408
        %1480 = vmatprep.subr.bf16.mxu0 0
        %1481 = vmatpush1.bf16.msra.mxu0 0
        %1482 = vmatprep.subr.bf16.mxu0 0
        %1483 = vmatpush1.bf16.msra.mxu0 0
        %1484 = vmatprep.subr.bf16.mxu0 0
        %1485 = vmatpush1.bf16.msra.mxu0 0
        %1486 = vmatprep.subr.bf16.mxu0 0
        %1487 = vmatpush1.bf16.msra.mxu0 0
        %1488 = vmatprep.subr.bf16.mxu0 0
        %1489 = vmatpush1.bf16.msra.mxu0 0
        %1490 = vmatprep.subr.bf16.mxu0 0
        %1491 = vmatpush1.bf16.msra.mxu0 0
        %1492 = vmatprep.subr.bf16.mxu0 0
        %1493 = vmatpush1.bf16.msra.mxu0 0
        %1494 = vmatprep.subr.bf16.mxu0 0
        %1495 = vmatpush1.bf16.msra.mxu0 0
        %1496 = vmatprep.subr.bf16.mxu0 0
        %1497 = vmatpush1.bf16.msra.mxu0 0
        %1498 = vmatprep.mubr.bf16.mxu0 0
        %1499 = vmatmul.mubr.bf16.gmra.mrb[0].mxu0 %v1396
        %v1500 = vpop.f32.mrb[0].mxu0
        %v1501 = vadd.f32 0.0, %v1500
        %v1502 = vpop.f32.mrb[0].mxu0
        %v1503 = vadd.f32 0.0, %v1502
        %v1504 = vpop.f32.mrb[0].mxu0
        %v1505 = vadd.f32 0.0, %v1504
        %v1506 = vpop.f32.mrb[0].mxu0
        %v1507 = vadd.f32 0.0, %v1506
        %1508 = vmatprep.mubr.bf16.mxu0 0
        %1509 = vmatmul.mubr.bf16.gmra.mrb[0].mxu0 %v1399
        %v1510 = vpop.f32.mrb[0].mxu0
        %v1511 = vadd.f32 0.0, %v1510
        %v1512 = vpop.f32.mrb[0].mxu0
        %v1513 = vadd.f32 0.0, %v1512
        %v1514 = vpop.f32.mrb[0].mxu0
        %v1515 = vadd.f32 0.0, %v1514
        %v1516 = vpop.f32.mrb[0].mxu0
        %v1517 = vadd.f32 0.0, %v1516
        %1518 = vdwg.mxu0
        %v1519 = vadd.f32 %v1157, %v1448
        %v1520 = vadd.f32 %v1159, %v1450
        %v1521 = vadd.f32 %v1210, %v1501
        %v1522 = vadd.f32 %v1212, %v1503
        %v1523 = vadd.f32 %v1161, %v1452
        %v1524 = vadd.f32 %v1163, %v1454
        %v1525 = vadd.f32 %v1214, %v1505
        %v1526 = vadd.f32 %v1216, %v1507
        %v1527 = vadd.f32 %v1167, %v1458
        %v1528 = vadd.f32 %v1169, %v1460
        %v1529 = vadd.f32 %v1220, %v1511
        %v1530 = vadd.f32 %v1222, %v1513
        %v1531 = vadd.f32 %v1171, %v1462
        %v1532 = vadd.f32 %v1173, %v1464
        %v1533 = vadd.f32 %v1224, %v1515
        %v1534 = vadd.f32 %v1226, %v1517
        %v1551 = vcombine.low %v1519, %v1520
        %v1552 = vcombine.high %v1519, %v1520
        %v1553 = vcombine.low %v1521, %v1522
        %v1554 = vcombine.high %v1521, %v1522
        %v1556 = vunpack.c.l.s4 1983009808
        %v1557 = vunpack.c.0.s8 %v1556
        %v1558 = vlaneseq
        %v1559 = vshrl.u32 %v1558, 7
        %v1560 = vsub.s32 %v1557, %v1559
        %v1561 = vrot.slane %v1551, %v1560
        %v1563 = vunpack.c.l.s4 1983009808
        %v1564 = vunpack.c.0.s8 %v1563
        %v1565 = vlaneseq
        %v1566 = vshrl.u32 %v1565, 7
        %v1567 = vsub.s32 %v1564, %v1566
        %v1568 = vrot.slane %v1552, %v1567
        %v1570 = vunpack.c.l.s4 1983009808
        %v1571 = vunpack.c.0.s8 %v1570
        %v1572 = vlaneseq
        %v1573 = vshrl.u32 %v1572, 7
        %v1574 = vsub.s32 %v1571, %v1573
        %v1575 = vrot.slane %v1553, %v1574
        %v1577 = vunpack.c.l.s4 1983009808
        %v1578 = vunpack.c.0.s8 %v1577
        %v1579 = vlaneseq
        %v1580 = vshrl.u32 %v1579, 7
        %v1581 = vsub.s32 %v1578, %v1580
        %v1582 = vrot.slane %v1554, %v1581
        %v1583 = vcombine.low %v1561, %v1575
        %v1584 = vcombine.high %v1561, %v1575
        %v1585 = vcombine.low %v1568, %v1582
        %v1586 = vcombine.high %v1568, %v1582
        %v1587 = vcombine.low %v1523, %v1524
        %v1588 = vcombine.high %v1523, %v1524
        %v1589 = vcombine.low %v1525, %v1526
        %v1590 = vcombine.high %v1525, %v1526
        %v1592 = vunpack.c.l.s4 1983009808
        %v1593 = vunpack.c.0.s8 %v1592
        %v1594 = vlaneseq
        %v1595 = vshrl.u32 %v1594, 7
        %v1596 = vsub.s32 %v1593, %v1595
        %v1597 = vrot.slane %v1587, %v1596
        %v1599 = vunpack.c.l.s4 1983009808
        %v1600 = vunpack.c.0.s8 %v1599
        %v1601 = vlaneseq
        %v1602 = vshrl.u32 %v1601, 7
        %v1603 = vsub.s32 %v1600, %v1602
        %v1604 = vrot.slane %v1588, %v1603
        %v1606 = vunpack.c.l.s4 1983009808
        %v1607 = vunpack.c.0.s8 %v1606
        %v1608 = vlaneseq
        %v1609 = vshrl.u32 %v1608, 7
        %v1610 = vsub.s32 %v1607, %v1609
        %v1611 = vrot.slane %v1589, %v1610
        %v1613 = vunpack.c.l.s4 1983009808
        %v1614 = vunpack.c.0.s8 %v1613
        %v1615 = vlaneseq
        %v1616 = vshrl.u32 %v1615, 7
        %v1617 = vsub.s32 %v1614, %v1616
        %v1618 = vrot.slane %v1590, %v1617
        %v1619 = vcombine.low %v1597, %v1611
        %v1620 = vcombine.high %v1597, %v1611
        %v1621 = vcombine.low %v1604, %v1618
        %v1622 = vcombine.high %v1604, %v1618
        %v1623 = vcombine.low %v1527, %v1528
        %v1624 = vcombine.high %v1527, %v1528
        %v1625 = vcombine.low %v1529, %v1530
        %v1626 = vcombine.high %v1529, %v1530
        %v1628 = vunpack.c.l.s4 1983009808
        %v1629 = vunpack.c.0.s8 %v1628
        %v1630 = vlaneseq
        %v1631 = vshrl.u32 %v1630, 7
        %v1632 = vsub.s32 %v1629, %v1631
        %v1633 = vrot.slane %v1623, %v1632
        %v1635 = vunpack.c.l.s4 1983009808
        %v1636 = vunpack.c.0.s8 %v1635
        %v1637 = vlaneseq
        %v1638 = vshrl.u32 %v1637, 7
        %v1639 = vsub.s32 %v1636, %v1638
        %v1640 = vrot.slane %v1624, %v1639
        %v1642 = vunpack.c.l.s4 1983009808
        %v1643 = vunpack.c.0.s8 %v1642
        %v1644 = vlaneseq
        %v1645 = vshrl.u32 %v1644, 7
        %v1646 = vsub.s32 %v1643, %v1645
        %v1647 = vrot.slane %v1625, %v1646
        %v1649 = vunpack.c.l.s4 1983009808
        %v1650 = vunpack.c.0.s8 %v1649
        %v1651 = vlaneseq
        %v1652 = vshrl.u32 %v1651, 7
        %v1653 = vsub.s32 %v1650, %v1652
        %v1654 = vrot.slane %v1626, %v1653
        %v1655 = vcombine.low %v1633, %v1647
        %v1656 = vcombine.high %v1633, %v1647
        %v1657 = vcombine.low %v1640, %v1654
        %v1658 = vcombine.high %v1640, %v1654
        %v1659 = vcombine.low %v1531, %v1532
        %v1660 = vcombine.high %v1531, %v1532
        %v1661 = vcombine.low %v1533, %v1534
        %v1662 = vcombine.high %v1533, %v1534
        %v1664 = vunpack.c.l.s4 1983009808
        %v1665 = vunpack.c.0.s8 %v1664
        %v1666 = vlaneseq
        %v1667 = vshrl.u32 %v1666, 7
        %v1668 = vsub.s32 %v1665, %v1667
        %v1669 = vrot.slane %v1659, %v1668
        %v1671 = vunpack.c.l.s4 1983009808
        %v1672 = vunpack.c.0.s8 %v1671
        %v1673 = vlaneseq
        %v1674 = vshrl.u32 %v1673, 7
        %v1675 = vsub.s32 %v1672, %v1674
        %v1676 = vrot.slane %v1660, %v1675
        %v1678 = vunpack.c.l.s4 1983009808
        %v1679 = vunpack.c.0.s8 %v1678
        %v1680 = vlaneseq
        %v1681 = vshrl.u32 %v1680, 7
        %v1682 = vsub.s32 %v1679, %v1681
        %v1683 = vrot.slane %v1661, %v1682
        %v1685 = vunpack.c.l.s4 1983009808
        %v1686 = vunpack.c.0.s8 %v1685
        %v1687 = vlaneseq
        %v1688 = vshrl.u32 %v1687, 7
        %v1689 = vsub.s32 %v1686, %v1688
        %v1690 = vrot.slane %v1662, %v1689
        %v1691 = vcombine.low %v1669, %v1683
        %v1692 = vcombine.high %v1669, %v1683
        %v1693 = vcombine.low %v1676, %v1690
        %v1694 = vcombine.high %v1676, %v1690
        %v1711 = vrot.slane %v1583, 7
        %v1712 = vrot.slane %v1711, 2
        %v1713 = vrot.slane %v1584, 7
        %v1714 = vrot.slane %v1713, 2
        %v1715 = vrot.slane %v1585, 7
        %v1716 = vrot.slane %v1715, 2
        %v1717 = vrot.slane %v1586, 7
        %v1718 = vrot.slane %v1717, 2
        %v1719 = vrot.slane %v1619, 7
        %v1720 = vrot.slane %v1719, 2
        %v1721 = vrot.slane %v1620, 7
        %v1722 = vrot.slane %v1721, 2
        %v1723 = vrot.slane %v1621, 7
        %v1724 = vrot.slane %v1723, 2
        %v1725 = vrot.slane %v1622, 7
        %v1726 = vrot.slane %v1725, 2
        %v1727 = vrot.slane %v1655, 7
        %v1728 = vrot.slane %v1727, 2
        %v1729 = vrot.slane %v1656, 7
        %v1730 = vrot.slane %v1729, 2
        %v1731 = vrot.slane %v1657, 7
        %v1732 = vrot.slane %v1731, 2
        %v1733 = vrot.slane %v1658, 7
        %v1734 = vrot.slane %v1733, 2
        %v1735 = vrot.slane %v1691, 7
        %v1736 = vrot.slane %v1735, 2
        %v1737 = vrot.slane %v1692, 7
        %v1738 = vrot.slane %v1737, 2
        %v1739 = vrot.slane %v1693, 7
        %v1740 = vrot.slane %v1739, 2
        %v1741 = vrot.slane %v1694, 7
        %v1742 = vrot.slane %v1741, 2
        %v1759 = vmax.f32 %v1583, %v1712
        %v1760 = vmax.f32 %v1584, %v1714
        %v1761 = vmax.f32 %v1585, %v1716
        %v1762 = vmax.f32 %v1586, %v1718
        %v1763 = vmax.f32 %v1619, %v1720
        %v1764 = vmax.f32 %v1620, %v1722
        %v1765 = vmax.f32 %v1621, %v1724
        %v1766 = vmax.f32 %v1622, %v1726
        %v1767 = vmax.f32 %v1655, %v1728
        %v1768 = vmax.f32 %v1656, %v1730
        %v1769 = vmax.f32 %v1657, %v1732
        %v1770 = vmax.f32 %v1658, %v1734
        %v1771 = vmax.f32 %v1691, %v1736
        %v1772 = vmax.f32 %v1692, %v1738
        %v1773 = vmax.f32 %v1693, %v1740
        %v1774 = vmax.f32 %v1694, %v1742
        %v1791 = vrot.slane %v1759, 4
        %v1792 = vrot.slane %v1760, 4
        %v1793 = vrot.slane %v1761, 4
        %v1794 = vrot.slane %v1762, 4
        %v1795 = vrot.slane %v1763, 4
        %v1796 = vrot.slane %v1764, 4
        %v1797 = vrot.slane %v1765, 4
        %v1798 = vrot.slane %v1766, 4
        %v1799 = vrot.slane %v1767, 4
        %v1800 = vrot.slane %v1768, 4
        %v1801 = vrot.slane %v1769, 4
        %v1802 = vrot.slane %v1770, 4
        %v1803 = vrot.slane %v1771, 4
        %v1804 = vrot.slane %v1772, 4
        %v1805 = vrot.slane %v1773, 4
        %v1806 = vrot.slane %v1774, 4
        %v1823 = vmax.f32 %v1759, %v1791
        %v1824 = vmax.f32 %v1760, %v1792
        %v1825 = vmax.f32 %v1761, %v1793
        %v1826 = vmax.f32 %v1762, %v1794
        %v1827 = vmax.f32 %v1763, %v1795
        %v1828 = vmax.f32 %v1764, %v1796
        %v1829 = vmax.f32 %v1765, %v1797
        %v1830 = vmax.f32 %v1766, %v1798
        %v1831 = vmax.f32 %v1767, %v1799
        %v1832 = vmax.f32 %v1768, %v1800
        %v1833 = vmax.f32 %v1769, %v1801
        %v1834 = vmax.f32 %v1770, %v1802
        %v1835 = vmax.f32 %v1771, %v1803
        %v1836 = vmax.f32 %v1772, %v1804
        %v1837 = vmax.f32 %v1773, %v1805
        %v1838 = vmax.f32 %v1774, %v1806
        %v1839 = vld [vmem:[%s2] sm:$0x3]
        %v1841 = vlaneseq
        %v1842 = vshrl.u32 %v1841, 7
        %v1843 = vsub.s32 0, %v1842
        %v1844 = vrot.slane %v1839, %v1843
        %v1845 = vlaneseq
        %v1846 = vshrl.u32 %v1845, 7
        %v1847 = vsub.s32 1, %v1846
        %v1848 = vrot.slane %v1839, %v1847
        %v1849 = vcombine.low %v1844, %v1848
        %v1850 = vcombine.high %v1844, %v1848
        %v1852 = vunpack.c.l.s4 1983009808
        %v1853 = vunpack.c.0.s8 %v1852
        %v1854 = vlaneseq
        %v1855 = vshrl.u32 %v1854, 7
        %v1856 = vsub.s32 %v1853, %v1855
        %v1857 = vrot.slane %v1849, %v1856
        %v1859 = vunpack.c.l.s4 1983009808
        %v1860 = vunpack.c.0.s8 %v1859
        %v1861 = vlaneseq
        %v1862 = vshrl.u32 %v1861, 7
        %v1863 = vsub.s32 %v1860, %v1862
        %v1864 = vrot.slane %v1850, %v1863
        %v1865 = vcombine.high %v1857, %v1857
        %v1866 = vcombine.high %v1864, %v1864
        %v1867 = vrot.slane %v1857, 1
        %v1868 = vrot.slane %v1865, 1
        %v1869 = vrot.slane %v1864, 1
        %v1870 = vrot.slane %v1866, 1
        %v1879 = vadd.f32 %v1823, %v1857
        %v1880 = vadd.f32 %v1824, %v1867
        %v1881 = vadd.f32 %v1825, %v1865
        %v1882 = vadd.f32 %v1826, %v1868
        %v1883 = vadd.f32 %v1827, %v1864
        %v1884 = vadd.f32 %v1828, %v1869
        %v1885 = vadd.f32 %v1829, %v1866
        %v1886 = vadd.f32 %v1830, %v1870
        %v1887 = vadd.f32 %v1831, %v1857
        %v1888 = vadd.f32 %v1832, %v1867
        %v1889 = vadd.f32 %v1833, %v1865
        %v1890 = vadd.f32 %v1834, %v1868
        %v1891 = vadd.f32 %v1835, %v1864
        %v1892 = vadd.f32 %v1836, %v1869
        %v1893 = vadd.f32 %v1837, %v1866
        %v1894 = vadd.f32 %v1838, %v1870
        %v1895 = vmax.f32 %v1879, 0.0
        %v1896 = vmax.f32 %v1880, 0.0
        %v1897 = vmax.f32 %v1881, 0.0
        %v1898 = vmax.f32 %v1882, 0.0
        %v1899 = vmax.f32 %v1883, 0.0
        %v1900 = vmax.f32 %v1884, 0.0
        %v1901 = vmax.f32 %v1885, 0.0
        %v1902 = vmax.f32 %v1886, 0.0
        %v1903 = vmax.f32 %v1887, 0.0
        %v1904 = vmax.f32 %v1888, 0.0
        %v1905 = vmax.f32 %v1889, 0.0
        %v1906 = vmax.f32 %v1890, 0.0
        %v1907 = vmax.f32 %v1891, 0.0
        %v1908 = vmax.f32 %v1892, 0.0
        %v1909 = vmax.f32 %v1893, 0.0
        %v1910 = vmax.f32 %v1894, 0.0
        %vm1911 = vcmask 1040384
        %vm1912 = vmand %vm1911, %vm332
        %vm1913 = vcmask 1044484
        %vm1914 = vsmask.f32 4352
        %vm1915 = vmand %vm1913, %vm1914
        %vm1916 = vmor %vm1915, %vm1912
        %v1917 = vld [vmem:[#allocation3] sm:$0x11]
        %v1918 = vsel %vm1916, 0, %v1917
        %1919 = vst [vmem:[#allocation3] sm:$0x11] %v1918
        %vm1920 = vcmask 253952
        %vm1921 = vmand %vm1920, %vm332
        %v1922 = vld [vmem:[#allocation3 + $0x8] sm:$0x1]
        %v1923 = vsel %vm1921, 0, %v1922
        %1924 = vst [vmem:[#allocation3 + $0x8] sm:$0x1] %v1923
        %vm1925 = vmand %vm1911, %vm337
        %vm1926 = vsmask.f32 7954
        %vm1927 = vmand %vm1913, %vm1926
        %vm1928 = vmor %vm1927, %vm1925
        %v1929 = vld [vmem:[#allocation3 + $0x18] sm:$0x11]
        %v1930 = vsel %vm1928, 0, %v1929
        %1931 = vst [vmem:[#allocation3 + $0x18] sm:$0x11] %v1930
        %vm1932 = vmand %vm1920, %vm337
        %v1933 = vld [vmem:[#allocation3 + $0x20] sm:$0x1]
        %v1934 = vsel %vm1932, 0, %v1933
        %1935 = vst [vmem:[#allocation3 + $0x20] sm:$0x1] %v1934
        %vm1936 = vcmask 125952
        %1937 = vst.msk [vmem:[#allocation3] sm:$0xf] %vm1936, 0
        %1938 = vst.msk [vmem:[#allocation3 + $0xc] sm:$0xf] %vm1936, 0
        %vm1939 = vcmask 122880
        %1940 = vst.msk [vmem:[#allocation3 + $0x18] sm:$0x1] %vm1939, 0
        %vm1941 = vcmask 257152
        %1942 = vst.msk [vmem:[#allocation3 + $0x8] sm:$0xf] %vm1941, 0
        %1943 = vst.msk [vmem:[#allocation3 + $0x14] sm:$0xf] %vm1941, 0
        %vm1944 = vcmask 254080
        %1945 = vst.msk [vmem:[#allocation3 + $0x20] sm:$0x1] %vm1944, 0
        %v1962 = vlaneseq
        %v1963 = vshrl.u32 %v1962, 7
        %v1964 = vsub.s32 0, %v1963
        %v1965 = vrot.slane %v1895, %v1964
        %v1966 = vlaneseq
        %v1967 = vshrl.u32 %v1966, 7
        %v1968 = vsub.s32 2, %v1967
        %v1969 = vrot.slane %v1895, %v1968
        %v1970 = vlaneseq
        %v1971 = vshrl.u32 %v1970, 7
        %v1972 = vsub.s32 0, %v1971
        %v1973 = vrot.slane %v1896, %v1972
        %v1974 = vlaneseq
        %v1975 = vshrl.u32 %v1974, 7
        %v1976 = vsub.s32 2, %v1975
        %v1977 = vrot.slane %v1896, %v1976
        %v1978 = vlaneseq
        %v1979 = vshrl.u32 %v1978, 7
        %v1980 = vsub.s32 0, %v1979
        %v1981 = vrot.slane %v1897, %v1980
        %v1982 = vlaneseq
        %v1983 = vshrl.u32 %v1982, 7
        %v1984 = vsub.s32 2, %v1983
        %v1985 = vrot.slane %v1897, %v1984
        %v1986 = vlaneseq
        %v1987 = vshrl.u32 %v1986, 7
        %v1988 = vsub.s32 0, %v1987
        %v1989 = vrot.slane %v1898, %v1988
        %v1990 = vlaneseq
        %v1991 = vshrl.u32 %v1990, 7
        %v1992 = vsub.s32 2, %v1991
        %v1993 = vrot.slane %v1898, %v1992
        %v1994 = vlaneseq
        %v1995 = vshrl.u32 %v1994, 7
        %v1996 = vsub.s32 0, %v1995
        %v1997 = vrot.slane %v1899, %v1996
        %v1998 = vlaneseq
        %v1999 = vshrl.u32 %v1998, 7
        %v2000 = vsub.s32 2, %v1999
        %v2001 = vrot.slane %v1899, %v2000
        %v2002 = vlaneseq
        %v2003 = vshrl.u32 %v2002, 7
        %v2004 = vsub.s32 0, %v2003
        %v2005 = vrot.slane %v1900, %v2004
        %v2006 = vlaneseq
        %v2007 = vshrl.u32 %v2006, 7
        %v2008 = vsub.s32 2, %v2007
        %v2009 = vrot.slane %v1900, %v2008
        %v2010 = vlaneseq
        %v2011 = vshrl.u32 %v2010, 7
        %v2012 = vsub.s32 0, %v2011
        %v2013 = vrot.slane %v1901, %v2012
        %v2014 = vlaneseq
        %v2015 = vshrl.u32 %v2014, 7
        %v2016 = vsub.s32 2, %v2015
        %v2017 = vrot.slane %v1901, %v2016
        %v2018 = vlaneseq
        %v2019 = vshrl.u32 %v2018, 7
        %v2020 = vsub.s32 0, %v2019
        %v2021 = vrot.slane %v1902, %v2020
        %v2022 = vlaneseq
        %v2023 = vshrl.u32 %v2022, 7
        %v2024 = vsub.s32 2, %v2023
        %v2025 = vrot.slane %v1902, %v2024
        %v2026 = vlaneseq
        %v2027 = vshrl.u32 %v2026, 7
        %v2028 = vsub.s32 0, %v2027
        %v2029 = vrot.slane %v1903, %v2028
        %v2030 = vlaneseq
        %v2031 = vshrl.u32 %v2030, 7
        %v2032 = vsub.s32 2, %v2031
        %v2033 = vrot.slane %v1903, %v2032
        %v2034 = vlaneseq
        %v2035 = vshrl.u32 %v2034, 7
        %v2036 = vsub.s32 0, %v2035
        %v2037 = vrot.slane %v1904, %v2036
        %v2038 = vlaneseq
        %v2039 = vshrl.u32 %v2038, 7
        %v2040 = vsub.s32 2, %v2039
        %v2041 = vrot.slane %v1904, %v2040
        %v2042 = vlaneseq
        %v2043 = vshrl.u32 %v2042, 7
        %v2044 = vsub.s32 0, %v2043
        %v2045 = vrot.slane %v1905, %v2044
        %v2046 = vlaneseq
        %v2047 = vshrl.u32 %v2046, 7
        %v2048 = vsub.s32 2, %v2047
        %v2049 = vrot.slane %v1905, %v2048
        %v2050 = vlaneseq
        %v2051 = vshrl.u32 %v2050, 7
        %v2052 = vsub.s32 0, %v2051
        %v2053 = vrot.slane %v1906, %v2052
        %v2054 = vlaneseq
        %v2055 = vshrl.u32 %v2054, 7
        %v2056 = vsub.s32 2, %v2055
        %v2057 = vrot.slane %v1906, %v2056
        %v2058 = vlaneseq
        %v2059 = vshrl.u32 %v2058, 7
        %v2060 = vsub.s32 0, %v2059
        %v2061 = vrot.slane %v1907, %v2060
        %v2062 = vlaneseq
        %v2063 = vshrl.u32 %v2062, 7
        %v2064 = vsub.s32 2, %v2063
        %v2065 = vrot.slane %v1907, %v2064
        %v2066 = vlaneseq
        %v2067 = vshrl.u32 %v2066, 7
        %v2068 = vsub.s32 0, %v2067
        %v2069 = vrot.slane %v1908, %v2068
        %v2070 = vlaneseq
        %v2071 = vshrl.u32 %v2070, 7
        %v2072 = vsub.s32 2, %v2071
        %v2073 = vrot.slane %v1908, %v2072
        %v2074 = vlaneseq
        %v2075 = vshrl.u32 %v2074, 7
        %v2076 = vsub.s32 0, %v2075
        %v2077 = vrot.slane %v1909, %v2076
        %v2078 = vlaneseq
        %v2079 = vshrl.u32 %v2078, 7
        %v2080 = vsub.s32 2, %v2079
        %v2081 = vrot.slane %v1909, %v2080
        %v2082 = vlaneseq
        %v2083 = vshrl.u32 %v2082, 7
        %v2084 = vsub.s32 0, %v2083
        %v2085 = vrot.slane %v1910, %v2084
        %v2086 = vlaneseq
        %v2087 = vshrl.u32 %v2086, 7
        %v2088 = vsub.s32 2, %v2087
        %v2089 = vrot.slane %v1910, %v2088
        %v2122 = vpack.c.bf16 %v1965, %v1965
        %v2123 = vpack.c.bf16 %v1969, %v1969
        %v2124 = vpack.c.bf16 %v1973, %v1973
        %v2125 = vpack.c.bf16 %v1977, %v1977
        %v2126 = vpack.c.bf16 %v1981, %v1981
        %v2127 = vpack.c.bf16 %v1985, %v1985
        %v2128 = vpack.c.bf16 %v1989, %v1989
        %v2129 = vpack.c.bf16 %v1993, %v1993
        %v2130 = vpack.c.bf16 %v1997, %v1997
        %v2131 = vpack.c.bf16 %v2001, %v2001
        %v2132 = vpack.c.bf16 %v2005, %v2005
        %v2133 = vpack.c.bf16 %v2009, %v2009
        %v2134 = vpack.c.bf16 %v2013, %v2013
        %v2135 = vpack.c.bf16 %v2017, %v2017
        %v2136 = vpack.c.bf16 %v2021, %v2021
        %v2137 = vpack.c.bf16 %v2025, %v2025
        %v2138 = vpack.c.bf16 %v2029, %v2029
        %v2139 = vpack.c.bf16 %v2033, %v2033
        %v2140 = vpack.c.bf16 %v2037, %v2037
        %v2141 = vpack.c.bf16 %v2041, %v2041
        %v2142 = vpack.c.bf16 %v2045, %v2045
        %v2143 = vpack.c.bf16 %v2049, %v2049
        %v2144 = vpack.c.bf16 %v2053, %v2053
        %v2145 = vpack.c.bf16 %v2057, %v2057
        %v2146 = vpack.c.bf16 %v2061, %v2061
        %v2147 = vpack.c.bf16 %v2065, %v2065
        %v2148 = vpack.c.bf16 %v2069, %v2069
        %v2149 = vpack.c.bf16 %v2073, %v2073
        %v2150 = vpack.c.bf16 %v2077, %v2077
        %v2151 = vpack.c.bf16 %v2081, %v2081
        %v2152 = vpack.c.bf16 %v2085, %v2085
        %v2153 = vpack.c.bf16 %v2089, %v2089
        %v2186 = vunpack.c.l.b16 %v2122
        %v2187 = vunpack.c.l.b16 %v2123
        %v2188 = vunpack.c.l.b16 %v2124
        %v2189 = vunpack.c.l.b16 %v2125
        %v2190 = vunpack.c.l.b16 %v2126
        %v2191 = vunpack.c.l.b16 %v2127
        %v2192 = vunpack.c.l.b16 %v2128
        %v2193 = vunpack.c.l.b16 %v2129
        %v2194 = vunpack.c.l.b16 %v2130
        %v2195 = vunpack.c.l.b16 %v2131
        %v2196 = vunpack.c.l.b16 %v2132
        %v2197 = vunpack.c.l.b16 %v2133
        %v2198 = vunpack.c.l.b16 %v2134
        %v2199 = vunpack.c.l.b16 %v2135
        %v2200 = vunpack.c.l.b16 %v2136
        %v2201 = vunpack.c.l.b16 %v2137
        %v2202 = vunpack.c.l.b16 %v2138
        %v2203 = vunpack.c.l.b16 %v2139
        %v2204 = vunpack.c.l.b16 %v2140
        %v2205 = vunpack.c.l.b16 %v2141
        %v2206 = vunpack.c.l.b16 %v2142
        %v2207 = vunpack.c.l.b16 %v2143
        %v2208 = vunpack.c.l.b16 %v2144
        %v2209 = vunpack.c.l.b16 %v2145
        %v2210 = vunpack.c.l.b16 %v2146
        %v2211 = vunpack.c.l.b16 %v2147
        %v2212 = vunpack.c.l.b16 %v2148
        %v2213 = vunpack.c.l.b16 %v2149
        %v2214 = vunpack.c.l.b16 %v2150
        %v2215 = vunpack.c.l.b16 %v2151
        %v2216 = vunpack.c.l.b16 %v2152
        %v2217 = vunpack.c.l.b16 %v2153
        %v2218 = vpack.c.b16 %v2187, %v2186
        %v2219 = vpack.c.b16 %v2189, %v2188
        %v2220 = vpack.c.b16 %v2191, %v2190
        %v2221 = vpack.c.b16 %v2193, %v2192
        %v2222 = vpack.c.b16 %v2195, %v2194
        %v2223 = vpack.c.b16 %v2197, %v2196
        %v2224 = vpack.c.b16 %v2199, %v2198
        %v2225 = vpack.c.b16 %v2201, %v2200
        %v2226 = vpack.c.b16 %v2203, %v2202
        %v2227 = vpack.c.b16 %v2205, %v2204
        %v2228 = vpack.c.b16 %v2207, %v2206
        %v2229 = vpack.c.b16 %v2209, %v2208
        %v2230 = vpack.c.b16 %v2211, %v2210
        %v2231 = vpack.c.b16 %v2213, %v2212
        %v2232 = vpack.c.b16 %v2215, %v2214
        %v2233 = vpack.c.b16 %v2217, %v2216
        %v2234 = vunpack.c.l.b16 %v2218
        %v2235 = vunpack.c.h.b16 %v2218
        %v2236 = vunpack.c.l.b16 %v2219
        %v2237 = vunpack.c.h.b16 %v2219
        %v2238 = vunpack.c.l.b16 %v2220
        %v2239 = vunpack.c.h.b16 %v2220
        %v2240 = vunpack.c.l.b16 %v2221
        %v2241 = vunpack.c.h.b16 %v2221
        %v2242 = vunpack.c.l.b16 %v2222
        %v2243 = vunpack.c.h.b16 %v2222
        %v2244 = vunpack.c.l.b16 %v2223
        %v2245 = vunpack.c.h.b16 %v2223
        %v2246 = vunpack.c.l.b16 %v2224
        %v2247 = vunpack.c.h.b16 %v2224
        %v2248 = vunpack.c.l.b16 %v2225
        %v2249 = vunpack.c.h.b16 %v2225
        %v2250 = vunpack.c.l.b16 %v2226
        %v2251 = vunpack.c.h.b16 %v2226
        %v2252 = vunpack.c.l.b16 %v2227
        %v2253 = vunpack.c.h.b16 %v2227
        %v2254 = vunpack.c.l.b16 %v2228
        %v2255 = vunpack.c.h.b16 %v2228
        %v2256 = vunpack.c.l.b16 %v2229
        %v2257 = vunpack.c.h.b16 %v2229
        %v2258 = vunpack.c.l.b16 %v2230
        %v2259 = vunpack.c.h.b16 %v2230
        %v2260 = vunpack.c.l.b16 %v2231
        %v2261 = vunpack.c.h.b16 %v2231
        %v2262 = vunpack.c.l.b16 %v2232
        %v2263 = vunpack.c.h.b16 %v2232
        %v2264 = vunpack.c.l.b16 %v2233
        %v2265 = vunpack.c.h.b16 %v2233
        %v2266 = vrot.slane %v2234, 7
        %v2267 = vrot.slane %v2236, 6
        %vm2268 = vcmask 1042434
        %v2269 = vsel %vm2268, %v2267, %v2266
        %v2270 = vrot.slane %v2238, 5
        %vm2271 = vcmask 1043459
        %v2272 = vsel %vm2271, %v2270, %v2269
        %v2273 = vrot.slane %v2240, 4
        %vm2274 = vcmask 1044484
        %v2275 = vsel %vm2274, %v2273, %v2272
        %v2276 = vrot.slane %v2242, 3
        %vm2277 = vcmask 1045509
        %v2278 = vsel %vm2277, %v2276, %v2275
        %v2279 = vrot.slane %v2244, 2
        %vm2280 = vcmask 1046534
        %v2281 = vsel %vm2280, %v2279, %v2278
        %v2282 = vrot.slane %v2246, 1
        %vm2283 = vcmask 1047559
        %v2284 = vsel %vm2283, %v2282, %v2281
        %v2285 = vrot.slane %v2235, 7
        %v2286 = vrot.slane %v2237, 6
        %v2287 = vsel %vm2268, %v2286, %v2285
        %v2288 = vrot.slane %v2239, 5
        %v2289 = vsel %vm2271, %v2288, %v2287
        %v2290 = vrot.slane %v2241, 4
        %v2291 = vsel %vm2274, %v2290, %v2289
        %v2292 = vrot.slane %v2243, 3
        %v2293 = vsel %vm2277, %v2292, %v2291
        %v2294 = vrot.slane %v2245, 2
        %v2295 = vsel %vm2280, %v2294, %v2293
        %v2296 = vrot.slane %v2247, 1
        %v2297 = vsel %vm2283, %v2296, %v2295
        %v2298 = vrot.slane %v2250, 7
        %vm2299 = vcmask 1041409
        %v2300 = vsel %vm2299, %v2298, %v2248
        %v2301 = vrot.slane %v2252, 6
        %v2302 = vsel %vm2268, %v2301, %v2300
        %v2303 = vrot.slane %v2254, 5
        %v2304 = vsel %vm2271, %v2303, %v2302
        %v2305 = vrot.slane %v2256, 4
        %v2306 = vsel %vm2274, %v2305, %v2304
        %v2307 = vrot.slane %v2258, 3
        %v2308 = vsel %vm2277, %v2307, %v2306
        %v2309 = vrot.slane %v2260, 2
        %v2310 = vsel %vm2280, %v2309, %v2308
        %v2311 = vrot.slane %v2262, 1
        %v2312 = vsel %vm2283, %v2311, %v2310
        %v2313 = vrot.slane %v2251, 7
        %v2314 = vsel %vm2299, %v2313, %v2249
        %v2315 = vrot.slane %v2253, 6
        %v2316 = vsel %vm2268, %v2315, %v2314
        %v2317 = vrot.slane %v2255, 5
        %v2318 = vsel %vm2271, %v2317, %v2316
        %v2319 = vrot.slane %v2257, 4
        %v2320 = vsel %vm2274, %v2319, %v2318
        %v2321 = vrot.slane %v2259, 3
        %v2322 = vsel %vm2277, %v2321, %v2320
        %v2323 = vrot.slane %v2261, 2
        %v2324 = vsel %vm2280, %v2323, %v2322
        %v2325 = vrot.slane %v2263, 1
        %v2326 = vsel %vm2283, %v2325, %v2324
        %v2327 = vpack.c.b16 %v2297, %v2284
        %v2328 = vpack.c.b16 %v2326, %v2312
        %v2329 = vpack.c.b16 %v2265, %v2264
        %2330 = vrot.lane.b32.xlu0 %v2327, 16
        %v2331 = vpop.permute.xlu0 %2330
        %2332 = vrot.lane.b32.xlu0 %v2328, 16
        %v2333 = vpop.permute.xlu0 %2332
        %2334 = vrot.lane.b32.xlu0 %v2329, 16
        %v2335 = vpop.permute.xlu0 %2334
        %v2336 = vrot.slane %v2331, 4
        %v2337 = vrot.slane %v2333, 4
        %v2338 = vrot.slane %v2335, 4
        %vm2339 = vcmask 130048
        %v2340 = vsel %vm2339, %v2336, %v2331
        %v2341 = vsel %vm2339, %v2337, %v2333
        %v2342 = vsel %vm2339, %v2338, %v2335
        %vm2349 = vcmask 1043584
        %vm2350 = vmand %vm2349, %vm337
        %vm2351 = vcmask 1047556
        %vm2352 = vmand %vm2351, %vm1926
        %vm2353 = vmor %vm2352, %vm2350
        %v2354 = vld [vmem:[#allocation3] sm:$0xff]
        %v2355 = vsel %vm2353, %v2340, %v2354
        %2356 = vst [vmem:[#allocation3] sm:$0xff] %v2355
        %vm2357 = vcmask 125952
        %vm2358 = vmand %vm2357, %vm337
        %v2359 = vld [vmem:[#allocation3 + $0x8] sm:$0xf]
        %v2360 = vsel %vm2358, %v2336, %v2359
        %2361 = vst [vmem:[#allocation3 + $0x8] sm:$0xf] %v2360
        %vm2362 = vcmask 1043584
        %vm2363 = vcmask 1047556
        %vm2364 = vmor %vm2363, %vm2362
        %2365 = vst.msk [vmem:[#allocation3 + $0xc] sm:$0xff] %vm2364, %v2341
        %2366 = vst.msk [vmem:[#allocation3 + $0x14] sm:$0xf] %vm1936, %v2337
        %vm2367 = vcmask 1040512
        %vm2368 = vmand %vm2367, %vm332
        %vm2369 = vmor %vm1915, %vm2368
        %v2370 = vld [vmem:[#allocation3 + $0x18] sm:$0x11]
        %v2371 = vsel %vm2369, %v2342, %v2370
        %2372 = vst [vmem:[#allocation3 + $0x18] sm:$0x11] %v2371
        %vm2373 = vcmask 122880
        %vm2374 = vmand %vm2373, %vm332
        %v2375 = vld [vmem:[#allocation3 + $0x20] sm:$0x1]
        %v2376 = vsel %vm2374, %v2338, %v2375
        %2377 = vst [vmem:[#allocation3 + $0x20] sm:$0x1] %v2376
        %v2378 = vld [vmem:[#allocation3] sm:$0xff]
        %v2379 = vld [vmem:[#allocation3 + $0x8] sm:$0xf]
        %v2380 = vld [vmem:[#allocation3 + $0xc] sm:$0xff]
        %v2381 = vld [vmem:[#allocation3 + $0x14] sm:$0xf]
        %v2382 = vld [vmem:[%s3] sm:$0xff]
        %v2383 = vld [vmem:[%s3 + $0x8] sm:$0xff]
        %v2384 = vld [vmem:[%s3 + $0x10] sm:$0xff]
        %v2385 = vld [vmem:[%s3 + $0x18] sm:$0xff]
        %v2386 = vld [vmem:[%s3 + $0x20] sm:$0xff]
        %v2387 = vld [vmem:[%s3 + $0x28] sm:$0xff]
        %v2388 = vld [vmem:[%s3 + $0x30] sm:$0xff]
        %v2389 = vld [vmem:[%s3 + $0x38] sm:$0xff]
        %v2390 = vld [vmem:[%s3 + $0x40] sm:$0xff]
        %v2391 = vld [vmem:[%s3 + $0x48] sm:$0xff]
        %v2392 = vld [vmem:[%s3 + $0x50] sm:$0xff]
        %v2393 = vld [vmem:[%s3 + $0x58] sm:$0xff]
        %v2394 = vld [vmem:[%s3 + $0x60] sm:$0xff]
        %v2395 = vld [vmem:[%s3 + $0x68] sm:$0xff]
        %v2396 = vld [vmem:[%s3 + $0x70] sm:$0xff]
        %v2397 = vld [vmem:[%s3 + $0x78] sm:$0xff]
        %v2398 = vld [vmem:[%s3 + $0x80] sm:$0xff]
        %v2399 = vld [vmem:[%s3 + $0x88] sm:$0xff]
        %v2400 = vld [vmem:[%s3 + $0x90] sm:$0xff]
        %v2401 = vld [vmem:[%s3 + $0x98] sm:$0xff]
        %v2402 = vld [vmem:[%s3 + $0xa0] sm:$0xff]
        %v2403 = vld [vmem:[%s3 + $0xa8] sm:$0xff]
        %v2404 = vld [vmem:[%s3 + $0xb0] sm:$0xff]
        %v2405 = vld [vmem:[%s3 + $0xb8] sm:$0xff]
        %v2406 = vld [vmem:[%s3 + $0xc0] sm:$0xff]
        %v2407 = vld [vmem:[%s3 + $0xc8] sm:$0xff]
        %v2408 = vld [vmem:[%s3 + $0xd0] sm:$0xff]
        %v2409 = vld [vmem:[%s3 + $0xd8] sm:$0xff]
        %v2410 = vld [vmem:[%s3 + $0xe0] sm:$0xff]
        %v2411 = vld [vmem:[%s3 + $0xe8] sm:$0xff]
        %v2412 = vld [vmem:[%s3 + $0xf0] sm:$0xff]
        %v2413 = vld [vmem:[%s3 + $0xf8] sm:$0xff]
        %v2414 = vld [vmem:[%s3 + $0x100] sm:$0xff]
        %v2415 = vld [vmem:[%s3 + $0x108] sm:$0xff]
        %v2416 = vld [vmem:[%s3 + $0x110] sm:$0xff]
        %v2417 = vld [vmem:[%s3 + $0x118] sm:$0xff]
        %v2418 = vld [vmem:[%s3 + $0x120] sm:$0xff]
        %v2419 = vld [vmem:[%s3 + $0x128] sm:$0xff]
        %v2420 = vld [vmem:[%s3 + $0x130] sm:$0xff]
        %v2421 = vld [vmem:[%s3 + $0x138] sm:$0xff]
        %v2422 = vld [vmem:[%s3 + $0x140] sm:$0xff]
        %v2423 = vld [vmem:[%s3 + $0x148] sm:$0xff]
        %v2424 = vld [vmem:[%s3 + $0x150] sm:$0xff]
        %v2425 = vld [vmem:[%s3 + $0x158] sm:$0xff]
        %v2426 = vld [vmem:[%s3 + $0x160] sm:$0xff]
        %v2427 = vld [vmem:[%s3 + $0x168] sm:$0xff]
        %v2428 = vld [vmem:[%s3 + $0x170] sm:$0xff]
        %v2429 = vld [vmem:[%s3 + $0x178] sm:$0xff]
        %v2430 = vld [vmem:[%s3 + $0x180] sm:$0xff]
        %v2431 = vld [vmem:[%s3 + $0x188] sm:$0xff]
        %v2432 = vld [vmem:[%s3 + $0x190] sm:$0xff]
        %v2433 = vld [vmem:[%s3 + $0x198] sm:$0xff]
        %v2434 = vld [vmem:[%s3 + $0x1a0] sm:$0xff]
        %v2435 = vld [vmem:[%s3 + $0x1a8] sm:$0xff]
        %v2436 = vld [vmem:[%s3 + $0x1b0] sm:$0xff]
        %v2437 = vld [vmem:[%s3 + $0x1b8] sm:$0xff]
        %v2438 = vld [vmem:[%s3 + $0x1c0] sm:$0xff]
        %v2439 = vld [vmem:[%s3 + $0x1c8] sm:$0xff]
        %v2440 = vld [vmem:[%s3 + $0x1d0] sm:$0xff]
        %v2441 = vld [vmem:[%s3 + $0x1d8] sm:$0xff]
        %v2442 = vld [vmem:[%s3 + $0x1e0] sm:$0xff]
        %v2443 = vld [vmem:[%s3 + $0x1e8] sm:$0xff]
        %v2444 = vld [vmem:[%s3 + $0x1f0] sm:$0xff]
        %v2445 = vld [vmem:[%s3 + $0x1f8] sm:$0xff]
        %v2446 = vld [vmem:[%s3 + $0x200] sm:$0xff]
        %v2447 = vld [vmem:[%s3 + $0x208] sm:$0xff]
        %v2448 = vld [vmem:[%s3 + $0x210] sm:$0xff]
        %v2449 = vld [vmem:[%s3 + $0x218] sm:$0xff]
        %v2450 = vld [vmem:[%s3 + $0x220] sm:$0xff]
        %v2451 = vld [vmem:[%s3 + $0x228] sm:$0xff]
        %v2452 = vld [vmem:[%s3 + $0x230] sm:$0xff]
        %v2453 = vld [vmem:[%s3 + $0x238] sm:$0xff]
        %v2454 = vld [vmem:[#allocation3 + $0x18] sm:$0x11]
        %v2455 = vld [vmem:[#allocation3 + $0x20] sm:$0x1]
        %s2456 = scalar_lea.vmem %s3, 576
        %v2457 = vld [vmem:[%s2456] sm:$0xff]
        %v2458 = vld [vmem:[%s2456 + $0x8] sm:$0xff]
        %v2459 = vld [vmem:[%s2456 + $0x10] sm:$0xff]
        %v2460 = vld [vmem:[%s2456 + $0x18] sm:$0xff]
        %v2461 = vld [vmem:[%s2456 + $0x20] sm:$0xff]
        %v2462 = vld [vmem:[%s2456 + $0x28] sm:$0xff]
        %v2463 = vld [vmem:[%s2456 + $0x30] sm:$0xff]
        %v2464 = vld [vmem:[%s2456 + $0x38] sm:$0xff]
        %v2465 = vld [vmem:[%s2456 + $0x40] sm:$0xff]
        %v2466 = vld [vmem:[%s2456 + $0x48] sm:$0xff]
        %v2467 = vld [vmem:[%s2456 + $0x50] sm:$0xff]
        %v2468 = vld [vmem:[%s2456 + $0x58] sm:$0xff]
        %v2469 = vld [vmem:[%s2456 + $0x60] sm:$0xff]
        %v2470 = vld [vmem:[%s2456 + $0x68] sm:$0xff]
        %v2471 = vld [vmem:[%s2456 + $0x70] sm:$0xff]
        %v2472 = vld [vmem:[%s2456 + $0x78] sm:$0xff]
        %v2473 = vld [vmem:[%s2456 + $0x80] sm:$0xff]
        %v2474 = vld [vmem:[%s2456 + $0x88] sm:$0xff]
        %v2475 = vld [vmem:[%s2456 + $0x90] sm:$0xff]
        %v2476 = vld [vmem:[%s2456 + $0x98] sm:$0xff]
        %v2477 = vld [vmem:[%s2456 + $0xa0] sm:$0xff]
        %v2478 = vld [vmem:[%s2456 + $0xa8] sm:$0xff]
        %v2479 = vld [vmem:[%s2456 + $0xb0] sm:$0xff]
        %v2480 = vld [vmem:[%s2456 + $0xb8] sm:$0xff]
        %v2481 = vld [vmem:[%s2456 + $0xc0] sm:$0xff]
        %v2482 = vld [vmem:[%s2456 + $0xc8] sm:$0xff]
        %v2483 = vld [vmem:[%s2456 + $0xd0] sm:$0xff]
        %v2484 = vld [vmem:[%s2456 + $0xd8] sm:$0xff]
        %v2485 = vld [vmem:[%s2456 + $0xe0] sm:$0xff]
        %v2486 = vld [vmem:[%s2456 + $0xe8] sm:$0xff]
        %v2487 = vld [vmem:[%s2456 + $0xf0] sm:$0xff]
        %v2488 = vld [vmem:[%s2456 + $0xf8] sm:$0xff]
        %v2489 = vld [vmem:[%s2456 + $0x100] sm:$0xff]
        %v2490 = vld [vmem:[%s2456 + $0x108] sm:$0xff]
        %v2491 = vld [vmem:[%s2456 + $0x110] sm:$0xff]
        %v2492 = vld [vmem:[%s2456 + $0x118] sm:$0xff]
        %v2493 = vld [vmem:[%s2456 + $0x120] sm:$0xff]
        %v2494 = vld [vmem:[%s2456 + $0x128] sm:$0xff]
        %v2495 = vld [vmem:[%s2456 + $0x130] sm:$0xff]
        %v2496 = vld [vmem:[%s2456 + $0x138] sm:$0xff]
        %v2497 = vld [vmem:[%s2456 + $0x140] sm:$0xff]
        %v2498 = vld [vmem:[%s2456 + $0x148] sm:$0xff]
        %v2499 = vld [vmem:[%s2456 + $0x150] sm:$0xff]
        %v2500 = vld [vmem:[%s2456 + $0x158] sm:$0xff]
        %v2501 = vld [vmem:[%s2456 + $0x160] sm:$0xff]
        %v2502 = vld [vmem:[%s2456 + $0x168] sm:$0xff]
        %v2503 = vld [vmem:[%s2456 + $0x170] sm:$0xff]
        %v2504 = vld [vmem:[%s2456 + $0x178] sm:$0xff]
        %v2505 = vld [vmem:[%s2456 + $0x180] sm:$0xff]
        %v2506 = vld [vmem:[%s2456 + $0x188] sm:$0xff]
        %v2507 = vld [vmem:[%s2456 + $0x190] sm:$0xff]
        %v2508 = vld [vmem:[%s2456 + $0x198] sm:$0xff]
        %v2509 = vld [vmem:[%s2456 + $0x1a0] sm:$0xff]
        %v2510 = vld [vmem:[%s2456 + $0x1a8] sm:$0xff]
        %v2511 = vld [vmem:[%s2456 + $0x1b0] sm:$0xff]
        %v2512 = vld [vmem:[%s2456 + $0x1b8] sm:$0xff]
        %v2513 = vld [vmem:[%s2456 + $0x1c0] sm:$0xff]
        %v2514 = vld [vmem:[%s2456 + $0x1c8] sm:$0xff]
        %v2515 = vld [vmem:[%s2456 + $0x1d0] sm:$0xff]
        %v2516 = vld [vmem:[%s2456 + $0x1d8] sm:$0xff]
        %v2517 = vld [vmem:[%s2456 + $0x1e0] sm:$0xff]
        %v2518 = vld [vmem:[%s2456 + $0x1e8] sm:$0xff]
        %v2519 = vld [vmem:[%s2456 + $0x1f0] sm:$0xff]
        %v2520 = vld [vmem:[%s2456 + $0x1f8] sm:$0xff]
        %v2521 = vld [vmem:[%s2456 + $0x200] sm:$0xff]
        %v2522 = vld [vmem:[%s2456 + $0x208] sm:$0xff]
        %v2523 = vld [vmem:[%s2456 + $0x210] sm:$0xff]
        %v2524 = vld [vmem:[%s2456 + $0x218] sm:$0xff]
        %v2525 = vld [vmem:[%s2456 + $0x220] sm:$0xff]
        %v2526 = vld [vmem:[%s2456 + $0x228] sm:$0xff]
        %v2527 = vld [vmem:[%s2456 + $0x230] sm:$0xff]
        %v2528 = vld [vmem:[%s2456 + $0x238] sm:$0xff]
        %v2535 = vunpack.c.l.b16 %v2378
        %v2536 = vunpack.c.h.b16 %v2378
        %v2537 = vunpack.c.l.b16 %v2379
        %v2538 = vunpack.c.l.b16 %v2380
        %v2539 = vunpack.c.h.b16 %v2380
        %v2540 = vunpack.c.l.b16 %v2381
        %v2541 = vunpack.c.l.b16 %v2454
        %v2542 = vunpack.c.h.b16 %v2454
        %v2543 = vunpack.c.l.b16 %v2455
        %v2544 = vpack.c.b16 %v2538, %v2535
        %v2545 = vpack.c.b16 %v2539, %v2536
        %v2546 = vpack.c.b16 %v2540, %v2537
        %v2547 = vpack.c.b16 %v2541, %v2541
        %v2548 = vpack.c.b16 %v2542, %v2542
        %v2549 = vpack.c.b16 %v2543, %v2543
        %v2551 = vshrl.u32 %v2544, 16
        %v2553 = vshll.u32 %v2544, 16
        %v2555 = vrot.slane %v2553, 1
        %v2556 = vor.u32 %v2551, %v2555
        %v2558 = vshll.u32 %v2547, 16
        %v2560 = vrot.slane %v2558, 1
        %v2561 = vsel %vm699, %v2556, %v2560
        %v2563 = vshrl.u32 %v2545, 16
        %v2565 = vshll.u32 %v2545, 16
        %v2567 = vrot.slane %v2565, 1
        %v2568 = vor.u32 %v2563, %v2567
        %v2570 = vshll.u32 %v2548, 16
        %v2572 = vrot.slane %v2570, 1
        %v2573 = vsel %vm699, %v2568, %v2572
        %v2575 = vshrl.u32 %v2546, 16
        %v2577 = vshll.u32 %v2546, 16
        %v2579 = vrot.slane %v2577, 1
        %v2580 = vor.u32 %v2575, %v2579
        %v2582 = vshll.u32 %v2549, 16
        %v2584 = vrot.slane %v2582, 1
        %v2585 = vsel %vm699, %v2580, %v2584
        %v2660 = vunpack.c.l.b16 %v2457
        %v2661 = vunpack.c.h.b16 %v2457
        %v2662 = vunpack.c.l.b16 %v2458
        %v2663 = vunpack.c.h.b16 %v2458
        %v2664 = vunpack.c.l.b16 %v2459
        %v2665 = vunpack.c.h.b16 %v2459
        %v2666 = vunpack.c.l.b16 %v2460
        %v2667 = vunpack.c.h.b16 %v2460
        %v2668 = vunpack.c.l.b16 %v2461
        %v2669 = vunpack.c.h.b16 %v2461
        %v2670 = vunpack.c.l.b16 %v2462
        %v2671 = vunpack.c.h.b16 %v2462
        %v2672 = vunpack.c.l.b16 %v2463
        %v2673 = vunpack.c.h.b16 %v2463
        %v2674 = vunpack.c.l.b16 %v2464
        %v2675 = vunpack.c.h.b16 %v2464
        %v2676 = vunpack.c.l.b16 %v2465
        %v2677 = vunpack.c.h.b16 %v2465
        %v2678 = vunpack.c.l.b16 %v2466
        %v2679 = vunpack.c.h.b16 %v2466
        %v2680 = vunpack.c.l.b16 %v2467
        %v2681 = vunpack.c.h.b16 %v2467
        %v2682 = vunpack.c.l.b16 %v2468
        %v2683 = vunpack.c.h.b16 %v2468
        %v2684 = vunpack.c.l.b16 %v2469
        %v2685 = vunpack.c.h.b16 %v2469
        %v2686 = vunpack.c.l.b16 %v2470
        %v2687 = vunpack.c.h.b16 %v2470
        %v2688 = vunpack.c.l.b16 %v2471
        %v2689 = vunpack.c.h.b16 %v2471
        %v2690 = vunpack.c.l.b16 %v2472
        %v2691 = vunpack.c.h.b16 %v2472
        %v2692 = vunpack.c.l.b16 %v2473
        %v2693 = vunpack.c.h.b16 %v2473
        %v2694 = vunpack.c.l.b16 %v2474
        %v2695 = vunpack.c.h.b16 %v2474
        %v2696 = vunpack.c.l.b16 %v2475
        %v2697 = vunpack.c.h.b16 %v2475
        %v2698 = vunpack.c.l.b16 %v2476
        %v2699 = vunpack.c.h.b16 %v2476
        %v2700 = vunpack.c.l.b16 %v2477
        %v2701 = vunpack.c.h.b16 %v2477
        %v2702 = vunpack.c.l.b16 %v2478
        %v2703 = vunpack.c.h.b16 %v2478
        %v2704 = vunpack.c.l.b16 %v2479
        %v2705 = vunpack.c.h.b16 %v2479
        %v2706 = vunpack.c.l.b16 %v2480
        %v2707 = vunpack.c.h.b16 %v2480
        %v2708 = vunpack.c.l.b16 %v2481
        %v2709 = vunpack.c.h.b16 %v2481
        %v2710 = vunpack.c.l.b16 %v2482
        %v2711 = vunpack.c.h.b16 %v2482
        %v2712 = vunpack.c.l.b16 %v2483
        %v2713 = vunpack.c.h.b16 %v2483
        %v2714 = vunpack.c.l.b16 %v2484
        %v2715 = vunpack.c.h.b16 %v2484
        %v2716 = vunpack.c.l.b16 %v2485
        %v2717 = vunpack.c.h.b16 %v2485
        %v2718 = vunpack.c.l.b16 %v2486
        %v2719 = vunpack.c.h.b16 %v2486
        %v2720 = vunpack.c.l.b16 %v2487
        %v2721 = vunpack.c.h.b16 %v2487
        %v2722 = vunpack.c.l.b16 %v2488
        %v2723 = vunpack.c.h.b16 %v2488
        %v2724 = vunpack.c.l.b16 %v2489
        %v2725 = vunpack.c.h.b16 %v2489
        %v2726 = vunpack.c.l.b16 %v2490
        %v2727 = vunpack.c.h.b16 %v2490
        %v2728 = vunpack.c.l.b16 %v2491
        %v2729 = vunpack.c.h.b16 %v2491
        %v2730 = vunpack.c.l.b16 %v2492
        %v2731 = vunpack.c.h.b16 %v2492
        %v2732 = vunpack.c.l.b16 %v2493
        %v2733 = vunpack.c.h.b16 %v2493
        %v2734 = vunpack.c.l.b16 %v2494
        %v2735 = vunpack.c.h.b16 %v2494
        %v2736 = vunpack.c.l.b16 %v2495
        %v2737 = vunpack.c.h.b16 %v2495
        %v2738 = vunpack.c.l.b16 %v2496
        %v2739 = vunpack.c.h.b16 %v2496
        %v2740 = vunpack.c.l.b16 %v2497
        %v2741 = vunpack.c.h.b16 %v2497
        %v2742 = vunpack.c.l.b16 %v2498
        %v2743 = vunpack.c.h.b16 %v2498
        %v2744 = vunpack.c.l.b16 %v2499
        %v2745 = vunpack.c.h.b16 %v2499
        %v2746 = vunpack.c.l.b16 %v2500
        %v2747 = vunpack.c.h.b16 %v2500
        %v2748 = vunpack.c.l.b16 %v2501
        %v2749 = vunpack.c.h.b16 %v2501
        %v2750 = vunpack.c.l.b16 %v2502
        %v2751 = vunpack.c.h.b16 %v2502
        %v2752 = vunpack.c.l.b16 %v2503
        %v2753 = vunpack.c.h.b16 %v2503
        %v2754 = vunpack.c.l.b16 %v2504
        %v2755 = vunpack.c.h.b16 %v2504
        %v2756 = vunpack.c.l.b16 %v2505
        %v2757 = vunpack.c.h.b16 %v2505
        %v2758 = vunpack.c.l.b16 %v2506
        %v2759 = vunpack.c.h.b16 %v2506
        %v2760 = vunpack.c.l.b16 %v2507
        %v2761 = vunpack.c.h.b16 %v2507
        %v2762 = vunpack.c.l.b16 %v2508
        %v2763 = vunpack.c.h.b16 %v2508
        %v2764 = vunpack.c.l.b16 %v2509
        %v2765 = vunpack.c.h.b16 %v2509
        %v2766 = vunpack.c.l.b16 %v2510
        %v2767 = vunpack.c.h.b16 %v2510
        %v2768 = vunpack.c.l.b16 %v2511
        %v2769 = vunpack.c.h.b16 %v2511
        %v2770 = vunpack.c.l.b16 %v2512
        %v2771 = vunpack.c.h.b16 %v2512
        %v2772 = vunpack.c.l.b16 %v2513
        %v2773 = vunpack.c.h.b16 %v2513
        %v2774 = vunpack.c.l.b16 %v2514
        %v2775 = vunpack.c.h.b16 %v2514
        %v2776 = vunpack.c.l.b16 %v2515
        %v2777 = vunpack.c.h.b16 %v2515
        %v2778 = vunpack.c.l.b16 %v2516
        %v2779 = vunpack.c.h.b16 %v2516
        %v2780 = vunpack.c.l.b16 %v2517
        %v2781 = vunpack.c.h.b16 %v2517
        %v2782 = vunpack.c.l.b16 %v2518
        %v2783 = vunpack.c.h.b16 %v2518
        %v2784 = vunpack.c.l.b16 %v2519
        %v2785 = vunpack.c.h.b16 %v2519
        %v2786 = vunpack.c.l.b16 %v2520
        %v2787 = vunpack.c.h.b16 %v2520
        %v2788 = vunpack.c.l.b16 %v2521
        %v2789 = vunpack.c.h.b16 %v2521
        %v2790 = vunpack.c.l.b16 %v2522
        %v2791 = vunpack.c.h.b16 %v2522
        %v2792 = vunpack.c.l.b16 %v2523
        %v2793 = vunpack.c.h.b16 %v2523
        %v2794 = vunpack.c.l.b16 %v2524
        %v2795 = vunpack.c.h.b16 %v2524
        %v2796 = vunpack.c.l.b16 %v2525
        %v2797 = vunpack.c.h.b16 %v2525
        %v2798 = vunpack.c.l.b16 %v2526
        %v2799 = vunpack.c.h.b16 %v2526
        %v2800 = vunpack.c.l.b16 %v2527
        %v2801 = vunpack.c.h.b16 %v2527
        %v2802 = vunpack.c.l.b16 %v2528
        %v2803 = vunpack.c.h.b16 %v2528
        %v2804 = vpack.c.b16 %v2664, %v2660
        %v2805 = vpack.c.b16 %v2665, %v2661
        %v2806 = vpack.c.b16 %v2666, %v2662
        %v2807 = vpack.c.b16 %v2667, %v2663
        %v2808 = vpack.c.b16 %v2672, %v2668
        %v2809 = vpack.c.b16 %v2673, %v2669
        %v2810 = vpack.c.b16 %v2674, %v2670
        %v2811 = vpack.c.b16 %v2675, %v2671
        %v2812 = vpack.c.b16 %v2680, %v2676
        %v2813 = vpack.c.b16 %v2681, %v2677
        %v2814 = vpack.c.b16 %v2682, %v2678
        %v2815 = vpack.c.b16 %v2683, %v2679
        %v2816 = vpack.c.b16 %v2688, %v2684
        %v2817 = vpack.c.b16 %v2689, %v2685
        %v2818 = vpack.c.b16 %v2690, %v2686
        %v2819 = vpack.c.b16 %v2691, %v2687
        %v2820 = vpack.c.b16 %v2696, %v2692
        %v2821 = vpack.c.b16 %v2697, %v2693
        %v2822 = vpack.c.b16 %v2698, %v2694
        %v2823 = vpack.c.b16 %v2699, %v2695
        %v2824 = vpack.c.b16 %v2704, %v2700
        %v2825 = vpack.c.b16 %v2705, %v2701
        %v2826 = vpack.c.b16 %v2706, %v2702
        %v2827 = vpack.c.b16 %v2707, %v2703
        %v2828 = vpack.c.b16 %v2712, %v2708
        %v2829 = vpack.c.b16 %v2713, %v2709
        %v2830 = vpack.c.b16 %v2714, %v2710
        %v2831 = vpack.c.b16 %v2715, %v2711
        %v2832 = vpack.c.b16 %v2720, %v2716
        %v2833 = vpack.c.b16 %v2721, %v2717
        %v2834 = vpack.c.b16 %v2722, %v2718
        %v2835 = vpack.c.b16 %v2723, %v2719
        %v2836 = vpack.c.b16 %v2728, %v2724
        %v2837 = vpack.c.b16 %v2729, %v2725
        %v2838 = vpack.c.b16 %v2730, %v2726
        %v2839 = vpack.c.b16 %v2731, %v2727
        %v2840 = vpack.c.b16 %v2736, %v2732
        %v2841 = vpack.c.b16 %v2737, %v2733
        %v2842 = vpack.c.b16 %v2738, %v2734
        %v2843 = vpack.c.b16 %v2739, %v2735
        %v2844 = vpack.c.b16 %v2744, %v2740
        %v2845 = vpack.c.b16 %v2745, %v2741
        %v2846 = vpack.c.b16 %v2746, %v2742
        %v2847 = vpack.c.b16 %v2747, %v2743
        %v2848 = vpack.c.b16 %v2752, %v2748
        %v2849 = vpack.c.b16 %v2753, %v2749
        %v2850 = vpack.c.b16 %v2754, %v2750
        %v2851 = vpack.c.b16 %v2755, %v2751
        %v2852 = vpack.c.b16 %v2760, %v2756
        %v2853 = vpack.c.b16 %v2761, %v2757
        %v2854 = vpack.c.b16 %v2762, %v2758
        %v2855 = vpack.c.b16 %v2763, %v2759
        %v2856 = vpack.c.b16 %v2768, %v2764
        %v2857 = vpack.c.b16 %v2769, %v2765
        %v2858 = vpack.c.b16 %v2770, %v2766
        %v2859 = vpack.c.b16 %v2771, %v2767
        %v2860 = vpack.c.b16 %v2776, %v2772
        %v2861 = vpack.c.b16 %v2777, %v2773
        %v2862 = vpack.c.b16 %v2778, %v2774
        %v2863 = vpack.c.b16 %v2779, %v2775
        %v2864 = vpack.c.b16 %v2784, %v2780
        %v2865 = vpack.c.b16 %v2785, %v2781
        %v2866 = vpack.c.b16 %v2786, %v2782
        %v2867 = vpack.c.b16 %v2787, %v2783
        %v2868 = vpack.c.b16 %v2792, %v2788
        %v2869 = vpack.c.b16 %v2793, %v2789
        %v2870 = vpack.c.b16 %v2794, %v2790
        %v2871 = vpack.c.b16 %v2795, %v2791
        %v2872 = vpack.c.b16 %v2800, %v2796
        %v2873 = vpack.c.b16 %v2801, %v2797
        %v2874 = vpack.c.b16 %v2802, %v2798
        %v2875 = vpack.c.b16 %v2803, %v2799
        %vm2948 = vcmask 261120
        %v2950 = vsel %vm2948, %v2585, 0
        %2952 = vmatprep.subr.bf16.mxu0 %v2805
        %2953 = vmatpush1.bf16.msra.mxu0 %v2804
        %2954 = vmatprep.subr.bf16.mxu0 %v2809
        %2955 = vmatpush1.bf16.msra.mxu0 %v2808
        %2956 = vmatprep.subr.bf16.mxu0 %v2813
        %2957 = vmatpush1.bf16.msra.mxu0 %v2812
        %2958 = vmatprep.subr.bf16.mxu0 %v2817
        %2959 = vmatpush1.bf16.msra.mxu0 %v2816
        %2960 = vmatprep.subr.bf16.mxu0 %v2821
        %2961 = vmatpush1.bf16.msra.mxu0 %v2820
        %2962 = vmatprep.subr.bf16.mxu0 %v2825
        %2963 = vmatpush1.bf16.msra.mxu0 %v2824
        %2964 = vmatprep.subr.bf16.mxu0 %v2829
        %2965 = vmatpush1.bf16.msra.mxu0 %v2828
        %2966 = vmatprep.subr.bf16.mxu0 %v2833
        %2967 = vmatpush1.bf16.msra.mxu0 %v2832
        %2968 = vmatprep.subr.bf16.mxu0 %v2837
        %2969 = vmatpush1.bf16.msra.mxu0 %v2836
        %2970 = vmatprep.subr.bf16.mxu0 %v2841
        %2971 = vmatpush1.bf16.msra.mxu0 %v2840
        %2972 = vmatprep.subr.bf16.mxu0 %v2845
        %2973 = vmatpush1.bf16.msra.mxu0 %v2844
        %2974 = vmatprep.subr.bf16.mxu0 %v2849
        %2975 = vmatpush1.bf16.msra.mxu0 %v2848
        %2976 = vmatprep.subr.bf16.mxu0 %v2853
        %2977 = vmatpush1.bf16.msra.mxu0 %v2852
        %2978 = vmatprep.subr.bf16.mxu0 %v2857
        %2979 = vmatpush1.bf16.msra.mxu0 %v2856
        %2980 = vmatprep.subr.bf16.mxu0 %v2861
        %2981 = vmatpush1.bf16.msra.mxu0 %v2860
        %2982 = vmatprep.subr.bf16.mxu0 %v2865
        %2983 = vmatpush1.bf16.msra.mxu0 %v2864
        %2984 = vmatprep.mubr.bf16.mxu0 %v2573
        %2985 = vmatmul.mubr.bf16.gmra.mrb[0].mxu0 %v2561
        %v2986 = vpop.f32.mrb[0].mxu0
        %v2987 = vadd.f32 0.0, %v2986
        %v2988 = vpop.f32.mrb[0].mxu0
        %v2989 = vadd.f32 0.0, %v2988
        %v2990 = vpop.f32.mrb[0].mxu0
        %v2991 = vadd.f32 0.0, %v2990
        %v2992 = vpop.f32.mrb[0].mxu0
        %v2993 = vadd.f32 0.0, %v2992
        %2994 = vdwg.mxu0
        %2995 = vmatprep.subr.bf16.mxu0 %v2869
        %2996 = vmatpush1.bf16.msra.mxu0 %v2868
        %2997 = vmatprep.subr.bf16.mxu0 %v2873
        %2998 = vmatpush1.bf16.msra.mxu0 %v2872
        %2999 = vmatprep.subr.bf16.mxu0 0
        %3000 = vmatpush1.bf16.msra.mxu0 0
        %3001 = vmatprep.subr.bf16.mxu0 0
        %3002 = vmatpush1.bf16.msra.mxu0 0
        %3003 = vmatprep.subr.bf16.mxu0 0
        %3004 = vmatpush1.bf16.msra.mxu0 0
        %3005 = vmatprep.subr.bf16.mxu0 0
        %3006 = vmatpush1.bf16.msra.mxu0 0
        %3007 = vmatprep.subr.bf16.mxu0 0
        %3008 = vmatpush1.bf16.msra.mxu0 0
        %3009 = vmatprep.subr.bf16.mxu0 0
        %3010 = vmatpush1.bf16.msra.mxu0 0
        %3011 = vmatprep.subr.bf16.mxu0 0
        %3012 = vmatpush1.bf16.msra.mxu0 0
        %3013 = vmatprep.subr.bf16.mxu0 0
        %3014 = vmatpush1.bf16.msra.mxu0 0
        %3015 = vmatprep.subr.bf16.mxu0 0
        %3016 = vmatpush1.bf16.msra.mxu0 0
        %3017 = vmatprep.subr.bf16.mxu0 0
        %3018 = vmatpush1.bf16.msra.mxu0 0
        %3019 = vmatprep.subr.bf16.mxu0 0
        %3020 = vmatpush1.bf16.msra.mxu0 0
        %3021 = vmatprep.subr.bf16.mxu0 0
        %3022 = vmatpush1.bf16.msra.mxu0 0
        %3023 = vmatprep.subr.bf16.mxu0 0
        %3024 = vmatpush1.bf16.msra.mxu0 0
        %3025 = vmatprep.subr.bf16.mxu0 0
        %3026 = vmatpush1.bf16.msra.mxu0 0
        %3027 = vmatprep.mubr.bf16.mxu0 0
        %3028 = vmatmul.mubr.bf16.gmra.mrb[0].mxu0 %v2950
        %v3029 = vpop.f32.mrb[0].mxu0
        %v3030 = vadd.f32 %v2987, %v3029
        %v3031 = vpop.f32.mrb[0].mxu0
        %v3032 = vadd.f32 %v2989, %v3031
        %v3033 = vpop.f32.mrb[0].mxu0
        %v3034 = vadd.f32 %v2991, %v3033
        %v3035 = vpop.f32.mrb[0].mxu0
        %v3036 = vadd.f32 %v2993, %v3035
        %3037 = vdwg.mxu0
        %3038 = vmatprep.subr.bf16.mxu0 %v2807
        %3039 = vmatpush1.bf16.msra.mxu0 %v2806
        %3040 = vmatprep.subr.bf16.mxu0 %v2811
        %3041 = vmatpush1.bf16.msra.mxu0 %v2810
        %3042 = vmatprep.subr.bf16.mxu0 %v2815
        %3043 = vmatpush1.bf16.msra.mxu0 %v2814
        %3044 = vmatprep.subr.bf16.mxu0 %v2819
        %3045 = vmatpush1.bf16.msra.mxu0 %v2818
        %3046 = vmatprep.subr.bf16.mxu0 %v2823
        %3047 = vmatpush1.bf16.msra.mxu0 %v2822
        %3048 = vmatprep.subr.bf16.mxu0 %v2827
        %3049 = vmatpush1.bf16.msra.mxu0 %v2826
        %3050 = vmatprep.subr.bf16.mxu0 %v2831
        %3051 = vmatpush1.bf16.msra.mxu0 %v2830
        %3052 = vmatprep.subr.bf16.mxu0 %v2835
        %3053 = vmatpush1.bf16.msra.mxu0 %v2834
        %3054 = vmatprep.subr.bf16.mxu0 %v2839
        %3055 = vmatpush1.bf16.msra.mxu0 %v2838
        %3056 = vmatprep.subr.bf16.mxu0 %v2843
        %3057 = vmatpush1.bf16.msra.mxu0 %v2842
        %3058 = vmatprep.subr.bf16.mxu0 %v2847
        %3059 = vmatpush1.bf16.msra.mxu0 %v2846
        %3060 = vmatprep.subr.bf16.mxu0 %v2851
        %3061 = vmatpush1.bf16.msra.mxu0 %v2850
        %3062 = vmatprep.subr.bf16.mxu0 %v2855
        %3063 = vmatpush1.bf16.msra.mxu0 %v2854
        %3064 = vmatprep.subr.bf16.mxu0 %v2859
        %3065 = vmatpush1.bf16.msra.mxu0 %v2858
        %3066 = vmatprep.subr.bf16.mxu0 %v2863
        %3067 = vmatpush1.bf16.msra.mxu0 %v2862
        %3068 = vmatprep.subr.bf16.mxu0 %v2867
        %3069 = vmatpush1.bf16.msra.mxu0 %v2866
        %3070 = vmatprep.mubr.bf16.mxu0 %v2573
        %3071 = vmatmul.mubr.bf16.gmra.mrb[0].mxu0 %v2561
        %v3072 = vpop.f32.mrb[0].mxu0
        %v3073 = vadd.f32 0.0, %v3072
        %v3074 = vpop.f32.mrb[0].mxu0
        %v3075 = vadd.f32 0.0, %v3074
        %v3076 = vpop.f32.mrb[0].mxu0
        %v3077 = vadd.f32 0.0, %v3076
        %v3078 = vpop.f32.mrb[0].mxu0
        %v3079 = vadd.f32 0.0, %v3078
        %3080 = vdwg.mxu0
        %3081 = vmatprep.subr.bf16.mxu0 %v2871
        %3082 = vmatpush1.bf16.msra.mxu0 %v2870
        %3083 = vmatprep.subr.bf16.mxu0 %v2875
        %3084 = vmatpush1.bf16.msra.mxu0 %v2874
        %3085 = vmatprep.subr.bf16.mxu0 0
        %3086 = vmatpush1.bf16.msra.mxu0 0
        %3087 = vmatprep.subr.bf16.mxu0 0
        %3088 = vmatpush1.bf16.msra.mxu0 0
        %3089 = vmatprep.subr.bf16.mxu0 0
        %3090 = vmatpush1.bf16.msra.mxu0 0
        %3091 = vmatprep.subr.bf16.mxu0 0
        %3092 = vmatpush1.bf16.msra.mxu0 0
        %3093 = vmatprep.subr.bf16.mxu0 0
        %3094 = vmatpush1.bf16.msra.mxu0 0
        %3095 = vmatprep.subr.bf16.mxu0 0
        %3096 = vmatpush1.bf16.msra.mxu0 0
        %3097 = vmatprep.subr.bf16.mxu0 0
        %3098 = vmatpush1.bf16.msra.mxu0 0
        %3099 = vmatprep.subr.bf16.mxu0 0
        %3100 = vmatpush1.bf16.msra.mxu0 0
        %3101 = vmatprep.subr.bf16.mxu0 0
        %3102 = vmatpush1.bf16.msra.mxu0 0
        %3103 = vmatprep.subr.bf16.mxu0 0
        %3104 = vmatpush1.bf16.msra.mxu0 0
        %3105 = vmatprep.subr.bf16.mxu0 0
        %3106 = vmatpush1.bf16.msra.mxu0 0
        %3107 = vmatprep.subr.bf16.mxu0 0
        %3108 = vmatpush1.bf16.msra.mxu0 0
        %3109 = vmatprep.subr.bf16.mxu0 0
        %3110 = vmatpush1.bf16.msra.mxu0 0
        %3111 = vmatprep.subr.bf16.mxu0 0
        %3112 = vmatpush1.bf16.msra.mxu0 0
        %3113 = vmatprep.mubr.bf16.mxu0 0
        %3114 = vmatmul.mubr.bf16.gmra.mrb[0].mxu0 %v2950
        %v3115 = vpop.f32.mrb[0].mxu0
        %v3116 = vadd.f32 %v3073, %v3115
        %v3117 = vpop.f32.mrb[0].mxu0
        %v3118 = vadd.f32 %v3075, %v3117
        %v3119 = vpop.f32.mrb[0].mxu0
        %v3120 = vadd.f32 %v3077, %v3119
        %v3121 = vpop.f32.mrb[0].mxu0
        %v3122 = vadd.f32 %v3079, %v3121
        %3123 = vdwg.mxu0
        %v3198 = vunpack.c.l.b16 %v2382
        %v3199 = vunpack.c.h.b16 %v2382
        %v3200 = vunpack.c.l.b16 %v2383
        %v3201 = vunpack.c.h.b16 %v2383
        %v3202 = vunpack.c.l.b16 %v2384
        %v3203 = vunpack.c.h.b16 %v2384
        %v3204 = vunpack.c.l.b16 %v2385
        %v3205 = vunpack.c.h.b16 %v2385
        %v3206 = vunpack.c.l.b16 %v2386
        %v3207 = vunpack.c.h.b16 %v2386
        %v3208 = vunpack.c.l.b16 %v2387
        %v3209 = vunpack.c.h.b16 %v2387
        %v3210 = vunpack.c.l.b16 %v2388
        %v3211 = vunpack.c.h.b16 %v2388
        %v3212 = vunpack.c.l.b16 %v2389
        %v3213 = vunpack.c.h.b16 %v2389
        %v3214 = vunpack.c.l.b16 %v2390
        %v3215 = vunpack.c.h.b16 %v2390
        %v3216 = vunpack.c.l.b16 %v2391
        %v3217 = vunpack.c.h.b16 %v2391
        %v3218 = vunpack.c.l.b16 %v2392
        %v3219 = vunpack.c.h.b16 %v2392
        %v3220 = vunpack.c.l.b16 %v2393
        %v3221 = vunpack.c.h.b16 %v2393
        %v3222 = vunpack.c.l.b16 %v2394
        %v3223 = vunpack.c.h.b16 %v2394
        %v3224 = vunpack.c.l.b16 %v2395
        %v3225 = vunpack.c.h.b16 %v2395
        %v3226 = vunpack.c.l.b16 %v2396
        %v3227 = vunpack.c.h.b16 %v2396
        %v3228 = vunpack.c.l.b16 %v2397
        %v3229 = vunpack.c.h.b16 %v2397
        %v3230 = vunpack.c.l.b16 %v2398
        %v3231 = vunpack.c.h.b16 %v2398
        %v3232 = vunpack.c.l.b16 %v2399
        %v3233 = vunpack.c.h.b16 %v2399
        %v3234 = vunpack.c.l.b16 %v2400
        %v3235 = vunpack.c.h.b16 %v2400
        %v3236 = vunpack.c.l.b16 %v2401
        %v3237 = vunpack.c.h.b16 %v2401
        %v3238 = vunpack.c.l.b16 %v2402
        %v3239 = vunpack.c.h.b16 %v2402
        %v3240 = vunpack.c.l.b16 %v2403
        %v3241 = vunpack.c.h.b16 %v2403
        %v3242 = vunpack.c.l.b16 %v2404
        %v3243 = vunpack.c.h.b16 %v2404
        %v3244 = vunpack.c.l.b16 %v2405
        %v3245 = vunpack.c.h.b16 %v2405
        %v3246 = vunpack.c.l.b16 %v2406
        %v3247 = vunpack.c.h.b16 %v2406
        %v3248 = vunpack.c.l.b16 %v2407
        %v3249 = vunpack.c.h.b16 %v2407
        %v3250 = vunpack.c.l.b16 %v2408
        %v3251 = vunpack.c.h.b16 %v2408
        %v3252 = vunpack.c.l.b16 %v2409
        %v3253 = vunpack.c.h.b16 %v2409
        %v3254 = vunpack.c.l.b16 %v2410
        %v3255 = vunpack.c.h.b16 %v2410
        %v3256 = vunpack.c.l.b16 %v2411
        %v3257 = vunpack.c.h.b16 %v2411
        %v3258 = vunpack.c.l.b16 %v2412
        %v3259 = vunpack.c.h.b16 %v2412
        %v3260 = vunpack.c.l.b16 %v2413
        %v3261 = vunpack.c.h.b16 %v2413
        %v3262 = vunpack.c.l.b16 %v2414
        %v3263 = vunpack.c.h.b16 %v2414
        %v3264 = vunpack.c.l.b16 %v2415
        %v3265 = vunpack.c.h.b16 %v2415
        %v3266 = vunpack.c.l.b16 %v2416
        %v3267 = vunpack.c.h.b16 %v2416
        %v3268 = vunpack.c.l.b16 %v2417
        %v3269 = vunpack.c.h.b16 %v2417
        %v3270 = vunpack.c.l.b16 %v2418
        %v3271 = vunpack.c.h.b16 %v2418
        %v3272 = vunpack.c.l.b16 %v2419
        %v3273 = vunpack.c.h.b16 %v2419
        %v3274 = vunpack.c.l.b16 %v2420
        %v3275 = vunpack.c.h.b16 %v2420
        %v3276 = vunpack.c.l.b16 %v2421
        %v3277 = vunpack.c.h.b16 %v2421
        %v3278 = vunpack.c.l.b16 %v2422
        %v3279 = vunpack.c.h.b16 %v2422
        %v3280 = vunpack.c.l.b16 %v2423
        %v3281 = vunpack.c.h.b16 %v2423
        %v3282 = vunpack.c.l.b16 %v2424
        %v3283 = vunpack.c.h.b16 %v2424
        %v3284 = vunpack.c.l.b16 %v2425
        %v3285 = vunpack.c.h.b16 %v2425
        %v3286 = vunpack.c.l.b16 %v2426
        %v3287 = vunpack.c.h.b16 %v2426
        %v3288 = vunpack.c.l.b16 %v2427
        %v3289 = vunpack.c.h.b16 %v2427
        %v3290 = vunpack.c.l.b16 %v2428
        %v3291 = vunpack.c.h.b16 %v2428
        %v3292 = vunpack.c.l.b16 %v2429
        %v3293 = vunpack.c.h.b16 %v2429
        %v3294 = vunpack.c.l.b16 %v2430
        %v3295 = vunpack.c.h.b16 %v2430
        %v3296 = vunpack.c.l.b16 %v2431
        %v3297 = vunpack.c.h.b16 %v2431
        %v3298 = vunpack.c.l.b16 %v2432
        %v3299 = vunpack.c.h.b16 %v2432
        %v3300 = vunpack.c.l.b16 %v2433
        %v3301 = vunpack.c.h.b16 %v2433
        %v3302 = vunpack.c.l.b16 %v2434
        %v3303 = vunpack.c.h.b16 %v2434
        %v3304 = vunpack.c.l.b16 %v2435
        %v3305 = vunpack.c.h.b16 %v2435
        %v3306 = vunpack.c.l.b16 %v2436
        %v3307 = vunpack.c.h.b16 %v2436
        %v3308 = vunpack.c.l.b16 %v2437
        %v3309 = vunpack.c.h.b16 %v2437
        %v3310 = vunpack.c.l.b16 %v2438
        %v3311 = vunpack.c.h.b16 %v2438
        %v3312 = vunpack.c.l.b16 %v2439
        %v3313 = vunpack.c.h.b16 %v2439
        %v3314 = vunpack.c.l.b16 %v2440
        %v3315 = vunpack.c.h.b16 %v2440
        %v3316 = vunpack.c.l.b16 %v2441
        %v3317 = vunpack.c.h.b16 %v2441
        %v3318 = vunpack.c.l.b16 %v2442
        %v3319 = vunpack.c.h.b16 %v2442
        %v3320 = vunpack.c.l.b16 %v2443
        %v3321 = vunpack.c.h.b16 %v2443
        %v3322 = vunpack.c.l.b16 %v2444
        %v3323 = vunpack.c.h.b16 %v2444
        %v3324 = vunpack.c.l.b16 %v2445
        %v3325 = vunpack.c.h.b16 %v2445
        %v3326 = vunpack.c.l.b16 %v2446
        %v3327 = vunpack.c.h.b16 %v2446
        %v3328 = vunpack.c.l.b16 %v2447
        %v3329 = vunpack.c.h.b16 %v2447
        %v3330 = vunpack.c.l.b16 %v2448
        %v3331 = vunpack.c.h.b16 %v2448
        %v3332 = vunpack.c.l.b16 %v2449
        %v3333 = vunpack.c.h.b16 %v2449
        %v3334 = vunpack.c.l.b16 %v2450
        %v3335 = vunpack.c.h.b16 %v2450
        %v3336 = vunpack.c.l.b16 %v2451
        %v3337 = vunpack.c.h.b16 %v2451
        %v3338 = vunpack.c.l.b16 %v2452
        %v3339 = vunpack.c.h.b16 %v2452
        %v3340 = vunpack.c.l.b16 %v2453
        %v3341 = vunpack.c.h.b16 %v2453
        %v3342 = vpack.c.b16 %v3202, %v3198
        %v3343 = vpack.c.b16 %v3203, %v3199
        %v3344 = vpack.c.b16 %v3204, %v3200
        %v3345 = vpack.c.b16 %v3205, %v3201
        %v3346 = vpack.c.b16 %v3210, %v3206
        %v3347 = vpack.c.b16 %v3211, %v3207
        %v3348 = vpack.c.b16 %v3212, %v3208
        %v3349 = vpack.c.b16 %v3213, %v3209
        %v3350 = vpack.c.b16 %v3218, %v3214
        %v3351 = vpack.c.b16 %v3219, %v3215
        %v3352 = vpack.c.b16 %v3220, %v3216
        %v3353 = vpack.c.b16 %v3221, %v3217
        %v3354 = vpack.c.b16 %v3226, %v3222
        %v3355 = vpack.c.b16 %v3227, %v3223
        %v3356 = vpack.c.b16 %v3228, %v3224
        %v3357 = vpack.c.b16 %v3229, %v3225
        %v3358 = vpack.c.b16 %v3234, %v3230
        %v3359 = vpack.c.b16 %v3235, %v3231
        %v3360 = vpack.c.b16 %v3236, %v3232
        %v3361 = vpack.c.b16 %v3237, %v3233
        %v3362 = vpack.c.b16 %v3242, %v3238
        %v3363 = vpack.c.b16 %v3243, %v3239
        %v3364 = vpack.c.b16 %v3244, %v3240
        %v3365 = vpack.c.b16 %v3245, %v3241
        %v3366 = vpack.c.b16 %v3250, %v3246
        %v3367 = vpack.c.b16 %v3251, %v3247
        %v3368 = vpack.c.b16 %v3252, %v3248
        %v3369 = vpack.c.b16 %v3253, %v3249
        %v3370 = vpack.c.b16 %v3258, %v3254
        %v3371 = vpack.c.b16 %v3259, %v3255
        %v3372 = vpack.c.b16 %v3260, %v3256
        %v3373 = vpack.c.b16 %v3261, %v3257
        %v3374 = vpack.c.b16 %v3266, %v3262
        %v3375 = vpack.c.b16 %v3267, %v3263
        %v3376 = vpack.c.b16 %v3268, %v3264
        %v3377 = vpack.c.b16 %v3269, %v3265
        %v3378 = vpack.c.b16 %v3274, %v3270
        %v3379 = vpack.c.b16 %v3275, %v3271
        %v3380 = vpack.c.b16 %v3276, %v3272
        %v3381 = vpack.c.b16 %v3277, %v3273
        %v3382 = vpack.c.b16 %v3282, %v3278
        %v3383 = vpack.c.b16 %v3283, %v3279
        %v3384 = vpack.c.b16 %v3284, %v3280
        %v3385 = vpack.c.b16 %v3285, %v3281
        %v3386 = vpack.c.b16 %v3290, %v3286
        %v3387 = vpack.c.b16 %v3291, %v3287
        %v3388 = vpack.c.b16 %v3292, %v3288
        %v3389 = vpack.c.b16 %v3293, %v3289
        %v3390 = vpack.c.b16 %v3298, %v3294
        %v3391 = vpack.c.b16 %v3299, %v3295
        %v3392 = vpack.c.b16 %v3300, %v3296
        %v3393 = vpack.c.b16 %v3301, %v3297
        %v3394 = vpack.c.b16 %v3306, %v3302
        %v3395 = vpack.c.b16 %v3307, %v3303
        %v3396 = vpack.c.b16 %v3308, %v3304
        %v3397 = vpack.c.b16 %v3309, %v3305
        %v3398 = vpack.c.b16 %v3314, %v3310
        %v3399 = vpack.c.b16 %v3315, %v3311
        %v3400 = vpack.c.b16 %v3316, %v3312
        %v3401 = vpack.c.b16 %v3317, %v3313
        %v3402 = vpack.c.b16 %v3322, %v3318
        %v3403 = vpack.c.b16 %v3323, %v3319
        %v3404 = vpack.c.b16 %v3324, %v3320
        %v3405 = vpack.c.b16 %v3325, %v3321
        %v3406 = vpack.c.b16 %v3330, %v3326
        %v3407 = vpack.c.b16 %v3331, %v3327
        %v3408 = vpack.c.b16 %v3332, %v3328
        %v3409 = vpack.c.b16 %v3333, %v3329
        %v3410 = vpack.c.b16 %v3338, %v3334
        %v3411 = vpack.c.b16 %v3339, %v3335
        %v3412 = vpack.c.b16 %v3340, %v3336
        %v3413 = vpack.c.b16 %v3341, %v3337
        %v3486 = vsel %vm2948, %v2546, 0
        %3488 = vmatprep.subr.bf16.mxu0 %v3343
        %3489 = vmatpush1.bf16.msra.mxu0 %v3342
        %3490 = vmatprep.subr.bf16.mxu0 %v3347
        %3491 = vmatpush1.bf16.msra.mxu0 %v3346
        %3492 = vmatprep.subr.bf16.mxu0 %v3351
        %3493 = vmatpush1.bf16.msra.mxu0 %v3350
        %3494 = vmatprep.subr.bf16.mxu0 %v3355
        %3495 = vmatpush1.bf16.msra.mxu0 %v3354
        %3496 = vmatprep.subr.bf16.mxu0 %v3359
        %3497 = vmatpush1.bf16.msra.mxu0 %v3358
        %3498 = vmatprep.subr.bf16.mxu0 %v3363
        %3499 = vmatpush1.bf16.msra.mxu0 %v3362
        %3500 = vmatprep.subr.bf16.mxu0 %v3367
        %3501 = vmatpush1.bf16.msra.mxu0 %v3366
        %3502 = vmatprep.subr.bf16.mxu0 %v3371
        %3503 = vmatpush1.bf16.msra.mxu0 %v3370
        %3504 = vmatprep.subr.bf16.mxu0 %v3375
        %3505 = vmatpush1.bf16.msra.mxu0 %v3374
        %3506 = vmatprep.subr.bf16.mxu0 %v3379
        %3507 = vmatpush1.bf16.msra.mxu0 %v3378
        %3508 = vmatprep.subr.bf16.mxu0 %v3383
        %3509 = vmatpush1.bf16.msra.mxu0 %v3382
        %3510 = vmatprep.subr.bf16.mxu0 %v3387
        %3511 = vmatpush1.bf16.msra.mxu0 %v3386
        %3512 = vmatprep.subr.bf16.mxu0 %v3391
        %3513 = vmatpush1.bf16.msra.mxu0 %v3390
        %3514 = vmatprep.subr.bf16.mxu0 %v3395
        %3515 = vmatpush1.bf16.msra.mxu0 %v3394
        %3516 = vmatprep.subr.bf16.mxu0 %v3399
        %3517 = vmatpush1.bf16.msra.mxu0 %v3398
        %3518 = vmatprep.subr.bf16.mxu0 %v3403
        %3519 = vmatpush1.bf16.msra.mxu0 %v3402
        %3520 = vmatprep.mubr.bf16.mxu0 %v2545
        %3521 = vmatmul.mubr.bf16.gmra.mrb[0].mxu0 %v2544
        %v3522 = vpop.f32.mrb[0].mxu0
        %v3523 = vadd.f32 %v3030, %v3522
        %v3524 = vpop.f32.mrb[0].mxu0
        %v3525 = vadd.f32 %v3032, %v3524
        %v3526 = vpop.f32.mrb[0].mxu0
        %v3527 = vadd.f32 %v3034, %v3526
        %v3528 = vpop.f32.mrb[0].mxu0
        %v3529 = vadd.f32 %v3036, %v3528
        %3530 = vdwg.mxu0
        %3531 = vmatprep.subr.bf16.mxu0 %v3407
        %3532 = vmatpush1.bf16.msra.mxu0 %v3406
        %3533 = vmatprep.subr.bf16.mxu0 %v3411
        %3534 = vmatpush1.bf16.msra.mxu0 %v3410
        %3535 = vmatprep.subr.bf16.mxu0 0
        %3536 = vmatpush1.bf16.msra.mxu0 0
        %3537 = vmatprep.subr.bf16.mxu0 0
        %3538 = vmatpush1.bf16.msra.mxu0 0
        %3539 = vmatprep.subr.bf16.mxu0 0
        %3540 = vmatpush1.bf16.msra.mxu0 0
        %3541 = vmatprep.subr.bf16.mxu0 0
        %3542 = vmatpush1.bf16.msra.mxu0 0
        %3543 = vmatprep.subr.bf16.mxu0 0
        %3544 = vmatpush1.bf16.msra.mxu0 0
        %3545 = vmatprep.subr.bf16.mxu0 0
        %3546 = vmatpush1.bf16.msra.mxu0 0
        %3547 = vmatprep.subr.bf16.mxu0 0
        %3548 = vmatpush1.bf16.msra.mxu0 0
        %3549 = vmatprep.subr.bf16.mxu0 0
        %3550 = vmatpush1.bf16.msra.mxu0 0
        %3551 = vmatprep.subr.bf16.mxu0 0
        %3552 = vmatpush1.bf16.msra.mxu0 0
        %3553 = vmatprep.subr.bf16.mxu0 0
        %3554 = vmatpush1.bf16.msra.mxu0 0
        %3555 = vmatprep.subr.bf16.mxu0 0
        %3556 = vmatpush1.bf16.msra.mxu0 0
        %3557 = vmatprep.subr.bf16.mxu0 0
        %3558 = vmatpush1.bf16.msra.mxu0 0
        %3559 = vmatprep.subr.bf16.mxu0 0
        %3560 = vmatpush1.bf16.msra.mxu0 0
        %3561 = vmatprep.subr.bf16.mxu0 0
        %3562 = vmatpush1.bf16.msra.mxu0 0
        %3563 = vmatprep.mubr.bf16.mxu0 0
        %3564 = vmatmul.mubr.bf16.gmra.mrb[0].mxu0 %v3486
        %v3565 = vpop.f32.mrb[0].mxu0
        %v3566 = vadd.f32 %v3523, %v3565
        %v3567 = vpop.f32.mrb[0].mxu0
        %v3568 = vadd.f32 %v3525, %v3567
        %v3569 = vpop.f32.mrb[0].mxu0
        %v3570 = vadd.f32 %v3527, %v3569
        %v3571 = vpop.f32.mrb[0].mxu0
        %v3572 = vadd.f32 %v3529, %v3571
        %3573 = vdwg.mxu0
        %3574 = vmatprep.subr.bf16.mxu0 %v3345
        %3575 = vmatpush1.bf16.msra.mxu0 %v3344
        %3576 = vmatprep.subr.bf16.mxu0 %v3349
        %3577 = vmatpush1.bf16.msra.mxu0 %v3348
        %3578 = vmatprep.subr.bf16.mxu0 %v3353
        %3579 = vmatpush1.bf16.msra.mxu0 %v3352
        %3580 = vmatprep.subr.bf16.mxu0 %v3357
        %3581 = vmatpush1.bf16.msra.mxu0 %v3356
        %3582 = vmatprep.subr.bf16.mxu0 %v3361
        %3583 = vmatpush1.bf16.msra.mxu0 %v3360
        %3584 = vmatprep.subr.bf16.mxu0 %v3365
        %3585 = vmatpush1.bf16.msra.mxu0 %v3364
        %3586 = vmatprep.subr.bf16.mxu0 %v3369
        %3587 = vmatpush1.bf16.msra.mxu0 %v3368
        %3588 = vmatprep.subr.bf16.mxu0 %v3373
        %3589 = vmatpush1.bf16.msra.mxu0 %v3372
        %3590 = vmatprep.subr.bf16.mxu0 %v3377
        %3591 = vmatpush1.bf16.msra.mxu0 %v3376
        %3592 = vmatprep.subr.bf16.mxu0 %v3381
        %3593 = vmatpush1.bf16.msra.mxu0 %v3380
        %3594 = vmatprep.subr.bf16.mxu0 %v3385
        %3595 = vmatpush1.bf16.msra.mxu0 %v3384
        %3596 = vmatprep.subr.bf16.mxu0 %v3389
        %3597 = vmatpush1.bf16.msra.mxu0 %v3388
        %3598 = vmatprep.subr.bf16.mxu0 %v3393
        %3599 = vmatpush1.bf16.msra.mxu0 %v3392
        %3600 = vmatprep.subr.bf16.mxu0 %v3397
        %3601 = vmatpush1.bf16.msra.mxu0 %v3396
        %3602 = vmatprep.subr.bf16.mxu0 %v3401
        %3603 = vmatpush1.bf16.msra.mxu0 %v3400
        %3604 = vmatprep.subr.bf16.mxu0 %v3405
        %3605 = vmatpush1.bf16.msra.mxu0 %v3404
        %3606 = vmatprep.mubr.bf16.mxu0 %v2545
        %3607 = vmatmul.mubr.bf16.gmra.mrb[0].mxu0 %v2544
        %v3608 = vpop.f32.mrb[0].mxu0
        %v3609 = vadd.f32 %v3116, %v3608
        %v3610 = vpop.f32.mrb[0].mxu0
        %v3611 = vadd.f32 %v3118, %v3610
        %v3612 = vpop.f32.mrb[0].mxu0
        %v3613 = vadd.f32 %v3120, %v3612
        %v3614 = vpop.f32.mrb[0].mxu0
        %v3615 = vadd.f32 %v3122, %v3614
        %3616 = vdwg.mxu0
        %3617 = vmatprep.subr.bf16.mxu0 %v3409
        %3618 = vmatpush1.bf16.msra.mxu0 %v3408
        %3619 = vmatprep.subr.bf16.mxu0 %v3413
        %3620 = vmatpush1.bf16.msra.mxu0 %v3412
        %3621 = vmatprep.subr.bf16.mxu0 0
        %3622 = vmatpush1.bf16.msra.mxu0 0
        %3623 = vmatprep.subr.bf16.mxu0 0
        %3624 = vmatpush1.bf16.msra.mxu0 0
        %3625 = vmatprep.subr.bf16.mxu0 0
        %3626 = vmatpush1.bf16.msra.mxu0 0
        %3627 = vmatprep.subr.bf16.mxu0 0
        %3628 = vmatpush1.bf16.msra.mxu0 0
        %3629 = vmatprep.subr.bf16.mxu0 0
        %3630 = vmatpush1.bf16.msra.mxu0 0
        %3631 = vmatprep.subr.bf16.mxu0 0
        %3632 = vmatpush1.bf16.msra.mxu0 0
        %3633 = vmatprep.subr.bf16.mxu0 0
        %3634 = vmatpush1.bf16.msra.mxu0 0
        %3635 = vmatprep.subr.bf16.mxu0 0
        %3636 = vmatpush1.bf16.msra.mxu0 0
        %3637 = vmatprep.subr.bf16.mxu0 0
        %3638 = vmatpush1.bf16.msra.mxu0 0
        %3639 = vmatprep.subr.bf16.mxu0 0
        %3640 = vmatpush1.bf16.msra.mxu0 0
        %3641 = vmatprep.subr.bf16.mxu0 0
        %3642 = vmatpush1.bf16.msra.mxu0 0
        %3643 = vmatprep.subr.bf16.mxu0 0
        %3644 = vmatpush1.bf16.msra.mxu0 0
        %3645 = vmatprep.subr.bf16.mxu0 0
        %3646 = vmatpush1.bf16.msra.mxu0 0
        %3647 = vmatprep.subr.bf16.mxu0 0
        %3648 = vmatpush1.bf16.msra.mxu0 0
        %3649 = vmatprep.mubr.bf16.mxu0 0
        %3650 = vmatmul.mubr.bf16.gmra.mrb[0].mxu0 %v3486
        %v3651 = vpop.f32.mrb[0].mxu0
        %v3652 = vadd.f32 %v3609, %v3651
        %v3653 = vpop.f32.mrb[0].mxu0
        %v3654 = vadd.f32 %v3611, %v3653
        %v3655 = vpop.f32.mrb[0].mxu0
        %v3656 = vadd.f32 %v3613, %v3655
        %v3657 = vpop.f32.mrb[0].mxu0
        %v3658 = vadd.f32 %v3615, %v3657
        %3659 = vdwg.mxu0
        %v3660 = vld [vmem:[#allocation3] sm:$0xee]
        %v3661 = vld [vmem:[#allocation3 + $0x8] sm:$0xe]
        %s3662 = scalar_lea.vmem %s3, 1152
        %v3663 = vld [vmem:[%s3662] sm:$0xff]
        %v3664 = vld [vmem:[%s3662 + $0x8] sm:$0xff]
        %v3665 = vld [vmem:[%s3662 + $0x10] sm:$0xff]
        %v3666 = vld [vmem:[%s3662 + $0x18] sm:$0xff]
        %v3667 = vld [vmem:[%s3662 + $0x20] sm:$0xff]
        %v3668 = vld [vmem:[%s3662 + $0x28] sm:$0xff]
        %v3669 = vld [vmem:[%s3662 + $0x30] sm:$0xff]
        %v3670 = vld [vmem:[%s3662 + $0x38] sm:$0xff]
        %v3671 = vld [vmem:[%s3662 + $0x40] sm:$0xff]
        %v3672 = vld [vmem:[%s3662 + $0x48] sm:$0xff]
        %v3673 = vld [vmem:[%s3662 + $0x50] sm:$0xff]
        %v3674 = vld [vmem:[%s3662 + $0x58] sm:$0xff]
        %v3675 = vld [vmem:[%s3662 + $0x60] sm:$0xff]
        %v3676 = vld [vmem:[%s3662 + $0x68] sm:$0xff]
        %v3677 = vld [vmem:[%s3662 + $0x70] sm:$0xff]
        %v3678 = vld [vmem:[%s3662 + $0x78] sm:$0xff]
        %v3679 = vld [vmem:[%s3662 + $0x80] sm:$0xff]
        %v3680 = vld [vmem:[%s3662 + $0x88] sm:$0xff]
        %v3681 = vld [vmem:[%s3662 + $0x90] sm:$0xff]
        %v3682 = vld [vmem:[%s3662 + $0x98] sm:$0xff]
        %v3683 = vld [vmem:[%s3662 + $0xa0] sm:$0xff]
        %v3684 = vld [vmem:[%s3662 + $0xa8] sm:$0xff]
        %v3685 = vld [vmem:[%s3662 + $0xb0] sm:$0xff]
        %v3686 = vld [vmem:[%s3662 + $0xb8] sm:$0xff]
        %v3687 = vld [vmem:[%s3662 + $0xc0] sm:$0xff]
        %v3688 = vld [vmem:[%s3662 + $0xc8] sm:$0xff]
        %v3689 = vld [vmem:[%s3662 + $0xd0] sm:$0xff]
        %v3690 = vld [vmem:[%s3662 + $0xd8] sm:$0xff]
        %v3691 = vld [vmem:[%s3662 + $0xe0] sm:$0xff]
        %v3692 = vld [vmem:[%s3662 + $0xe8] sm:$0xff]
        %v3693 = vld [vmem:[%s3662 + $0xf0] sm:$0xff]
        %v3694 = vld [vmem:[%s3662 + $0xf8] sm:$0xff]
        %v3695 = vld [vmem:[%s3662 + $0x100] sm:$0xff]
        %v3696 = vld [vmem:[%s3662 + $0x108] sm:$0xff]
        %v3697 = vld [vmem:[%s3662 + $0x110] sm:$0xff]
        %v3698 = vld [vmem:[%s3662 + $0x118] sm:$0xff]
        %v3699 = vld [vmem:[%s3662 + $0x120] sm:$0xff]
        %v3700 = vld [vmem:[%s3662 + $0x128] sm:$0xff]
        %v3701 = vld [vmem:[%s3662 + $0x130] sm:$0xff]
        %v3702 = vld [vmem:[%s3662 + $0x138] sm:$0xff]
        %v3703 = vld [vmem:[%s3662 + $0x140] sm:$0xff]
        %v3704 = vld [vmem:[%s3662 + $0x148] sm:$0xff]
        %v3705 = vld [vmem:[%s3662 + $0x150] sm:$0xff]
        %v3706 = vld [vmem:[%s3662 + $0x158] sm:$0xff]
        %v3707 = vld [vmem:[%s3662 + $0x160] sm:$0xff]
        %v3708 = vld [vmem:[%s3662 + $0x168] sm:$0xff]
        %v3709 = vld [vmem:[%s3662 + $0x170] sm:$0xff]
        %v3710 = vld [vmem:[%s3662 + $0x178] sm:$0xff]
        %v3711 = vld [vmem:[%s3662 + $0x180] sm:$0xff]
        %v3712 = vld [vmem:[%s3662 + $0x188] sm:$0xff]
        %v3713 = vld [vmem:[%s3662 + $0x190] sm:$0xff]
        %v3714 = vld [vmem:[%s3662 + $0x198] sm:$0xff]
        %v3715 = vld [vmem:[%s3662 + $0x1a0] sm:$0xff]
        %v3716 = vld [vmem:[%s3662 + $0x1a8] sm:$0xff]
        %v3717 = vld [vmem:[%s3662 + $0x1b0] sm:$0xff]
        %v3718 = vld [vmem:[%s3662 + $0x1b8] sm:$0xff]
        %v3719 = vld [vmem:[%s3662 + $0x1c0] sm:$0xff]
        %v3720 = vld [vmem:[%s3662 + $0x1c8] sm:$0xff]
        %v3721 = vld [vmem:[%s3662 + $0x1d0] sm:$0xff]
        %v3722 = vld [vmem:[%s3662 + $0x1d8] sm:$0xff]
        %v3723 = vld [vmem:[%s3662 + $0x1e0] sm:$0xff]
        %v3724 = vld [vmem:[%s3662 + $0x1e8] sm:$0xff]
        %v3725 = vld [vmem:[%s3662 + $0x1f0] sm:$0xff]
        %v3726 = vld [vmem:[%s3662 + $0x1f8] sm:$0xff]
        %v3727 = vld [vmem:[%s3662 + $0x200] sm:$0xff]
        %v3728 = vld [vmem:[%s3662 + $0x208] sm:$0xff]
        %v3729 = vld [vmem:[%s3662 + $0x210] sm:$0xff]
        %v3730 = vld [vmem:[%s3662 + $0x218] sm:$0xff]
        %v3731 = vld [vmem:[%s3662 + $0x220] sm:$0xff]
        %v3732 = vld [vmem:[%s3662 + $0x228] sm:$0xff]
        %v3733 = vld [vmem:[%s3662 + $0x230] sm:$0xff]
        %v3734 = vld [vmem:[%s3662 + $0x238] sm:$0xff]
        %v3737 = vunpack.c.l.b16 %v3660
        %v3738 = vunpack.c.h.b16 %v3660
        %v3739 = vunpack.c.l.b16 %v3661
        %v3740 = vpack.c.b16 %v2538, %v3737
        %v3741 = vpack.c.b16 %v2539, %v3738
        %v3742 = vpack.c.b16 %v2540, %v3739
        %v3743 = vrot.slane %v3740, 1
        %v3744 = vrot.slane %v2547, 1
        %v3745 = vsel %vm1259, %v3743, %v3744
        %v3746 = vrot.slane %v3741, 1
        %v3747 = vrot.slane %v2548, 1
        %v3748 = vsel %vm1259, %v3746, %v3747
        %v3749 = vrot.slane %v3742, 1
        %v3750 = vrot.slane %v2549, 1
        %v3751 = vsel %vm1259, %v3749, %v3750
        %v3826 = vunpack.c.l.b16 %v3663
        %v3827 = vunpack.c.h.b16 %v3663
        %v3828 = vunpack.c.l.b16 %v3664
        %v3829 = vunpack.c.h.b16 %v3664
        %v3830 = vunpack.c.l.b16 %v3665
        %v3831 = vunpack.c.h.b16 %v3665
        %v3832 = vunpack.c.l.b16 %v3666
        %v3833 = vunpack.c.h.b16 %v3666
        %v3834 = vunpack.c.l.b16 %v3667
        %v3835 = vunpack.c.h.b16 %v3667
        %v3836 = vunpack.c.l.b16 %v3668
        %v3837 = vunpack.c.h.b16 %v3668
        %v3838 = vunpack.c.l.b16 %v3669
        %v3839 = vunpack.c.h.b16 %v3669
        %v3840 = vunpack.c.l.b16 %v3670
        %v3841 = vunpack.c.h.b16 %v3670
        %v3842 = vunpack.c.l.b16 %v3671
        %v3843 = vunpack.c.h.b16 %v3671
        %v3844 = vunpack.c.l.b16 %v3672
        %v3845 = vunpack.c.h.b16 %v3672
        %v3846 = vunpack.c.l.b16 %v3673
        %v3847 = vunpack.c.h.b16 %v3673
        %v3848 = vunpack.c.l.b16 %v3674
        %v3849 = vunpack.c.h.b16 %v3674
        %v3850 = vunpack.c.l.b16 %v3675
        %v3851 = vunpack.c.h.b16 %v3675
        %v3852 = vunpack.c.l.b16 %v3676
        %v3853 = vunpack.c.h.b16 %v3676
        %v3854 = vunpack.c.l.b16 %v3677
        %v3855 = vunpack.c.h.b16 %v3677
        %v3856 = vunpack.c.l.b16 %v3678
        %v3857 = vunpack.c.h.b16 %v3678
        %v3858 = vunpack.c.l.b16 %v3679
        %v3859 = vunpack.c.h.b16 %v3679
        %v3860 = vunpack.c.l.b16 %v3680
        %v3861 = vunpack.c.h.b16 %v3680
        %v3862 = vunpack.c.l.b16 %v3681
        %v3863 = vunpack.c.h.b16 %v3681
        %v3864 = vunpack.c.l.b16 %v3682
        %v3865 = vunpack.c.h.b16 %v3682
        %v3866 = vunpack.c.l.b16 %v3683
        %v3867 = vunpack.c.h.b16 %v3683
        %v3868 = vunpack.c.l.b16 %v3684
        %v3869 = vunpack.c.h.b16 %v3684
        %v3870 = vunpack.c.l.b16 %v3685
        %v3871 = vunpack.c.h.b16 %v3685
        %v3872 = vunpack.c.l.b16 %v3686
        %v3873 = vunpack.c.h.b16 %v3686
        %v3874 = vunpack.c.l.b16 %v3687
        %v3875 = vunpack.c.h.b16 %v3687
        %v3876 = vunpack.c.l.b16 %v3688
        %v3877 = vunpack.c.h.b16 %v3688
        %v3878 = vunpack.c.l.b16 %v3689
        %v3879 = vunpack.c.h.b16 %v3689
        %v3880 = vunpack.c.l.b16 %v3690
        %v3881 = vunpack.c.h.b16 %v3690
        %v3882 = vunpack.c.l.b16 %v3691
        %v3883 = vunpack.c.h.b16 %v3691
        %v3884 = vunpack.c.l.b16 %v3692
        %v3885 = vunpack.c.h.b16 %v3692
        %v3886 = vunpack.c.l.b16 %v3693
        %v3887 = vunpack.c.h.b16 %v3693
        %v3888 = vunpack.c.l.b16 %v3694
        %v3889 = vunpack.c.h.b16 %v3694
        %v3890 = vunpack.c.l.b16 %v3695
        %v3891 = vunpack.c.h.b16 %v3695
        %v3892 = vunpack.c.l.b16 %v3696
        %v3893 = vunpack.c.h.b16 %v3696
        %v3894 = vunpack.c.l.b16 %v3697
        %v3895 = vunpack.c.h.b16 %v3697
        %v3896 = vunpack.c.l.b16 %v3698
        %v3897 = vunpack.c.h.b16 %v3698
        %v3898 = vunpack.c.l.b16 %v3699
        %v3899 = vunpack.c.h.b16 %v3699
        %v3900 = vunpack.c.l.b16 %v3700
        %v3901 = vunpack.c.h.b16 %v3700
        %v3902 = vunpack.c.l.b16 %v3701
        %v3903 = vunpack.c.h.b16 %v3701
        %v3904 = vunpack.c.l.b16 %v3702
        %v3905 = vunpack.c.h.b16 %v3702
        %v3906 = vunpack.c.l.b16 %v3703
        %v3907 = vunpack.c.h.b16 %v3703
        %v3908 = vunpack.c.l.b16 %v3704
        %v3909 = vunpack.c.h.b16 %v3704
        %v3910 = vunpack.c.l.b16 %v3705
        %v3911 = vunpack.c.h.b16 %v3705
        %v3912 = vunpack.c.l.b16 %v3706
        %v3913 = vunpack.c.h.b16 %v3706
        %v3914 = vunpack.c.l.b16 %v3707
        %v3915 = vunpack.c.h.b16 %v3707
        %v3916 = vunpack.c.l.b16 %v3708
        %v3917 = vunpack.c.h.b16 %v3708
        %v3918 = vunpack.c.l.b16 %v3709
        %v3919 = vunpack.c.h.b16 %v3709
        %v3920 = vunpack.c.l.b16 %v3710
        %v3921 = vunpack.c.h.b16 %v3710
        %v3922 = vunpack.c.l.b16 %v3711
        %v3923 = vunpack.c.h.b16 %v3711
        %v3924 = vunpack.c.l.b16 %v3712
        %v3925 = vunpack.c.h.b16 %v3712
        %v3926 = vunpack.c.l.b16 %v3713
        %v3927 = vunpack.c.h.b16 %v3713
        %v3928 = vunpack.c.l.b16 %v3714
        %v3929 = vunpack.c.h.b16 %v3714
        %v3930 = vunpack.c.l.b16 %v3715
        %v3931 = vunpack.c.h.b16 %v3715
        %v3932 = vunpack.c.l.b16 %v3716
        %v3933 = vunpack.c.h.b16 %v3716
        %v3934 = vunpack.c.l.b16 %v3717
        %v3935 = vunpack.c.h.b16 %v3717
        %v3936 = vunpack.c.l.b16 %v3718
        %v3937 = vunpack.c.h.b16 %v3718
        %v3938 = vunpack.c.l.b16 %v3719
        %v3939 = vunpack.c.h.b16 %v3719
        %v3940 = vunpack.c.l.b16 %v3720
        %v3941 = vunpack.c.h.b16 %v3720
        %v3942 = vunpack.c.l.b16 %v3721
        %v3943 = vunpack.c.h.b16 %v3721
        %v3944 = vunpack.c.l.b16 %v3722
        %v3945 = vunpack.c.h.b16 %v3722
        %v3946 = vunpack.c.l.b16 %v3723
        %v3947 = vunpack.c.h.b16 %v3723
        %v3948 = vunpack.c.l.b16 %v3724
        %v3949 = vunpack.c.h.b16 %v3724
        %v3950 = vunpack.c.l.b16 %v3725
        %v3951 = vunpack.c.h.b16 %v3725
        %v3952 = vunpack.c.l.b16 %v3726
        %v3953 = vunpack.c.h.b16 %v3726
        %v3954 = vunpack.c.l.b16 %v3727
        %v3955 = vunpack.c.h.b16 %v3727
        %v3956 = vunpack.c.l.b16 %v3728
        %v3957 = vunpack.c.h.b16 %v3728
        %v3958 = vunpack.c.l.b16 %v3729
        %v3959 = vunpack.c.h.b16 %v3729
        %v3960 = vunpack.c.l.b16 %v3730
        %v3961 = vunpack.c.h.b16 %v3730
        %v3962 = vunpack.c.l.b16 %v3731
        %v3963 = vunpack.c.h.b16 %v3731
        %v3964 = vunpack.c.l.b16 %v3732
        %v3965 = vunpack.c.h.b16 %v3732
        %v3966 = vunpack.c.l.b16 %v3733
        %v3967 = vunpack.c.h.b16 %v3733
        %v3968 = vunpack.c.l.b16 %v3734
        %v3969 = vunpack.c.h.b16 %v3734
        %v3970 = vpack.c.b16 %v3830, %v3826
        %v3971 = vpack.c.b16 %v3831, %v3827
        %v3972 = vpack.c.b16 %v3832, %v3828
        %v3973 = vpack.c.b16 %v3833, %v3829
        %v3974 = vpack.c.b16 %v3838, %v3834
        %v3975 = vpack.c.b16 %v3839, %v3835
        %v3976 = vpack.c.b16 %v3840, %v3836
        %v3977 = vpack.c.b16 %v3841, %v3837
        %v3978 = vpack.c.b16 %v3846, %v3842
        %v3979 = vpack.c.b16 %v3847, %v3843
        %v3980 = vpack.c.b16 %v3848, %v3844
        %v3981 = vpack.c.b16 %v3849, %v3845
        %v3982 = vpack.c.b16 %v3854, %v3850
        %v3983 = vpack.c.b16 %v3855, %v3851
        %v3984 = vpack.c.b16 %v3856, %v3852
        %v3985 = vpack.c.b16 %v3857, %v3853
        %v3986 = vpack.c.b16 %v3862, %v3858
        %v3987 = vpack.c.b16 %v3863, %v3859
        %v3988 = vpack.c.b16 %v3864, %v3860
        %v3989 = vpack.c.b16 %v3865, %v3861
        %v3990 = vpack.c.b16 %v3870, %v3866
        %v3991 = vpack.c.b16 %v3871, %v3867
        %v3992 = vpack.c.b16 %v3872, %v3868
        %v3993 = vpack.c.b16 %v3873, %v3869
        %v3994 = vpack.c.b16 %v3878, %v3874
        %v3995 = vpack.c.b16 %v3879, %v3875
        %v3996 = vpack.c.b16 %v3880, %v3876
        %v3997 = vpack.c.b16 %v3881, %v3877
        %v3998 = vpack.c.b16 %v3886, %v3882
        %v3999 = vpack.c.b16 %v3887, %v3883
        %v4000 = vpack.c.b16 %v3888, %v3884
        %v4001 = vpack.c.b16 %v3889, %v3885
        %v4002 = vpack.c.b16 %v3894, %v3890
        %v4003 = vpack.c.b16 %v3895, %v3891
        %v4004 = vpack.c.b16 %v3896, %v3892
        %v4005 = vpack.c.b16 %v3897, %v3893
        %v4006 = vpack.c.b16 %v3902, %v3898
        %v4007 = vpack.c.b16 %v3903, %v3899
        %v4008 = vpack.c.b16 %v3904, %v3900
        %v4009 = vpack.c.b16 %v3905, %v3901
        %v4010 = vpack.c.b16 %v3910, %v3906
        %v4011 = vpack.c.b16 %v3911, %v3907
        %v4012 = vpack.c.b16 %v3912, %v3908
        %v4013 = vpack.c.b16 %v3913, %v3909
        %v4014 = vpack.c.b16 %v3918, %v3914
        %v4015 = vpack.c.b16 %v3919, %v3915
        %v4016 = vpack.c.b16 %v3920, %v3916
        %v4017 = vpack.c.b16 %v3921, %v3917
        %v4018 = vpack.c.b16 %v3926, %v3922
        %v4019 = vpack.c.b16 %v3927, %v3923
        %v4020 = vpack.c.b16 %v3928, %v3924
        %v4021 = vpack.c.b16 %v3929, %v3925
        %v4022 = vpack.c.b16 %v3934, %v3930
        %v4023 = vpack.c.b16 %v3935, %v3931
        %v4024 = vpack.c.b16 %v3936, %v3932
        %v4025 = vpack.c.b16 %v3937, %v3933
        %v4026 = vpack.c.b16 %v3942, %v3938
        %v4027 = vpack.c.b16 %v3943, %v3939
        %v4028 = vpack.c.b16 %v3944, %v3940
        %v4029 = vpack.c.b16 %v3945, %v3941
        %v4030 = vpack.c.b16 %v3950, %v3946
        %v4031 = vpack.c.b16 %v3951, %v3947
        %v4032 = vpack.c.b16 %v3952, %v3948
        %v4033 = vpack.c.b16 %v3953, %v3949
        %v4034 = vpack.c.b16 %v3958, %v3954
        %v4035 = vpack.c.b16 %v3959, %v3955
        %v4036 = vpack.c.b16 %v3960, %v3956
        %v4037 = vpack.c.b16 %v3961, %v3957
        %v4038 = vpack.c.b16 %v3966, %v3962
        %v4039 = vpack.c.b16 %v3967, %v3963
        %v4040 = vpack.c.b16 %v3968, %v3964
        %v4041 = vpack.c.b16 %v3969, %v3965
        %v4115 = vsel %vm2948, %v3751, 0
        %4117 = vmatprep.subr.bf16.mxu0 %v3971
        %4118 = vmatpush1.bf16.msra.mxu0 %v3970
        %4119 = vmatprep.subr.bf16.mxu0 %v3975
        %4120 = vmatpush1.bf16.msra.mxu0 %v3974
        %4121 = vmatprep.subr.bf16.mxu0 %v3979
        %4122 = vmatpush1.bf16.msra.mxu0 %v3978
        %4123 = vmatprep.subr.bf16.mxu0 %v3983
        %4124 = vmatpush1.bf16.msra.mxu0 %v3982
        %4125 = vmatprep.subr.bf16.mxu0 %v3987
        %4126 = vmatpush1.bf16.msra.mxu0 %v3986
        %4127 = vmatprep.subr.bf16.mxu0 %v3991
        %4128 = vmatpush1.bf16.msra.mxu0 %v3990
        %4129 = vmatprep.subr.bf16.mxu0 %v3995
        %4130 = vmatpush1.bf16.msra.mxu0 %v3994
        %4131 = vmatprep.subr.bf16.mxu0 %v3999
        %4132 = vmatpush1.bf16.msra.mxu0 %v3998
        %4133 = vmatprep.subr.bf16.mxu0 %v4003
        %4134 = vmatpush1.bf16.msra.mxu0 %v4002
        %4135 = vmatprep.subr.bf16.mxu0 %v4007
        %4136 = vmatpush1.bf16.msra.mxu0 %v4006
        %4137 = vmatprep.subr.bf16.mxu0 %v4011
        %4138 = vmatpush1.bf16.msra.mxu0 %v4010
        %4139 = vmatprep.subr.bf16.mxu0 %v4015
        %4140 = vmatpush1.bf16.msra.mxu0 %v4014
        %4141 = vmatprep.subr.bf16.mxu0 %v4019
        %4142 = vmatpush1.bf16.msra.mxu0 %v4018
        %4143 = vmatprep.subr.bf16.mxu0 %v4023
        %4144 = vmatpush1.bf16.msra.mxu0 %v4022
        %4145 = vmatprep.subr.bf16.mxu0 %v4027
        %4146 = vmatpush1.bf16.msra.mxu0 %v4026
        %4147 = vmatprep.subr.bf16.mxu0 %v4031
        %4148 = vmatpush1.bf16.msra.mxu0 %v4030
        %4149 = vmatprep.mubr.bf16.mxu0 %v3748
        %4150 = vmatmul.mubr.bf16.gmra.mrb[0].mxu0 %v3745
        %v4151 = vpop.f32.mrb[0].mxu0
        %v4152 = vadd.f32 0.0, %v4151
        %v4153 = vpop.f32.mrb[0].mxu0
        %v4154 = vadd.f32 0.0, %v4153
        %v4155 = vpop.f32.mrb[0].mxu0
        %v4156 = vadd.f32 0.0, %v4155
        %v4157 = vpop.f32.mrb[0].mxu0
        %v4158 = vadd.f32 0.0, %v4157
        %4159 = vdwg.mxu0
        %4160 = vmatprep.subr.bf16.mxu0 %v4035
        %4161 = vmatpush1.bf16.msra.mxu0 %v4034
        %4162 = vmatprep.subr.bf16.mxu0 %v4039
        %4163 = vmatpush1.bf16.msra.mxu0 %v4038
        %4164 = vmatprep.subr.bf16.mxu0 0
        %4165 = vmatpush1.bf16.msra.mxu0 0
        %4166 = vmatprep.subr.bf16.mxu0 0
        %4167 = vmatpush1.bf16.msra.mxu0 0
        %4168 = vmatprep.subr.bf16.mxu0 0
        %4169 = vmatpush1.bf16.msra.mxu0 0
        %4170 = vmatprep.subr.bf16.mxu0 0
        %4171 = vmatpush1.bf16.msra.mxu0 0
        %4172 = vmatprep.subr.bf16.mxu0 0
        %4173 = vmatpush1.bf16.msra.mxu0 0
        %4174 = vmatprep.subr.bf16.mxu0 0
        %4175 = vmatpush1.bf16.msra.mxu0 0
        %4176 = vmatprep.subr.bf16.mxu0 0
        %4177 = vmatpush1.bf16.msra.mxu0 0
        %4178 = vmatprep.subr.bf16.mxu0 0
        %4179 = vmatpush1.bf16.msra.mxu0 0
        %4180 = vmatprep.subr.bf16.mxu0 0
        %4181 = vmatpush1.bf16.msra.mxu0 0
        %4182 = vmatprep.subr.bf16.mxu0 0
        %4183 = vmatpush1.bf16.msra.mxu0 0
        %4184 = vmatprep.subr.bf16.mxu0 0
        %4185 = vmatpush1.bf16.msra.mxu0 0
        %4186 = vmatprep.subr.bf16.mxu0 0
        %4187 = vmatpush1.bf16.msra.mxu0 0
        %4188 = vmatprep.subr.bf16.mxu0 0
        %4189 = vmatpush1.bf16.msra.mxu0 0
        %4190 = vmatprep.subr.bf16.mxu0 0
        %4191 = vmatpush1.bf16.msra.mxu0 0
        %4192 = vmatprep.mubr.bf16.mxu0 0
        %4193 = vmatmul.mubr.bf16.gmra.mrb[0].mxu0 %v4115
        %v4194 = vpop.f32.mrb[0].mxu0
        %v4195 = vadd.f32 %v4152, %v4194
        %v4196 = vpop.f32.mrb[0].mxu0
        %v4197 = vadd.f32 %v4154, %v4196
        %v4198 = vpop.f32.mrb[0].mxu0
        %v4199 = vadd.f32 %v4156, %v4198
        %v4200 = vpop.f32.mrb[0].mxu0
        %v4201 = vadd.f32 %v4158, %v4200
        %4202 = vdwg.mxu0
        %4203 = vmatprep.subr.bf16.mxu0 %v3973
        %4204 = vmatpush1.bf16.msra.mxu0 %v3972
        %4205 = vmatprep.subr.bf16.mxu0 %v3977
        %4206 = vmatpush1.bf16.msra.mxu0 %v3976
        %4207 = vmatprep.subr.bf16.mxu0 %v3981
        %4208 = vmatpush1.bf16.msra.mxu0 %v3980
        %4209 = vmatprep.subr.bf16.mxu0 %v3985
        %4210 = vmatpush1.bf16.msra.mxu0 %v3984
        %4211 = vmatprep.subr.bf16.mxu0 %v3989
        %4212 = vmatpush1.bf16.msra.mxu0 %v3988
        %4213 = vmatprep.subr.bf16.mxu0 %v3993
        %4214 = vmatpush1.bf16.msra.mxu0 %v3992
        %4215 = vmatprep.subr.bf16.mxu0 %v3997
        %4216 = vmatpush1.bf16.msra.mxu0 %v3996
        %4217 = vmatprep.subr.bf16.mxu0 %v4001
        %4218 = vmatpush1.bf16.msra.mxu0 %v4000
        %4219 = vmatprep.subr.bf16.mxu0 %v4005
        %4220 = vmatpush1.bf16.msra.mxu0 %v4004
        %4221 = vmatprep.subr.bf16.mxu0 %v4009
        %4222 = vmatpush1.bf16.msra.mxu0 %v4008
        %4223 = vmatprep.subr.bf16.mxu0 %v4013
        %4224 = vmatpush1.bf16.msra.mxu0 %v4012
        %4225 = vmatprep.subr.bf16.mxu0 %v4017
        %4226 = vmatpush1.bf16.msra.mxu0 %v4016
        %4227 = vmatprep.subr.bf16.mxu0 %v4021
        %4228 = vmatpush1.bf16.msra.mxu0 %v4020
        %4229 = vmatprep.subr.bf16.mxu0 %v4025
        %4230 = vmatpush1.bf16.msra.mxu0 %v4024
        %4231 = vmatprep.subr.bf16.mxu0 %v4029
        %4232 = vmatpush1.bf16.msra.mxu0 %v4028
        %4233 = vmatprep.subr.bf16.mxu0 %v4033
        %4234 = vmatpush1.bf16.msra.mxu0 %v4032
        %4235 = vmatprep.mubr.bf16.mxu0 %v3748
        %4236 = vmatmul.mubr.bf16.gmra.mrb[0].mxu0 %v3745
        %v4237 = vpop.f32.mrb[0].mxu0
        %v4238 = vadd.f32 0.0, %v4237
        %v4239 = vpop.f32.mrb[0].mxu0
        %v4240 = vadd.f32 0.0, %v4239
        %v4241 = vpop.f32.mrb[0].mxu0
        %v4242 = vadd.f32 0.0, %v4241
        %v4243 = vpop.f32.mrb[0].mxu0
        %v4244 = vadd.f32 0.0, %v4243
        %4245 = vdwg.mxu0
        %4246 = vmatprep.subr.bf16.mxu0 %v4037
        %4247 = vmatpush1.bf16.msra.mxu0 %v4036
        %4248 = vmatprep.subr.bf16.mxu0 %v4041
        %4249 = vmatpush1.bf16.msra.mxu0 %v4040
        %4250 = vmatprep.subr.bf16.mxu0 0
        %4251 = vmatpush1.bf16.msra.mxu0 0
        %4252 = vmatprep.subr.bf16.mxu0 0
        %4253 = vmatpush1.bf16.msra.mxu0 0
        %4254 = vmatprep.subr.bf16.mxu0 0
        %4255 = vmatpush1.bf16.msra.mxu0 0
        %4256 = vmatprep.subr.bf16.mxu0 0
        %4257 = vmatpush1.bf16.msra.mxu0 0
        %4258 = vmatprep.subr.bf16.mxu0 0
        %4259 = vmatpush1.bf16.msra.mxu0 0
        %4260 = vmatprep.subr.bf16.mxu0 0
        %4261 = vmatpush1.bf16.msra.mxu0 0
        %4262 = vmatprep.subr.bf16.mxu0 0
        %4263 = vmatpush1.bf16.msra.mxu0 0
        %4264 = vmatprep.subr.bf16.mxu0 0
        %4265 = vmatpush1.bf16.msra.mxu0 0
        %4266 = vmatprep.subr.bf16.mxu0 0
        %4267 = vmatpush1.bf16.msra.mxu0 0
        %4268 = vmatprep.subr.bf16.mxu0 0
        %4269 = vmatpush1.bf16.msra.mxu0 0
        %4270 = vmatprep.subr.bf16.mxu0 0
        %4271 = vmatpush1.bf16.msra.mxu0 0
        %4272 = vmatprep.subr.bf16.mxu0 0
        %4273 = vmatpush1.bf16.msra.mxu0 0
        %4274 = vmatprep.subr.bf16.mxu0 0
        %4275 = vmatpush1.bf16.msra.mxu0 0
        %4276 = vmatprep.subr.bf16.mxu0 0
        %4277 = vmatpush1.bf16.msra.mxu0 0
        %4278 = vmatprep.mubr.bf16.mxu0 0
        %4279 = vmatmul.mubr.bf16.gmra.mrb[0].mxu0 %v4115
        %v4280 = vpop.f32.mrb[0].mxu0
        %v4281 = vadd.f32 %v4238, %v4280
        %v4282 = vpop.f32.mrb[0].mxu0
        %v4283 = vadd.f32 %v4240, %v4282
        %v4284 = vpop.f32.mrb[0].mxu0
        %v4285 = vadd.f32 %v4242, %v4284
        %v4286 = vpop.f32.mrb[0].mxu0
        %v4287 = vadd.f32 %v4244, %v4286
        %4288 = vdwg.mxu0
        %v4289 = vadd.f32 %v3566, %v4195
        %v4290 = vadd.f32 %v3568, %v4197
        %v4291 = vadd.f32 %v3652, %v4281
        %v4292 = vadd.f32 %v3654, %v4283
        %v4293 = vadd.f32 %v3570, %v4199
        %v4294 = vadd.f32 %v3572, %v4201
        %v4295 = vadd.f32 %v3656, %v4285
        %v4296 = vadd.f32 %v3658, %v4287
        %v4305 = vcombine.low %v4289, %v4290
        %v4306 = vcombine.high %v4289, %v4290
        %v4307 = vcombine.low %v4291, %v4292
        %v4308 = vcombine.high %v4291, %v4292
        %v4310 = vunpack.c.l.s4 1983009808
        %v4311 = vunpack.c.0.s8 %v4310
        %v4312 = vlaneseq
        %v4313 = vshrl.u32 %v4312, 7
        %v4314 = vsub.s32 %v4311, %v4313
        %v4315 = vrot.slane %v4305, %v4314
        %v4317 = vunpack.c.l.s4 1983009808
        %v4318 = vunpack.c.0.s8 %v4317
        %v4319 = vlaneseq
        %v4320 = vshrl.u32 %v4319, 7
        %v4321 = vsub.s32 %v4318, %v4320
        %v4322 = vrot.slane %v4306, %v4321
        %v4324 = vunpack.c.l.s4 1983009808
        %v4325 = vunpack.c.0.s8 %v4324
        %v4326 = vlaneseq
        %v4327 = vshrl.u32 %v4326, 7
        %v4328 = vsub.s32 %v4325, %v4327
        %v4329 = vrot.slane %v4307, %v4328
        %v4331 = vunpack.c.l.s4 1983009808
        %v4332 = vunpack.c.0.s8 %v4331
        %v4333 = vlaneseq
        %v4334 = vshrl.u32 %v4333, 7
        %v4335 = vsub.s32 %v4332, %v4334
        %v4336 = vrot.slane %v4308, %v4335
        %v4337 = vcombine.low %v4315, %v4329
        %v4338 = vcombine.high %v4315, %v4329
        %v4339 = vcombine.low %v4322, %v4336
        %v4340 = vcombine.high %v4322, %v4336
        %v4341 = vcombine.low %v4293, %v4294
        %v4342 = vcombine.high %v4293, %v4294
        %v4343 = vcombine.low %v4295, %v4296
        %v4344 = vcombine.high %v4295, %v4296
        %v4346 = vunpack.c.l.s4 1983009808
        %v4347 = vunpack.c.0.s8 %v4346
        %v4348 = vlaneseq
        %v4349 = vshrl.u32 %v4348, 7
        %v4350 = vsub.s32 %v4347, %v4349
        %v4351 = vrot.slane %v4341, %v4350
        %v4353 = vunpack.c.l.s4 1983009808
        %v4354 = vunpack.c.0.s8 %v4353
        %v4355 = vlaneseq
        %v4356 = vshrl.u32 %v4355, 7
        %v4357 = vsub.s32 %v4354, %v4356
        %v4358 = vrot.slane %v4342, %v4357
        %v4360 = vunpack.c.l.s4 1983009808
        %v4361 = vunpack.c.0.s8 %v4360
        %v4362 = vlaneseq
        %v4363 = vshrl.u32 %v4362, 7
        %v4364 = vsub.s32 %v4361, %v4363
        %v4365 = vrot.slane %v4343, %v4364
        %v4367 = vunpack.c.l.s4 1983009808
        %v4368 = vunpack.c.0.s8 %v4367
        %v4369 = vlaneseq
        %v4370 = vshrl.u32 %v4369, 7
        %v4371 = vsub.s32 %v4368, %v4370
        %v4372 = vrot.slane %v4344, %v4371
        %v4373 = vcombine.low %v4351, %v4365
        %v4374 = vcombine.high %v4351, %v4365
        %v4375 = vcombine.low %v4358, %v4372
        %v4376 = vcombine.high %v4358, %v4372
        %v4385 = vrot.slane %v4337, 7
        %v4386 = vrot.slane %v4385, 2
        %v4387 = vrot.slane %v4338, 7
        %v4388 = vrot.slane %v4387, 2
        %v4389 = vrot.slane %v4339, 7
        %v4390 = vrot.slane %v4389, 2
        %v4391 = vrot.slane %v4340, 7
        %v4392 = vrot.slane %v4391, 2
        %v4393 = vrot.slane %v4373, 7
        %v4394 = vrot.slane %v4393, 2
        %v4395 = vrot.slane %v4374, 7
        %v4396 = vrot.slane %v4395, 2
        %v4397 = vrot.slane %v4375, 7
        %v4398 = vrot.slane %v4397, 2
        %v4399 = vrot.slane %v4376, 7
        %v4400 = vrot.slane %v4399, 2
        %v4409 = vmax.f32 %v4337, %v4386
        %v4410 = vmax.f32 %v4338, %v4388
        %v4411 = vmax.f32 %v4339, %v4390
        %v4412 = vmax.f32 %v4340, %v4392
        %v4413 = vmax.f32 %v4373, %v4394
        %v4414 = vmax.f32 %v4374, %v4396
        %v4415 = vmax.f32 %v4375, %v4398
        %v4416 = vmax.f32 %v4376, %v4400
        %v4425 = vrot.slane %v4409, 4
        %v4426 = vrot.slane %v4410, 4
        %v4427 = vrot.slane %v4411, 4
        %v4428 = vrot.slane %v4412, 4
        %v4429 = vrot.slane %v4413, 4
        %v4430 = vrot.slane %v4414, 4
        %v4431 = vrot.slane %v4415, 4
        %v4432 = vrot.slane %v4416, 4
        %v4441 = vmax.f32 %v4409, %v4425
        %v4442 = vmax.f32 %v4410, %v4426
        %v4443 = vmax.f32 %v4411, %v4427
        %v4444 = vmax.f32 %v4412, %v4428
        %v4445 = vmax.f32 %v4413, %v4429
        %v4446 = vmax.f32 %v4414, %v4430
        %v4447 = vmax.f32 %v4415, %v4431
        %v4448 = vmax.f32 %v4416, %v4432
        %v4449 = vld [vmem:[%s4] sm:$0x3]
        %v4451 = vlaneseq
        %v4452 = vshrl.u32 %v4451, 7
        %v4453 = vsub.s32 0, %v4452
        %v4454 = vrot.slane %v4449, %v4453
        %v4455 = vlaneseq
        %v4456 = vshrl.u32 %v4455, 7
        %v4457 = vsub.s32 1, %v4456
        %v4458 = vrot.slane %v4449, %v4457
        %v4459 = vcombine.low %v4454, %v4458
        %v4460 = vcombine.high %v4454, %v4458
        %v4462 = vunpack.c.l.s4 1983009808
        %v4463 = vunpack.c.0.s8 %v4462
        %v4464 = vlaneseq
        %v4465 = vshrl.u32 %v4464, 7
        %v4466 = vsub.s32 %v4463, %v4465
        %v4467 = vrot.slane %v4459, %v4466
        %v4469 = vunpack.c.l.s4 1983009808
        %v4470 = vunpack.c.0.s8 %v4469
        %v4471 = vlaneseq
        %v4472 = vshrl.u32 %v4471, 7
        %v4473 = vsub.s32 %v4470, %v4472
        %v4474 = vrot.slane %v4460, %v4473
        %v4475 = vcombine.high %v4467, %v4467
        %v4476 = vcombine.high %v4474, %v4474
        %v4477 = vrot.slane %v4467, 1
        %v4478 = vrot.slane %v4475, 1
        %v4479 = vrot.slane %v4474, 1
        %v4480 = vrot.slane %v4476, 1
        %v4489 = vadd.f32 %v4441, %v4467
        %v4490 = vadd.f32 %v4442, %v4477
        %v4491 = vadd.f32 %v4443, %v4475
        %v4492 = vadd.f32 %v4444, %v4478
        %v4493 = vadd.f32 %v4445, %v4474
        %v4494 = vadd.f32 %v4446, %v4479
        %v4495 = vadd.f32 %v4447, %v4476
        %v4496 = vadd.f32 %v4448, %v4480
        %v4497 = vmax.f32 %v4489, 0.0
        %v4498 = vmax.f32 %v4490, 0.0
        %v4499 = vmax.f32 %v4491, 0.0
        %v4500 = vmax.f32 %v4492, 0.0
        %v4501 = vmax.f32 %v4493, 0.0
        %v4502 = vmax.f32 %v4494, 0.0
        %v4503 = vmax.f32 %v4495, 0.0
        %v4504 = vmax.f32 %v4496, 0.0
        %v4513 = vlaneseq
        %v4514 = vshrl.u32 %v4513, 7
        %v4515 = vsub.s32 0, %v4514
        %v4516 = vrot.slane %v4497, %v4515
        %v4517 = vlaneseq
        %v4518 = vshrl.u32 %v4517, 7
        %v4519 = vsub.s32 2, %v4518
        %v4520 = vrot.slane %v4497, %v4519
        %v4521 = vlaneseq
        %v4522 = vshrl.u32 %v4521, 7
        %v4523 = vsub.s32 0, %v4522
        %v4524 = vrot.slane %v4498, %v4523
        %v4525 = vlaneseq
        %v4526 = vshrl.u32 %v4525, 7
        %v4527 = vsub.s32 2, %v4526
        %v4528 = vrot.slane %v4498, %v4527
        %v4529 = vlaneseq
        %v4530 = vshrl.u32 %v4529, 7
        %v4531 = vsub.s32 0, %v4530
        %v4532 = vrot.slane %v4499, %v4531
        %v4533 = vlaneseq
        %v4534 = vshrl.u32 %v4533, 7
        %v4535 = vsub.s32 2, %v4534
        %v4536 = vrot.slane %v4499, %v4535
        %v4537 = vlaneseq
        %v4538 = vshrl.u32 %v4537, 7
        %v4539 = vsub.s32 0, %v4538
        %v4540 = vrot.slane %v4500, %v4539
        %v4541 = vlaneseq
        %v4542 = vshrl.u32 %v4541, 7
        %v4543 = vsub.s32 2, %v4542
        %v4544 = vrot.slane %v4500, %v4543
        %v4545 = vlaneseq
        %v4546 = vshrl.u32 %v4545, 7
        %v4547 = vsub.s32 0, %v4546
        %v4548 = vrot.slane %v4501, %v4547
        %v4549 = vlaneseq
        %v4550 = vshrl.u32 %v4549, 7
        %v4551 = vsub.s32 2, %v4550
        %v4552 = vrot.slane %v4501, %v4551
        %v4553 = vlaneseq
        %v4554 = vshrl.u32 %v4553, 7
        %v4555 = vsub.s32 0, %v4554
        %v4556 = vrot.slane %v4502, %v4555
        %v4557 = vlaneseq
        %v4558 = vshrl.u32 %v4557, 7
        %v4559 = vsub.s32 2, %v4558
        %v4560 = vrot.slane %v4502, %v4559
        %v4561 = vlaneseq
        %v4562 = vshrl.u32 %v4561, 7
        %v4563 = vsub.s32 0, %v4562
        %v4564 = vrot.slane %v4503, %v4563
        %v4565 = vlaneseq
        %v4566 = vshrl.u32 %v4565, 7
        %v4567 = vsub.s32 2, %v4566
        %v4568 = vrot.slane %v4503, %v4567
        %v4569 = vlaneseq
        %v4570 = vshrl.u32 %v4569, 7
        %v4571 = vsub.s32 0, %v4570
        %v4572 = vrot.slane %v4504, %v4571
        %v4573 = vlaneseq
        %v4574 = vshrl.u32 %v4573, 7
        %v4575 = vsub.s32 2, %v4574
        %v4576 = vrot.slane %v4504, %v4575
        %v4593 = vpack.c.bf16 %v4516, %v4516
        %v4594 = vpack.c.bf16 %v4520, %v4520
        %v4595 = vpack.c.bf16 %v4524, %v4524
        %v4596 = vpack.c.bf16 %v4528, %v4528
        %v4597 = vpack.c.bf16 %v4532, %v4532
        %v4598 = vpack.c.bf16 %v4536, %v4536
        %v4599 = vpack.c.bf16 %v4540, %v4540
        %v4600 = vpack.c.bf16 %v4544, %v4544
        %v4601 = vpack.c.bf16 %v4548, %v4548
        %v4602 = vpack.c.bf16 %v4552, %v4552
        %v4603 = vpack.c.bf16 %v4556, %v4556
        %v4604 = vpack.c.bf16 %v4560, %v4560
        %v4605 = vpack.c.bf16 %v4564, %v4564
        %v4606 = vpack.c.bf16 %v4568, %v4568
        %v4607 = vpack.c.bf16 %v4572, %v4572
        %v4608 = vpack.c.bf16 %v4576, %v4576
        %v4609 = vld [vmem:[%s5] sm:$0xf]
        %v4610 = vld [vmem:[%s5 + $0x4] sm:$0xf]
        %v4611 = vld [vmem:[%s5 + $0x8] sm:$0xf]
        %v4612 = vld [vmem:[%s5 + $0xc] sm:$0xf]
        %v4613 = vld [vmem:[%s5 + $0x10] sm:$0xf]
        %v4614 = vld [vmem:[%s5 + $0x14] sm:$0xf]
        %v4615 = vld [vmem:[%s5 + $0x18] sm:$0xf]
        %v4616 = vld [vmem:[%s5 + $0x1c] sm:$0xf]
        %v4617 = vld [vmem:[%s5 + $0x20] sm:$0xf]
        %v4618 = vld [vmem:[%s5 + $0x24] sm:$0xf]
        %v4619 = vld [vmem:[%s5 + $0x28] sm:$0xf]
        %v4620 = vld [vmem:[%s5 + $0x2c] sm:$0xf]
        %v4621 = vld [vmem:[%s5 + $0x30] sm:$0xf]
        %v4622 = vld [vmem:[%s5 + $0x34] sm:$0xf]
        %v4623 = vld [vmem:[%s5 + $0x38] sm:$0xf]
        %v4624 = vld [vmem:[%s5 + $0x3c] sm:$0xf]
        %v4625 = vld [vmem:[%s5 + $0x40] sm:$0xf]
        %v4626 = vld [vmem:[%s5 + $0x44] sm:$0xf]
        %v4627 = vld [vmem:[%s5 + $0x48] sm:$0xf]
        %v4628 = vld [vmem:[%s5 + $0x4c] sm:$0xf]
        %v4629 = vld [vmem:[%s5 + $0x50] sm:$0xf]
        %v4630 = vld [vmem:[%s5 + $0x54] sm:$0xf]
        %v4631 = vld [vmem:[%s5 + $0x58] sm:$0xf]
        %v4632 = vld [vmem:[%s5 + $0x5c] sm:$0xf]
        %v4633 = vld [vmem:[%s5 + $0x60] sm:$0xf]
        %v4634 = vld [vmem:[%s5 + $0x64] sm:$0xf]
        %v4635 = vld [vmem:[%s5 + $0x68] sm:$0xf]
        %v4636 = vld [vmem:[%s5 + $0x6c] sm:$0xf]
        %v4637 = vld [vmem:[%s5 + $0x70] sm:$0xf]
        %v4638 = vld [vmem:[%s5 + $0x74] sm:$0xf]
        %v4639 = vld [vmem:[%s5 + $0x78] sm:$0xf]
        %v4640 = vld [vmem:[%s5 + $0x7c] sm:$0xf]
        %s4641 = scalar_lea.vmem %s5, 128
        %v4642 = vld [vmem:[%s4641] sm:$0xf]
        %v4643 = vld [vmem:[%s4641 + $0x4] sm:$0xf]
        %v4644 = vld [vmem:[%s4641 + $0x8] sm:$0xf]
        %v4645 = vld [vmem:[%s4641 + $0xc] sm:$0xf]
        %v4646 = vld [vmem:[%s4641 + $0x10] sm:$0xf]
        %v4647 = vld [vmem:[%s4641 + $0x14] sm:$0xf]
        %v4648 = vld [vmem:[%s4641 + $0x18] sm:$0xf]
        %v4649 = vld [vmem:[%s4641 + $0x1c] sm:$0xf]
        %v4650 = vld [vmem:[%s4641 + $0x20] sm:$0xf]
        %v4651 = vld [vmem:[%s4641 + $0x24] sm:$0xf]
        %v4652 = vld [vmem:[%s4641 + $0x28] sm:$0xf]
        %v4653 = vld [vmem:[%s4641 + $0x2c] sm:$0xf]
        %v4654 = vld [vmem:[%s4641 + $0x30] sm:$0xf]
        %v4655 = vld [vmem:[%s4641 + $0x34] sm:$0xf]
        %v4656 = vld [vmem:[%s4641 + $0x38] sm:$0xf]
        %v4657 = vld [vmem:[%s4641 + $0x3c] sm:$0xf]
        %v4658 = vld [vmem:[%s4641 + $0x40] sm:$0xf]
        %v4659 = vld [vmem:[%s4641 + $0x44] sm:$0xf]
        %v4660 = vld [vmem:[%s4641 + $0x48] sm:$0xf]
        %v4661 = vld [vmem:[%s4641 + $0x4c] sm:$0xf]
        %v4662 = vld [vmem:[%s4641 + $0x50] sm:$0xf]
        %v4663 = vld [vmem:[%s4641 + $0x54] sm:$0xf]
        %v4664 = vld [vmem:[%s4641 + $0x58] sm:$0xf]
        %v4665 = vld [vmem:[%s4641 + $0x5c] sm:$0xf]
        %v4666 = vld [vmem:[%s4641 + $0x60] sm:$0xf]
        %v4667 = vld [vmem:[%s4641 + $0x64] sm:$0xf]
        %v4668 = vld [vmem:[%s4641 + $0x68] sm:$0xf]
        %v4669 = vld [vmem:[%s4641 + $0x6c] sm:$0xf]
        %v4670 = vld [vmem:[%s4641 + $0x70] sm:$0xf]
        %v4671 = vld [vmem:[%s4641 + $0x74] sm:$0xf]
        %v4672 = vld [vmem:[%s4641 + $0x78] sm:$0xf]
        %v4673 = vld [vmem:[%s4641 + $0x7c] sm:$0xf]
        %v4706 = vunpack.c.l.b16 %v4642
        %v4707 = vunpack.c.l.b16 %v4643
        %v4708 = vunpack.c.l.b16 %v4644
        %v4709 = vunpack.c.l.b16 %v4645
        %v4710 = vunpack.c.l.b16 %v4646
        %v4711 = vunpack.c.l.b16 %v4647
        %v4712 = vunpack.c.l.b16 %v4648
        %v4713 = vunpack.c.l.b16 %v4649
        %v4714 = vunpack.c.l.b16 %v4650
        %v4715 = vunpack.c.l.b16 %v4651
        %v4716 = vunpack.c.l.b16 %v4652
        %v4717 = vunpack.c.l.b16 %v4653
        %v4718 = vunpack.c.l.b16 %v4654
        %v4719 = vunpack.c.l.b16 %v4655
        %v4720 = vunpack.c.l.b16 %v4656
        %v4721 = vunpack.c.l.b16 %v4657
        %v4722 = vunpack.c.l.b16 %v4658
        %v4723 = vunpack.c.l.b16 %v4659
        %v4724 = vunpack.c.l.b16 %v4660
        %v4725 = vunpack.c.l.b16 %v4661
        %v4726 = vunpack.c.l.b16 %v4662
        %v4727 = vunpack.c.l.b16 %v4663
        %v4728 = vunpack.c.l.b16 %v4664
        %v4729 = vunpack.c.l.b16 %v4665
        %v4730 = vunpack.c.l.b16 %v4666
        %v4731 = vunpack.c.l.b16 %v4667
        %v4732 = vunpack.c.l.b16 %v4668
        %v4733 = vunpack.c.l.b16 %v4669
        %v4734 = vunpack.c.l.b16 %v4670
        %v4735 = vunpack.c.l.b16 %v4671
        %v4736 = vunpack.c.l.b16 %v4672
        %v4737 = vunpack.c.l.b16 %v4673
        %v4738 = vpack.c.b16 %v4707, %v4706
        %v4739 = vpack.c.b16 %v4709, %v4708
        %v4740 = vpack.c.b16 %v4711, %v4710
        %v4741 = vpack.c.b16 %v4713, %v4712
        %v4742 = vpack.c.b16 %v4715, %v4714
        %v4743 = vpack.c.b16 %v4717, %v4716
        %v4744 = vpack.c.b16 %v4719, %v4718
        %v4745 = vpack.c.b16 %v4721, %v4720
        %v4746 = vpack.c.b16 %v4723, %v4722
        %v4747 = vpack.c.b16 %v4725, %v4724
        %v4748 = vpack.c.b16 %v4727, %v4726
        %v4749 = vpack.c.b16 %v4729, %v4728
        %v4750 = vpack.c.b16 %v4731, %v4730
        %v4751 = vpack.c.b16 %v4733, %v4732
        %v4752 = vpack.c.b16 %v4735, %v4734
        %v4753 = vpack.c.b16 %v4737, %v4736
        %4770 = vmatprep.subr.bf16.mxu0 0
        %4771 = vmatpush1.bf16.msra.mxu0 %v4738
        %4772 = vmatprep.subr.bf16.mxu0 0
        %4773 = vmatpush1.bf16.msra.mxu0 %v4739
        %4774 = vmatprep.subr.bf16.mxu0 0
        %4775 = vmatpush1.bf16.msra.mxu0 %v4740
        %4776 = vmatprep.subr.bf16.mxu0 0
        %4777 = vmatpush1.bf16.msra.mxu0 %v4741
        %4778 = vmatprep.subr.bf16.mxu0 0
        %4779 = vmatpush1.bf16.msra.mxu0 %v4742
        %4780 = vmatprep.subr.bf16.mxu0 0
        %4781 = vmatpush1.bf16.msra.mxu0 %v4743
        %4782 = vmatprep.subr.bf16.mxu0 0
        %4783 = vmatpush1.bf16.msra.mxu0 %v4744
        %4784 = vmatprep.subr.bf16.mxu0 0
        %4785 = vmatpush1.bf16.msra.mxu0 %v4745
        %4786 = vmatprep.subr.bf16.mxu0 0
        %4787 = vmatpush1.bf16.msra.mxu0 %v4746
        %4788 = vmatprep.subr.bf16.mxu0 0
        %4789 = vmatpush1.bf16.msra.mxu0 %v4747
        %4790 = vmatprep.subr.bf16.mxu0 0
        %4791 = vmatpush1.bf16.msra.mxu0 %v4748
        %4792 = vmatprep.subr.bf16.mxu0 0
        %4793 = vmatpush1.bf16.msra.mxu0 %v4749
        %4794 = vmatprep.subr.bf16.mxu0 0
        %4795 = vmatpush1.bf16.msra.mxu0 %v4750
        %4796 = vmatprep.subr.bf16.mxu0 0
        %4797 = vmatpush1.bf16.msra.mxu0 %v4751
        %4798 = vmatprep.subr.bf16.mxu0 0
        %4799 = vmatpush1.bf16.msra.mxu0 %v4752
        %4800 = vmatprep.subr.bf16.mxu0 0
        %4801 = vmatpush1.bf16.msra.mxu0 %v4753
        %4802 = vmatprep.mubr.bf16.mxu0 %v4596
        %4803 = vmatmul.mubr.bf16.gmra.mrb[0].mxu0 %v4595
        %v4804 = vpop.f32.mrb[0].mxu0
        %v4805 = vadd.f32 0.0, %v4804
        %v4806 = vpop.f32.mrb[0].mxu0
        %v4807 = vpop.f32.mrb[0].mxu0
        %v4808 = vpop.f32.mrb[0].mxu0
        %4809 = vdwg.mxu0
        %v4842 = vunpack.c.l.b16 %v4609
        %v4843 = vunpack.c.l.b16 %v4610
        %v4844 = vunpack.c.l.b16 %v4611
        %v4845 = vunpack.c.l.b16 %v4612
        %v4846 = vunpack.c.l.b16 %v4613
        %v4847 = vunpack.c.l.b16 %v4614
        %v4848 = vunpack.c.l.b16 %v4615
        %v4849 = vunpack.c.l.b16 %v4616
        %v4850 = vunpack.c.l.b16 %v4617
        %v4851 = vunpack.c.l.b16 %v4618
        %v4852 = vunpack.c.l.b16 %v4619
        %v4853 = vunpack.c.l.b16 %v4620
        %v4854 = vunpack.c.l.b16 %v4621
        %v4855 = vunpack.c.l.b16 %v4622
        %v4856 = vunpack.c.l.b16 %v4623
        %v4857 = vunpack.c.l.b16 %v4624
        %v4858 = vunpack.c.l.b16 %v4625
        %v4859 = vunpack.c.l.b16 %v4626
        %v4860 = vunpack.c.l.b16 %v4627
        %v4861 = vunpack.c.l.b16 %v4628
        %v4862 = vunpack.c.l.b16 %v4629
        %v4863 = vunpack.c.l.b16 %v4630
        %v4864 = vunpack.c.l.b16 %v4631
        %v4865 = vunpack.c.l.b16 %v4632
        %v4866 = vunpack.c.l.b16 %v4633
        %v4867 = vunpack.c.l.b16 %v4634
        %v4868 = vunpack.c.l.b16 %v4635
        %v4869 = vunpack.c.l.b16 %v4636
        %v4870 = vunpack.c.l.b16 %v4637
        %v4871 = vunpack.c.l.b16 %v4638
        %v4872 = vunpack.c.l.b16 %v4639
        %v4873 = vunpack.c.l.b16 %v4640
        %v4874 = vpack.c.b16 %v4843, %v4842
        %v4875 = vpack.c.b16 %v4845, %v4844
        %v4876 = vpack.c.b16 %v4847, %v4846
        %v4877 = vpack.c.b16 %v4849, %v4848
        %v4878 = vpack.c.b16 %v4851, %v4850
        %v4879 = vpack.c.b16 %v4853, %v4852
        %v4880 = vpack.c.b16 %v4855, %v4854
        %v4881 = vpack.c.b16 %v4857, %v4856
        %v4882 = vpack.c.b16 %v4859, %v4858
        %v4883 = vpack.c.b16 %v4861, %v4860
        %v4884 = vpack.c.b16 %v4863, %v4862
        %v4885 = vpack.c.b16 %v4865, %v4864
        %v4886 = vpack.c.b16 %v4867, %v4866
        %v4887 = vpack.c.b16 %v4869, %v4868
        %v4888 = vpack.c.b16 %v4871, %v4870
        %v4889 = vpack.c.b16 %v4873, %v4872
        %4906 = vmatprep.subr.bf16.mxu0 0
        %4907 = vmatpush1.bf16.msra.mxu0 %v4874
        %4908 = vmatprep.subr.bf16.mxu0 0
        %4909 = vmatpush1.bf16.msra.mxu0 %v4875
        %4910 = vmatprep.subr.bf16.mxu0 0
        %4911 = vmatpush1.bf16.msra.mxu0 %v4876
        %4912 = vmatprep.subr.bf16.mxu0 0
        %4913 = vmatpush1.bf16.msra.mxu0 %v4877
        %4914 = vmatprep.subr.bf16.mxu0 0
        %4915 = vmatpush1.bf16.msra.mxu0 %v4878
        %4916 = vmatprep.subr.bf16.mxu0 0
        %4917 = vmatpush1.bf16.msra.mxu0 %v4879
        %4918 = vmatprep.subr.bf16.mxu0 0
        %4919 = vmatpush1.bf16.msra.mxu0 %v4880
        %4920 = vmatprep.subr.bf16.mxu0 0
        %4921 = vmatpush1.bf16.msra.mxu0 %v4881
        %4922 = vmatprep.subr.bf16.mxu0 0
        %4923 = vmatpush1.bf16.msra.mxu0 %v4882
        %4924 = vmatprep.subr.bf16.mxu0 0
        %4925 = vmatpush1.bf16.msra.mxu0 %v4883
        %4926 = vmatprep.subr.bf16.mxu0 0
        %4927 = vmatpush1.bf16.msra.mxu0 %v4884
        %4928 = vmatprep.subr.bf16.mxu0 0
        %4929 = vmatpush1.bf16.msra.mxu0 %v4885
        %4930 = vmatprep.subr.bf16.mxu0 0
        %4931 = vmatpush1.bf16.msra.mxu0 %v4886
        %4932 = vmatprep.subr.bf16.mxu0 0
        %4933 = vmatpush1.bf16.msra.mxu0 %v4887
        %4934 = vmatprep.subr.bf16.mxu0 0
        %4935 = vmatpush1.bf16.msra.mxu0 %v4888
        %4936 = vmatprep.subr.bf16.mxu0 0
        %4937 = vmatpush1.bf16.msra.mxu0 %v4889
        %4938 = vmatprep.mubr.bf16.mxu0 %v4594
        %4939 = vmatmul.mubr.bf16.gmra.mrb[0].mxu0 %v4593
        %v4940 = vpop.f32.mrb[0].mxu0
        %v4941 = vadd.f32 %v4805, %v4940
        %v4942 = vpop.f32.mrb[0].mxu0
        %v4943 = vpop.f32.mrb[0].mxu0
        %v4944 = vpop.f32.mrb[0].mxu0
        %4945 = vdwg.mxu0
        %s4946 = scalar_lea.vmem %s5, 256
        %v4947 = vld [vmem:[%s4946] sm:$0xf]
        %v4948 = vld [vmem:[%s4946 + $0x4] sm:$0xf]
        %v4949 = vld [vmem:[%s4946 + $0x8] sm:$0xf]
        %v4950 = vld [vmem:[%s4946 + $0xc] sm:$0xf]
        %v4951 = vld [vmem:[%s4946 + $0x10] sm:$0xf]
        %v4952 = vld [vmem:[%s4946 + $0x14] sm:$0xf]
        %v4953 = vld [vmem:[%s4946 + $0x18] sm:$0xf]
        %v4954 = vld [vmem:[%s4946 + $0x1c] sm:$0xf]
        %v4955 = vld [vmem:[%s4946 + $0x20] sm:$0xf]
        %v4956 = vld [vmem:[%s4946 + $0x24] sm:$0xf]
        %v4957 = vld [vmem:[%s4946 + $0x28] sm:$0xf]
        %v4958 = vld [vmem:[%s4946 + $0x2c] sm:$0xf]
        %v4959 = vld [vmem:[%s4946 + $0x30] sm:$0xf]
        %v4960 = vld [vmem:[%s4946 + $0x34] sm:$0xf]
        %v4961 = vld [vmem:[%s4946 + $0x38] sm:$0xf]
        %v4962 = vld [vmem:[%s4946 + $0x3c] sm:$0xf]
        %v4963 = vld [vmem:[%s4946 + $0x40] sm:$0xf]
        %v4964 = vld [vmem:[%s4946 + $0x44] sm:$0xf]
        %v4965 = vld [vmem:[%s4946 + $0x48] sm:$0xf]
        %v4966 = vld [vmem:[%s4946 + $0x4c] sm:$0xf]
        %v4967 = vld [vmem:[%s4946 + $0x50] sm:$0xf]
        %v4968 = vld [vmem:[%s4946 + $0x54] sm:$0xf]
        %v4969 = vld [vmem:[%s4946 + $0x58] sm:$0xf]
        %v4970 = vld [vmem:[%s4946 + $0x5c] sm:$0xf]
        %v4971 = vld [vmem:[%s4946 + $0x60] sm:$0xf]
        %v4972 = vld [vmem:[%s4946 + $0x64] sm:$0xf]
        %v4973 = vld [vmem:[%s4946 + $0x68] sm:$0xf]
        %v4974 = vld [vmem:[%s4946 + $0x6c] sm:$0xf]
        %v4975 = vld [vmem:[%s4946 + $0x70] sm:$0xf]
        %v4976 = vld [vmem:[%s4946 + $0x74] sm:$0xf]
        %v4977 = vld [vmem:[%s4946 + $0x78] sm:$0xf]
        %v4978 = vld [vmem:[%s4946 + $0x7c] sm:$0xf]
        %v5011 = vunpack.c.l.b16 %v4947
        %v5012 = vunpack.c.l.b16 %v4948
        %v5013 = vunpack.c.l.b16 %v4949
        %v5014 = vunpack.c.l.b16 %v4950
        %v5015 = vunpack.c.l.b16 %v4951
        %v5016 = vunpack.c.l.b16 %v4952
        %v5017 = vunpack.c.l.b16 %v4953
        %v5018 = vunpack.c.l.b16 %v4954
        %v5019 = vunpack.c.l.b16 %v4955
        %v5020 = vunpack.c.l.b16 %v4956
        %v5021 = vunpack.c.l.b16 %v4957
        %v5022 = vunpack.c.l.b16 %v4958
        %v5023 = vunpack.c.l.b16 %v4959
        %v5024 = vunpack.c.l.b16 %v4960
        %v5025 = vunpack.c.l.b16 %v4961
        %v5026 = vunpack.c.l.b16 %v4962
        %v5027 = vunpack.c.l.b16 %v4963
        %v5028 = vunpack.c.l.b16 %v4964
        %v5029 = vunpack.c.l.b16 %v4965
        %v5030 = vunpack.c.l.b16 %v4966
        %v5031 = vunpack.c.l.b16 %v4967
        %v5032 = vunpack.c.l.b16 %v4968
        %v5033 = vunpack.c.l.b16 %v4969
        %v5034 = vunpack.c.l.b16 %v4970
        %v5035 = vunpack.c.l.b16 %v4971
        %v5036 = vunpack.c.l.b16 %v4972
        %v5037 = vunpack.c.l.b16 %v4973
        %v5038 = vunpack.c.l.b16 %v4974
        %v5039 = vunpack.c.l.b16 %v4975
        %v5040 = vunpack.c.l.b16 %v4976
        %v5041 = vunpack.c.l.b16 %v4977
        %v5042 = vunpack.c.l.b16 %v4978
        %v5043 = vpack.c.b16 %v5012, %v5011
        %v5044 = vpack.c.b16 %v5014, %v5013
        %v5045 = vpack.c.b16 %v5016, %v5015
        %v5046 = vpack.c.b16 %v5018, %v5017
        %v5047 = vpack.c.b16 %v5020, %v5019
        %v5048 = vpack.c.b16 %v5022, %v5021
        %v5049 = vpack.c.b16 %v5024, %v5023
        %v5050 = vpack.c.b16 %v5026, %v5025
        %v5051 = vpack.c.b16 %v5028, %v5027
        %v5052 = vpack.c.b16 %v5030, %v5029
        %v5053 = vpack.c.b16 %v5032, %v5031
        %v5054 = vpack.c.b16 %v5034, %v5033
        %v5055 = vpack.c.b16 %v5036, %v5035
        %v5056 = vpack.c.b16 %v5038, %v5037
        %v5057 = vpack.c.b16 %v5040, %v5039
        %v5058 = vpack.c.b16 %v5042, %v5041
        %5075 = vmatprep.subr.bf16.mxu0 0
        %5076 = vmatpush1.bf16.msra.mxu0 %v5043
        %5077 = vmatprep.subr.bf16.mxu0 0
        %5078 = vmatpush1.bf16.msra.mxu0 %v5044
        %5079 = vmatprep.subr.bf16.mxu0 0
        %5080 = vmatpush1.bf16.msra.mxu0 %v5045
        %5081 = vmatprep.subr.bf16.mxu0 0
        %5082 = vmatpush1.bf16.msra.mxu0 %v5046
        %5083 = vmatprep.subr.bf16.mxu0 0
        %5084 = vmatpush1.bf16.msra.mxu0 %v5047
        %5085 = vmatprep.subr.bf16.mxu0 0
        %5086 = vmatpush1.bf16.msra.mxu0 %v5048
        %5087 = vmatprep.subr.bf16.mxu0 0
        %5088 = vmatpush1.bf16.msra.mxu0 %v5049
        %5089 = vmatprep.subr.bf16.mxu0 0
        %5090 = vmatpush1.bf16.msra.mxu0 %v5050
        %5091 = vmatprep.subr.bf16.mxu0 0
        %5092 = vmatpush1.bf16.msra.mxu0 %v5051
        %5093 = vmatprep.subr.bf16.mxu0 0
        %5094 = vmatpush1.bf16.msra.mxu0 %v5052
        %5095 = vmatprep.subr.bf16.mxu0 0
        %5096 = vmatpush1.bf16.msra.mxu0 %v5053
        %5097 = vmatprep.subr.bf16.mxu0 0
        %5098 = vmatpush1.bf16.msra.mxu0 %v5054
        %5099 = vmatprep.subr.bf16.mxu0 0
        %5100 = vmatpush1.bf16.msra.mxu0 %v5055
        %5101 = vmatprep.subr.bf16.mxu0 0
        %5102 = vmatpush1.bf16.msra.mxu0 %v5056
        %5103 = vmatprep.subr.bf16.mxu0 0
        %5104 = vmatpush1.bf16.msra.mxu0 %v5057
        %5105 = vmatprep.subr.bf16.mxu0 0
        %5106 = vmatpush1.bf16.msra.mxu0 %v5058
        %5107 = vmatprep.mubr.bf16.mxu0 %v4598
        %5108 = vmatmul.mubr.bf16.gmra.mrb[0].mxu0 %v4597
        %v5109 = vpop.f32.mrb[0].mxu0
        %v5110 = vadd.f32 0.0, %v5109
        %v5111 = vpop.f32.mrb[0].mxu0
        %v5112 = vpop.f32.mrb[0].mxu0
        %v5113 = vpop.f32.mrb[0].mxu0
        %5114 = vdwg.mxu0
        %v5115 = vadd.f32 %v4941, %v5110
        %s5116 = scalar_lea.vmem %s5, 384
        %v5117 = vld [vmem:[%s5116] sm:$0xf]
        %v5118 = vld [vmem:[%s5116 + $0x4] sm:$0xf]
        %v5119 = vld [vmem:[%s5116 + $0x8] sm:$0xf]
        %v5120 = vld [vmem:[%s5116 + $0xc] sm:$0xf]
        %v5121 = vld [vmem:[%s5116 + $0x10] sm:$0xf]
        %v5122 = vld [vmem:[%s5116 + $0x14] sm:$0xf]
        %v5123 = vld [vmem:[%s5116 + $0x18] sm:$0xf]
        %v5124 = vld [vmem:[%s5116 + $0x1c] sm:$0xf]
        %v5125 = vld [vmem:[%s5116 + $0x20] sm:$0xf]
        %v5126 = vld [vmem:[%s5116 + $0x24] sm:$0xf]
        %v5127 = vld [vmem:[%s5116 + $0x28] sm:$0xf]
        %v5128 = vld [vmem:[%s5116 + $0x2c] sm:$0xf]
        %v5129 = vld [vmem:[%s5116 + $0x30] sm:$0xf]
        %v5130 = vld [vmem:[%s5116 + $0x34] sm:$0xf]
        %v5131 = vld [vmem:[%s5116 + $0x38] sm:$0xf]
        %v5132 = vld [vmem:[%s5116 + $0x3c] sm:$0xf]
        %v5133 = vld [vmem:[%s5116 + $0x40] sm:$0xf]
        %v5134 = vld [vmem:[%s5116 + $0x44] sm:$0xf]
        %v5135 = vld [vmem:[%s5116 + $0x48] sm:$0xf]
        %v5136 = vld [vmem:[%s5116 + $0x4c] sm:$0xf]
        %v5137 = vld [vmem:[%s5116 + $0x50] sm:$0xf]
        %v5138 = vld [vmem:[%s5116 + $0x54] sm:$0xf]
        %v5139 = vld [vmem:[%s5116 + $0x58] sm:$0xf]
        %v5140 = vld [vmem:[%s5116 + $0x5c] sm:$0xf]
        %v5141 = vld [vmem:[%s5116 + $0x60] sm:$0xf]
        %v5142 = vld [vmem:[%s5116 + $0x64] sm:$0xf]
        %v5143 = vld [vmem:[%s5116 + $0x68] sm:$0xf]
        %v5144 = vld [vmem:[%s5116 + $0x6c] sm:$0xf]
        %v5145 = vld [vmem:[%s5116 + $0x70] sm:$0xf]
        %v5146 = vld [vmem:[%s5116 + $0x74] sm:$0xf]
        %v5147 = vld [vmem:[%s5116 + $0x78] sm:$0xf]
        %v5148 = vld [vmem:[%s5116 + $0x7c] sm:$0xf]
        %v5181 = vunpack.c.l.b16 %v5117
        %v5182 = vunpack.c.l.b16 %v5118
        %v5183 = vunpack.c.l.b16 %v5119
        %v5184 = vunpack.c.l.b16 %v5120
        %v5185 = vunpack.c.l.b16 %v5121
        %v5186 = vunpack.c.l.b16 %v5122
        %v5187 = vunpack.c.l.b16 %v5123
        %v5188 = vunpack.c.l.b16 %v5124
        %v5189 = vunpack.c.l.b16 %v5125
        %v5190 = vunpack.c.l.b16 %v5126
        %v5191 = vunpack.c.l.b16 %v5127
        %v5192 = vunpack.c.l.b16 %v5128
        %v5193 = vunpack.c.l.b16 %v5129
        %v5194 = vunpack.c.l.b16 %v5130
        %v5195 = vunpack.c.l.b16 %v5131
        %v5196 = vunpack.c.l.b16 %v5132
        %v5197 = vunpack.c.l.b16 %v5133
        %v5198 = vunpack.c.l.b16 %v5134
        %v5199 = vunpack.c.l.b16 %v5135
        %v5200 = vunpack.c.l.b16 %v5136
        %v5201 = vunpack.c.l.b16 %v5137
        %v5202 = vunpack.c.l.b16 %v5138
        %v5203 = vunpack.c.l.b16 %v5139
        %v5204 = vunpack.c.l.b16 %v5140
        %v5205 = vunpack.c.l.b16 %v5141
        %v5206 = vunpack.c.l.b16 %v5142
        %v5207 = vunpack.c.l.b16 %v5143
        %v5208 = vunpack.c.l.b16 %v5144
        %v5209 = vunpack.c.l.b16 %v5145
        %v5210 = vunpack.c.l.b16 %v5146
        %v5211 = vunpack.c.l.b16 %v5147
        %v5212 = vunpack.c.l.b16 %v5148
        %v5213 = vpack.c.b16 %v5182, %v5181
        %v5214 = vpack.c.b16 %v5184, %v5183
        %v5215 = vpack.c.b16 %v5186, %v5185
        %v5216 = vpack.c.b16 %v5188, %v5187
        %v5217 = vpack.c.b16 %v5190, %v5189
        %v5218 = vpack.c.b16 %v5192, %v5191
        %v5219 = vpack.c.b16 %v5194, %v5193
        %v5220 = vpack.c.b16 %v5196, %v5195
        %v5221 = vpack.c.b16 %v5198, %v5197
        %v5222 = vpack.c.b16 %v5200, %v5199
        %v5223 = vpack.c.b16 %v5202, %v5201
        %v5224 = vpack.c.b16 %v5204, %v5203
        %v5225 = vpack.c.b16 %v5206, %v5205
        %v5226 = vpack.c.b16 %v5208, %v5207
        %v5227 = vpack.c.b16 %v5210, %v5209
        %v5228 = vpack.c.b16 %v5212, %v5211
        %5245 = vmatprep.subr.bf16.mxu0 0
        %5246 = vmatpush1.bf16.msra.mxu0 %v5213
        %5247 = vmatprep.subr.bf16.mxu0 0
        %5248 = vmatpush1.bf16.msra.mxu0 %v5214
        %5249 = vmatprep.subr.bf16.mxu0 0
        %5250 = vmatpush1.bf16.msra.mxu0 %v5215
        %5251 = vmatprep.subr.bf16.mxu0 0
        %5252 = vmatpush1.bf16.msra.mxu0 %v5216
        %5253 = vmatprep.subr.bf16.mxu0 0
        %5254 = vmatpush1.bf16.msra.mxu0 %v5217
        %5255 = vmatprep.subr.bf16.mxu0 0
        %5256 = vmatpush1.bf16.msra.mxu0 %v5218
        %5257 = vmatprep.subr.bf16.mxu0 0
        %5258 = vmatpush1.bf16.msra.mxu0 %v5219
        %5259 = vmatprep.subr.bf16.mxu0 0
        %5260 = vmatpush1.bf16.msra.mxu0 %v5220
        %5261 = vmatprep.subr.bf16.mxu0 0
        %5262 = vmatpush1.bf16.msra.mxu0 %v5221
        %5263 = vmatprep.subr.bf16.mxu0 0
        %5264 = vmatpush1.bf16.msra.mxu0 %v5222
        %5265 = vmatprep.subr.bf16.mxu0 0
        %5266 = vmatpush1.bf16.msra.mxu0 %v5223
        %5267 = vmatprep.subr.bf16.mxu0 0
        %5268 = vmatpush1.bf16.msra.mxu0 %v5224
        %5269 = vmatprep.subr.bf16.mxu0 0
        %5270 = vmatpush1.bf16.msra.mxu0 %v5225
        %5271 = vmatprep.subr.bf16.mxu0 0
        %5272 = vmatpush1.bf16.msra.mxu0 %v5226
        %5273 = vmatprep.subr.bf16.mxu0 0
        %5274 = vmatpush1.bf16.msra.mxu0 %v5227
        %5275 = vmatprep.subr.bf16.mxu0 0
        %5276 = vmatpush1.bf16.msra.mxu0 %v5228
        %5277 = vmatprep.mubr.bf16.mxu0 %v4600
        %5278 = vmatmul.mubr.bf16.gmra.mrb[0].mxu0 %v4599
        %v5279 = vpop.f32.mrb[0].mxu0
        %v5280 = vadd.f32 0.0, %v5279
        %v5281 = vpop.f32.mrb[0].mxu0
        %v5282 = vpop.f32.mrb[0].mxu0
        %v5283 = vpop.f32.mrb[0].mxu0
        %5284 = vdwg.mxu0
        %v5285 = vadd.f32 %v5115, %v5280
        %s5286 = scalar_lea.vmem %s5, 512
        %v5287 = vld [vmem:[%s5286] sm:$0xf]
        %v5288 = vld [vmem:[%s5286 + $0x4] sm:$0xf]
        %v5289 = vld [vmem:[%s5286 + $0x8] sm:$0xf]
        %v5290 = vld [vmem:[%s5286 + $0xc] sm:$0xf]
        %v5291 = vld [vmem:[%s5286 + $0x10] sm:$0xf]
        %v5292 = vld [vmem:[%s5286 + $0x14] sm:$0xf]
        %v5293 = vld [vmem:[%s5286 + $0x18] sm:$0xf]
        %v5294 = vld [vmem:[%s5286 + $0x1c] sm:$0xf]
        %v5295 = vld [vmem:[%s5286 + $0x20] sm:$0xf]
        %v5296 = vld [vmem:[%s5286 + $0x24] sm:$0xf]
        %v5297 = vld [vmem:[%s5286 + $0x28] sm:$0xf]
        %v5298 = vld [vmem:[%s5286 + $0x2c] sm:$0xf]
        %v5299 = vld [vmem:[%s5286 + $0x30] sm:$0xf]
        %v5300 = vld [vmem:[%s5286 + $0x34] sm:$0xf]
        %v5301 = vld [vmem:[%s5286 + $0x38] sm:$0xf]
        %v5302 = vld [vmem:[%s5286 + $0x3c] sm:$0xf]
        %v5303 = vld [vmem:[%s5286 + $0x40] sm:$0xf]
        %v5304 = vld [vmem:[%s5286 + $0x44] sm:$0xf]
        %v5305 = vld [vmem:[%s5286 + $0x48] sm:$0xf]
        %v5306 = vld [vmem:[%s5286 + $0x4c] sm:$0xf]
        %v5307 = vld [vmem:[%s5286 + $0x50] sm:$0xf]
        %v5308 = vld [vmem:[%s5286 + $0x54] sm:$0xf]
        %v5309 = vld [vmem:[%s5286 + $0x58] sm:$0xf]
        %v5310 = vld [vmem:[%s5286 + $0x5c] sm:$0xf]
        %v5311 = vld [vmem:[%s5286 + $0x60] sm:$0xf]
        %v5312 = vld [vmem:[%s5286 + $0x64] sm:$0xf]
        %v5313 = vld [vmem:[%s5286 + $0x68] sm:$0xf]
        %v5314 = vld [vmem:[%s5286 + $0x6c] sm:$0xf]
        %v5315 = vld [vmem:[%s5286 + $0x70] sm:$0xf]
        %v5316 = vld [vmem:[%s5286 + $0x74] sm:$0xf]
        %v5317 = vld [vmem:[%s5286 + $0x78] sm:$0xf]
        %v5318 = vld [vmem:[%s5286 + $0x7c] sm:$0xf]
        %v5351 = vunpack.c.l.b16 %v5287
        %v5352 = vunpack.c.l.b16 %v5288
        %v5353 = vunpack.c.l.b16 %v5289
        %v5354 = vunpack.c.l.b16 %v5290
        %v5355 = vunpack.c.l.b16 %v5291
        %v5356 = vunpack.c.l.b16 %v5292
        %v5357 = vunpack.c.l.b16 %v5293
        %v5358 = vunpack.c.l.b16 %v5294
        %v5359 = vunpack.c.l.b16 %v5295
        %v5360 = vunpack.c.l.b16 %v5296
        %v5361 = vunpack.c.l.b16 %v5297
        %v5362 = vunpack.c.l.b16 %v5298
        %v5363 = vunpack.c.l.b16 %v5299
        %v5364 = vunpack.c.l.b16 %v5300
        %v5365 = vunpack.c.l.b16 %v5301
        %v5366 = vunpack.c.l.b16 %v5302
        %v5367 = vunpack.c.l.b16 %v5303
        %v5368 = vunpack.c.l.b16 %v5304
        %v5369 = vunpack.c.l.b16 %v5305
        %v5370 = vunpack.c.l.b16 %v5306
        %v5371 = vunpack.c.l.b16 %v5307
        %v5372 = vunpack.c.l.b16 %v5308
        %v5373 = vunpack.c.l.b16 %v5309
        %v5374 = vunpack.c.l.b16 %v5310
        %v5375 = vunpack.c.l.b16 %v5311
        %v5376 = vunpack.c.l.b16 %v5312
        %v5377 = vunpack.c.l.b16 %v5313
        %v5378 = vunpack.c.l.b16 %v5314
        %v5379 = vunpack.c.l.b16 %v5315
        %v5380 = vunpack.c.l.b16 %v5316
        %v5381 = vunpack.c.l.b16 %v5317
        %v5382 = vunpack.c.l.b16 %v5318
        %v5383 = vpack.c.b16 %v5352, %v5351
        %v5384 = vpack.c.b16 %v5354, %v5353
        %v5385 = vpack.c.b16 %v5356, %v5355
        %v5386 = vpack.c.b16 %v5358, %v5357
        %v5387 = vpack.c.b16 %v5360, %v5359
        %v5388 = vpack.c.b16 %v5362, %v5361
        %v5389 = vpack.c.b16 %v5364, %v5363
        %v5390 = vpack.c.b16 %v5366, %v5365
        %v5391 = vpack.c.b16 %v5368, %v5367
        %v5392 = vpack.c.b16 %v5370, %v5369
        %v5393 = vpack.c.b16 %v5372, %v5371
        %v5394 = vpack.c.b16 %v5374, %v5373
        %v5395 = vpack.c.b16 %v5376, %v5375
        %v5396 = vpack.c.b16 %v5378, %v5377
        %v5397 = vpack.c.b16 %v5380, %v5379
        %v5398 = vpack.c.b16 %v5382, %v5381
        %5415 = vmatprep.subr.bf16.mxu0 0
        %5416 = vmatpush1.bf16.msra.mxu0 %v5383
        %5417 = vmatprep.subr.bf16.mxu0 0
        %5418 = vmatpush1.bf16.msra.mxu0 %v5384
        %5419 = vmatprep.subr.bf16.mxu0 0
        %5420 = vmatpush1.bf16.msra.mxu0 %v5385
        %5421 = vmatprep.subr.bf16.mxu0 0
        %5422 = vmatpush1.bf16.msra.mxu0 %v5386
        %5423 = vmatprep.subr.bf16.mxu0 0
        %5424 = vmatpush1.bf16.msra.mxu0 %v5387
        %5425 = vmatprep.subr.bf16.mxu0 0
        %5426 = vmatpush1.bf16.msra.mxu0 %v5388
        %5427 = vmatprep.subr.bf16.mxu0 0
        %5428 = vmatpush1.bf16.msra.mxu0 %v5389
        %5429 = vmatprep.subr.bf16.mxu0 0
        %5430 = vmatpush1.bf16.msra.mxu0 %v5390
        %5431 = vmatprep.subr.bf16.mxu0 0
        %5432 = vmatpush1.bf16.msra.mxu0 %v5391
        %5433 = vmatprep.subr.bf16.mxu0 0
        %5434 = vmatpush1.bf16.msra.mxu0 %v5392
        %5435 = vmatprep.subr.bf16.mxu0 0
        %5436 = vmatpush1.bf16.msra.mxu0 %v5393
        %5437 = vmatprep.subr.bf16.mxu0 0
        %5438 = vmatpush1.bf16.msra.mxu0 %v5394
        %5439 = vmatprep.subr.bf16.mxu0 0
        %5440 = vmatpush1.bf16.msra.mxu0 %v5395
        %5441 = vmatprep.subr.bf16.mxu0 0
        %5442 = vmatpush1.bf16.msra.mxu0 %v5396
        %5443 = vmatprep.subr.bf16.mxu0 0
        %5444 = vmatpush1.bf16.msra.mxu0 %v5397
        %5445 = vmatprep.subr.bf16.mxu0 0
        %5446 = vmatpush1.bf16.msra.mxu0 %v5398
        %5447 = vmatprep.mubr.bf16.mxu0 %v4602
        %5448 = vmatmul.mubr.bf16.gmra.mrb[0].mxu0 %v4601
        %v5449 = vpop.f32.mrb[0].mxu0
        %v5450 = vadd.f32 0.0, %v5449
        %v5451 = vpop.f32.mrb[0].mxu0
        %v5452 = vpop.f32.mrb[0].mxu0
        %v5453 = vpop.f32.mrb[0].mxu0
        %5454 = vdwg.mxu0
        %v5455 = vadd.f32 %v5285, %v5450
        %s5456 = scalar_lea.vmem %s5, 640
        %v5457 = vld [vmem:[%s5456] sm:$0xf]
        %v5458 = vld [vmem:[%s5456 + $0x4] sm:$0xf]
        %v5459 = vld [vmem:[%s5456 + $0x8] sm:$0xf]
        %v5460 = vld [vmem:[%s5456 + $0xc] sm:$0xf]
        %v5461 = vld [vmem:[%s5456 + $0x10] sm:$0xf]
        %v5462 = vld [vmem:[%s5456 + $0x14] sm:$0xf]
        %v5463 = vld [vmem:[%s5456 + $0x18] sm:$0xf]
        %v5464 = vld [vmem:[%s5456 + $0x1c] sm:$0xf]
        %v5465 = vld [vmem:[%s5456 + $0x20] sm:$0xf]
        %v5466 = vld [vmem:[%s5456 + $0x24] sm:$0xf]
        %v5467 = vld [vmem:[%s5456 + $0x28] sm:$0xf]
        %v5468 = vld [vmem:[%s5456 + $0x2c] sm:$0xf]
        %v5469 = vld [vmem:[%s5456 + $0x30] sm:$0xf]
        %v5470 = vld [vmem:[%s5456 + $0x34] sm:$0xf]
        %v5471 = vld [vmem:[%s5456 + $0x38] sm:$0xf]
        %v5472 = vld [vmem:[%s5456 + $0x3c] sm:$0xf]
        %v5473 = vld [vmem:[%s5456 + $0x40] sm:$0xf]
        %v5474 = vld [vmem:[%s5456 + $0x44] sm:$0xf]
        %v5475 = vld [vmem:[%s5456 + $0x48] sm:$0xf]
        %v5476 = vld [vmem:[%s5456 + $0x4c] sm:$0xf]
        %v5477 = vld [vmem:[%s5456 + $0x50] sm:$0xf]
        %v5478 = vld [vmem:[%s5456 + $0x54] sm:$0xf]
        %v5479 = vld [vmem:[%s5456 + $0x58] sm:$0xf]
        %v5480 = vld [vmem:[%s5456 + $0x5c] sm:$0xf]
        %v5481 = vld [vmem:[%s5456 + $0x60] sm:$0xf]
        %v5482 = vld [vmem:[%s5456 + $0x64] sm:$0xf]
        %v5483 = vld [vmem:[%s5456 + $0x68] sm:$0xf]
        %v5484 = vld [vmem:[%s5456 + $0x6c] sm:$0xf]
        %v5485 = vld [vmem:[%s5456 + $0x70] sm:$0xf]
        %v5486 = vld [vmem:[%s5456 + $0x74] sm:$0xf]
        %v5487 = vld [vmem:[%s5456 + $0x78] sm:$0xf]
        %v5488 = vld [vmem:[%s5456 + $0x7c] sm:$0xf]
        %v5521 = vunpack.c.l.b16 %v5457
        %v5522 = vunpack.c.l.b16 %v5458
        %v5523 = vunpack.c.l.b16 %v5459
        %v5524 = vunpack.c.l.b16 %v5460
        %v5525 = vunpack.c.l.b16 %v5461
        %v5526 = vunpack.c.l.b16 %v5462
        %v5527 = vunpack.c.l.b16 %v5463
        %v5528 = vunpack.c.l.b16 %v5464
        %v5529 = vunpack.c.l.b16 %v5465
        %v5530 = vunpack.c.l.b16 %v5466
        %v5531 = vunpack.c.l.b16 %v5467
        %v5532 = vunpack.c.l.b16 %v5468
        %v5533 = vunpack.c.l.b16 %v5469
        %v5534 = vunpack.c.l.b16 %v5470
        %v5535 = vunpack.c.l.b16 %v5471
        %v5536 = vunpack.c.l.b16 %v5472
        %v5537 = vunpack.c.l.b16 %v5473
        %v5538 = vunpack.c.l.b16 %v5474
        %v5539 = vunpack.c.l.b16 %v5475
        %v5540 = vunpack.c.l.b16 %v5476
        %v5541 = vunpack.c.l.b16 %v5477
        %v5542 = vunpack.c.l.b16 %v5478
        %v5543 = vunpack.c.l.b16 %v5479
        %v5544 = vunpack.c.l.b16 %v5480
        %v5545 = vunpack.c.l.b16 %v5481
        %v5546 = vunpack.c.l.b16 %v5482
        %v5547 = vunpack.c.l.b16 %v5483
        %v5548 = vunpack.c.l.b16 %v5484
        %v5549 = vunpack.c.l.b16 %v5485
        %v5550 = vunpack.c.l.b16 %v5486
        %v5551 = vunpack.c.l.b16 %v5487
        %v5552 = vunpack.c.l.b16 %v5488
        %v5553 = vpack.c.b16 %v5522, %v5521
        %v5554 = vpack.c.b16 %v5524, %v5523
        %v5555 = vpack.c.b16 %v5526, %v5525
        %v5556 = vpack.c.b16 %v5528, %v5527
        %v5557 = vpack.c.b16 %v5530, %v5529
        %v5558 = vpack.c.b16 %v5532, %v5531
        %v5559 = vpack.c.b16 %v5534, %v5533
        %v5560 = vpack.c.b16 %v5536, %v5535
        %v5561 = vpack.c.b16 %v5538, %v5537
        %v5562 = vpack.c.b16 %v5540, %v5539
        %v5563 = vpack.c.b16 %v5542, %v5541
        %v5564 = vpack.c.b16 %v5544, %v5543
        %v5565 = vpack.c.b16 %v5546, %v5545
        %v5566 = vpack.c.b16 %v5548, %v5547
        %v5567 = vpack.c.b16 %v5550, %v5549
        %v5568 = vpack.c.b16 %v5552, %v5551
        %5585 = vmatprep.subr.bf16.mxu0 0
        %5586 = vmatpush1.bf16.msra.mxu0 %v5553
        %5587 = vmatprep.subr.bf16.mxu0 0
        %5588 = vmatpush1.bf16.msra.mxu0 %v5554
        %5589 = vmatprep.subr.bf16.mxu0 0
        %5590 = vmatpush1.bf16.msra.mxu0 %v5555
        %5591 = vmatprep.subr.bf16.mxu0 0
        %5592 = vmatpush1.bf16.msra.mxu0 %v5556
        %5593 = vmatprep.subr.bf16.mxu0 0
        %5594 = vmatpush1.bf16.msra.mxu0 %v5557
        %5595 = vmatprep.subr.bf16.mxu0 0
        %5596 = vmatpush1.bf16.msra.mxu0 %v5558
        %5597 = vmatprep.subr.bf16.mxu0 0
        %5598 = vmatpush1.bf16.msra.mxu0 %v5559
        %5599 = vmatprep.subr.bf16.mxu0 0
        %5600 = vmatpush1.bf16.msra.mxu0 %v5560
        %5601 = vmatprep.subr.bf16.mxu0 0
        %5602 = vmatpush1.bf16.msra.mxu0 %v5561
        %5603 = vmatprep.subr.bf16.mxu0 0
        %5604 = vmatpush1.bf16.msra.mxu0 %v5562
        %5605 = vmatprep.subr.bf16.mxu0 0
        %5606 = vmatpush1.bf16.msra.mxu0 %v5563
        %5607 = vmatprep.subr.bf16.mxu0 0
        %5608 = vmatpush1.bf16.msra.mxu0 %v5564
        %5609 = vmatprep.subr.bf16.mxu0 0
        %5610 = vmatpush1.bf16.msra.mxu0 %v5565
        %5611 = vmatprep.subr.bf16.mxu0 0
        %5612 = vmatpush1.bf16.msra.mxu0 %v5566
        %5613 = vmatprep.subr.bf16.mxu0 0
        %5614 = vmatpush1.bf16.msra.mxu0 %v5567
        %5615 = vmatprep.subr.bf16.mxu0 0
        %5616 = vmatpush1.bf16.msra.mxu0 %v5568
        %5617 = vmatprep.mubr.bf16.mxu0 %v4604
        %5618 = vmatmul.mubr.bf16.gmra.mrb[0].mxu0 %v4603
        %v5619 = vpop.f32.mrb[0].mxu0
        %v5620 = vadd.f32 0.0, %v5619
        %v5621 = vpop.f32.mrb[0].mxu0
        %v5622 = vpop.f32.mrb[0].mxu0
        %v5623 = vpop.f32.mrb[0].mxu0
        %5624 = vdwg.mxu0
        %v5625 = vadd.f32 %v5455, %v5620
        %s5626 = scalar_lea.vmem %s5, 768
        %v5627 = vld [vmem:[%s5626] sm:$0xf]
        %v5628 = vld [vmem:[%s5626 + $0x4] sm:$0xf]
        %v5629 = vld [vmem:[%s5626 + $0x8] sm:$0xf]
        %v5630 = vld [vmem:[%s5626 + $0xc] sm:$0xf]
        %v5631 = vld [vmem:[%s5626 + $0x10] sm:$0xf]
        %v5632 = vld [vmem:[%s5626 + $0x14] sm:$0xf]
        %v5633 = vld [vmem:[%s5626 + $0x18] sm:$0xf]
        %v5634 = vld [vmem:[%s5626 + $0x1c] sm:$0xf]
        %v5635 = vld [vmem:[%s5626 + $0x20] sm:$0xf]
        %v5636 = vld [vmem:[%s5626 + $0x24] sm:$0xf]
        %v5637 = vld [vmem:[%s5626 + $0x28] sm:$0xf]
        %v5638 = vld [vmem:[%s5626 + $0x2c] sm:$0xf]
        %v5639 = vld [vmem:[%s5626 + $0x30] sm:$0xf]
        %v5640 = vld [vmem:[%s5626 + $0x34] sm:$0xf]
        %v5641 = vld [vmem:[%s5626 + $0x38] sm:$0xf]
        %v5642 = vld [vmem:[%s5626 + $0x3c] sm:$0xf]
        %v5643 = vld [vmem:[%s5626 + $0x40] sm:$0xf]
        %v5644 = vld [vmem:[%s5626 + $0x44] sm:$0xf]
        %v5645 = vld [vmem:[%s5626 + $0x48] sm:$0xf]
        %v5646 = vld [vmem:[%s5626 + $0x4c] sm:$0xf]
        %v5647 = vld [vmem:[%s5626 + $0x50] sm:$0xf]
        %v5648 = vld [vmem:[%s5626 + $0x54] sm:$0xf]
        %v5649 = vld [vmem:[%s5626 + $0x58] sm:$0xf]
        %v5650 = vld [vmem:[%s5626 + $0x5c] sm:$0xf]
        %v5651 = vld [vmem:[%s5626 + $0x60] sm:$0xf]
        %v5652 = vld [vmem:[%s5626 + $0x64] sm:$0xf]
        %v5653 = vld [vmem:[%s5626 + $0x68] sm:$0xf]
        %v5654 = vld [vmem:[%s5626 + $0x6c] sm:$0xf]
        %v5655 = vld [vmem:[%s5626 + $0x70] sm:$0xf]
        %v5656 = vld [vmem:[%s5626 + $0x74] sm:$0xf]
        %v5657 = vld [vmem:[%s5626 + $0x78] sm:$0xf]
        %v5658 = vld [vmem:[%s5626 + $0x7c] sm:$0xf]
        %v5691 = vunpack.c.l.b16 %v5627
        %v5692 = vunpack.c.l.b16 %v5628
        %v5693 = vunpack.c.l.b16 %v5629
        %v5694 = vunpack.c.l.b16 %v5630
        %v5695 = vunpack.c.l.b16 %v5631
        %v5696 = vunpack.c.l.b16 %v5632
        %v5697 = vunpack.c.l.b16 %v5633
        %v5698 = vunpack.c.l.b16 %v5634
        %v5699 = vunpack.c.l.b16 %v5635
        %v5700 = vunpack.c.l.b16 %v5636
        %v5701 = vunpack.c.l.b16 %v5637
        %v5702 = vunpack.c.l.b16 %v5638
        %v5703 = vunpack.c.l.b16 %v5639
        %v5704 = vunpack.c.l.b16 %v5640
        %v5705 = vunpack.c.l.b16 %v5641
        %v5706 = vunpack.c.l.b16 %v5642
        %v5707 = vunpack.c.l.b16 %v5643
        %v5708 = vunpack.c.l.b16 %v5644
        %v5709 = vunpack.c.l.b16 %v5645
        %v5710 = vunpack.c.l.b16 %v5646
        %v5711 = vunpack.c.l.b16 %v5647
        %v5712 = vunpack.c.l.b16 %v5648
        %v5713 = vunpack.c.l.b16 %v5649
        %v5714 = vunpack.c.l.b16 %v5650
        %v5715 = vunpack.c.l.b16 %v5651
        %v5716 = vunpack.c.l.b16 %v5652
        %v5717 = vunpack.c.l.b16 %v5653
        %v5718 = vunpack.c.l.b16 %v5654
        %v5719 = vunpack.c.l.b16 %v5655
        %v5720 = vunpack.c.l.b16 %v5656
        %v5721 = vunpack.c.l.b16 %v5657
        %v5722 = vunpack.c.l.b16 %v5658
        %v5723 = vpack.c.b16 %v5692, %v5691
        %v5724 = vpack.c.b16 %v5694, %v5693
        %v5725 = vpack.c.b16 %v5696, %v5695
        %v5726 = vpack.c.b16 %v5698, %v5697
        %v5727 = vpack.c.b16 %v5700, %v5699
        %v5728 = vpack.c.b16 %v5702, %v5701
        %v5729 = vpack.c.b16 %v5704, %v5703
        %v5730 = vpack.c.b16 %v5706, %v5705
        %v5731 = vpack.c.b16 %v5708, %v5707
        %v5732 = vpack.c.b16 %v5710, %v5709
        %v5733 = vpack.c.b16 %v5712, %v5711
        %v5734 = vpack.c.b16 %v5714, %v5713
        %v5735 = vpack.c.b16 %v5716, %v5715
        %v5736 = vpack.c.b16 %v5718, %v5717
        %v5737 = vpack.c.b16 %v5720, %v5719
        %v5738 = vpack.c.b16 %v5722, %v5721
        %5755 = vmatprep.subr.bf16.mxu0 0
        %5756 = vmatpush1.bf16.msra.mxu0 %v5723
        %5757 = vmatprep.subr.bf16.mxu0 0
        %5758 = vmatpush1.bf16.msra.mxu0 %v5724
        %5759 = vmatprep.subr.bf16.mxu0 0
        %5760 = vmatpush1.bf16.msra.mxu0 %v5725
        %5761 = vmatprep.subr.bf16.mxu0 0
        %5762 = vmatpush1.bf16.msra.mxu0 %v5726
        %5763 = vmatprep.subr.bf16.mxu0 0
        %5764 = vmatpush1.bf16.msra.mxu0 %v5727
        %5765 = vmatprep.subr.bf16.mxu0 0
        %5766 = vmatpush1.bf16.msra.mxu0 %v5728
        %5767 = vmatprep.subr.bf16.mxu0 0
        %5768 = vmatpush1.bf16.msra.mxu0 %v5729
        %5769 = vmatprep.subr.bf16.mxu0 0
        %5770 = vmatpush1.bf16.msra.mxu0 %v5730
        %5771 = vmatprep.subr.bf16.mxu0 0
        %5772 = vmatpush1.bf16.msra.mxu0 %v5731
        %5773 = vmatprep.subr.bf16.mxu0 0
        %5774 = vmatpush1.bf16.msra.mxu0 %v5732
        %5775 = vmatprep.subr.bf16.mxu0 0
        %5776 = vmatpush1.bf16.msra.mxu0 %v5733
        %5777 = vmatprep.subr.bf16.mxu0 0
        %5778 = vmatpush1.bf16.msra.mxu0 %v5734
        %5779 = vmatprep.subr.bf16.mxu0 0
        %5780 = vmatpush1.bf16.msra.mxu0 %v5735
        %5781 = vmatprep.subr.bf16.mxu0 0
        %5782 = vmatpush1.bf16.msra.mxu0 %v5736
        %5783 = vmatprep.subr.bf16.mxu0 0
        %5784 = vmatpush1.bf16.msra.mxu0 %v5737
        %5785 = vmatprep.subr.bf16.mxu0 0
        %5786 = vmatpush1.bf16.msra.mxu0 %v5738
        %5787 = vmatprep.mubr.bf16.mxu0 %v4606
        %5788 = vmatmul.mubr.bf16.gmra.mrb[0].mxu0 %v4605
        %v5789 = vpop.f32.mrb[0].mxu0
        %v5790 = vadd.f32 0.0, %v5789
        %v5791 = vpop.f32.mrb[0].mxu0
        %v5792 = vpop.f32.mrb[0].mxu0
        %v5793 = vpop.f32.mrb[0].mxu0
        %5794 = vdwg.mxu0
        %v5795 = vadd.f32 %v5625, %v5790
        %s5796 = scalar_lea.vmem %s5, 896
        %v5797 = vld [vmem:[%s5796] sm:$0xf]
        %v5798 = vld [vmem:[%s5796 + $0x4] sm:$0xf]
        %v5799 = vld [vmem:[%s5796 + $0x8] sm:$0xf]
        %v5800 = vld [vmem:[%s5796 + $0xc] sm:$0xf]
        %v5801 = vld [vmem:[%s5796 + $0x10] sm:$0xf]
        %v5802 = vld [vmem:[%s5796 + $0x14] sm:$0xf]
        %v5803 = vld [vmem:[%s5796 + $0x18] sm:$0xf]
        %v5804 = vld [vmem:[%s5796 + $0x1c] sm:$0xf]
        %v5805 = vld [vmem:[%s5796 + $0x20] sm:$0xf]
        %v5806 = vld [vmem:[%s5796 + $0x24] sm:$0xf]
        %v5807 = vld [vmem:[%s5796 + $0x28] sm:$0xf]
        %v5808 = vld [vmem:[%s5796 + $0x2c] sm:$0xf]
        %v5809 = vld [vmem:[%s5796 + $0x30] sm:$0xf]
        %v5810 = vld [vmem:[%s5796 + $0x34] sm:$0xf]
        %v5811 = vld [vmem:[%s5796 + $0x38] sm:$0xf]
        %v5812 = vld [vmem:[%s5796 + $0x3c] sm:$0xf]
        %v5813 = vld [vmem:[%s5796 + $0x40] sm:$0xf]
        %v5814 = vld [vmem:[%s5796 + $0x44] sm:$0xf]
        %v5815 = vld [vmem:[%s5796 + $0x48] sm:$0xf]
        %v5816 = vld [vmem:[%s5796 + $0x4c] sm:$0xf]
        %v5817 = vld [vmem:[%s5796 + $0x50] sm:$0xf]
        %v5818 = vld [vmem:[%s5796 + $0x54] sm:$0xf]
        %v5819 = vld [vmem:[%s5796 + $0x58] sm:$0xf]
        %v5820 = vld [vmem:[%s5796 + $0x5c] sm:$0xf]
        %v5821 = vld [vmem:[%s5796 + $0x60] sm:$0xf]
        %v5822 = vld [vmem:[%s5796 + $0x64] sm:$0xf]
        %v5823 = vld [vmem:[%s5796 + $0x68] sm:$0xf]
        %v5824 = vld [vmem:[%s5796 + $0x6c] sm:$0xf]
        %v5825 = vld [vmem:[%s5796 + $0x70] sm:$0xf]
        %v5826 = vld [vmem:[%s5796 + $0x74] sm:$0xf]
        %v5827 = vld [vmem:[%s5796 + $0x78] sm:$0xf]
        %v5828 = vld [vmem:[%s5796 + $0x7c] sm:$0xf]
        %v5861 = vunpack.c.l.b16 %v5797
        %v5862 = vunpack.c.l.b16 %v5798
        %v5863 = vunpack.c.l.b16 %v5799
        %v5864 = vunpack.c.l.b16 %v5800
        %v5865 = vunpack.c.l.b16 %v5801
        %v5866 = vunpack.c.l.b16 %v5802
        %v5867 = vunpack.c.l.b16 %v5803
        %v5868 = vunpack.c.l.b16 %v5804
        %v5869 = vunpack.c.l.b16 %v5805
        %v5870 = vunpack.c.l.b16 %v5806
        %v5871 = vunpack.c.l.b16 %v5807
        %v5872 = vunpack.c.l.b16 %v5808
        %v5873 = vunpack.c.l.b16 %v5809
        %v5874 = vunpack.c.l.b16 %v5810
        %v5875 = vunpack.c.l.b16 %v5811
        %v5876 = vunpack.c.l.b16 %v5812
        %v5877 = vunpack.c.l.b16 %v5813
        %v5878 = vunpack.c.l.b16 %v5814
        %v5879 = vunpack.c.l.b16 %v5815
        %v5880 = vunpack.c.l.b16 %v5816
        %v5881 = vunpack.c.l.b16 %v5817
        %v5882 = vunpack.c.l.b16 %v5818
        %v5883 = vunpack.c.l.b16 %v5819
        %v5884 = vunpack.c.l.b16 %v5820
        %v5885 = vunpack.c.l.b16 %v5821
        %v5886 = vunpack.c.l.b16 %v5822
        %v5887 = vunpack.c.l.b16 %v5823
        %v5888 = vunpack.c.l.b16 %v5824
        %v5889 = vunpack.c.l.b16 %v5825
        %v5890 = vunpack.c.l.b16 %v5826
        %v5891 = vunpack.c.l.b16 %v5827
        %v5892 = vunpack.c.l.b16 %v5828
        %v5893 = vpack.c.b16 %v5862, %v5861
        %v5894 = vpack.c.b16 %v5864, %v5863
        %v5895 = vpack.c.b16 %v5866, %v5865
        %v5896 = vpack.c.b16 %v5868, %v5867
        %v5897 = vpack.c.b16 %v5870, %v5869
        %v5898 = vpack.c.b16 %v5872, %v5871
        %v5899 = vpack.c.b16 %v5874, %v5873
        %v5900 = vpack.c.b16 %v5876, %v5875
        %v5901 = vpack.c.b16 %v5878, %v5877
        %v5902 = vpack.c.b16 %v5880, %v5879
        %v5903 = vpack.c.b16 %v5882, %v5881
        %v5904 = vpack.c.b16 %v5884, %v5883
        %v5905 = vpack.c.b16 %v5886, %v5885
        %v5906 = vpack.c.b16 %v5888, %v5887
        %v5907 = vpack.c.b16 %v5890, %v5889
        %v5908 = vpack.c.b16 %v5892, %v5891
        %5925 = vmatprep.subr.bf16.mxu0 0
        %5926 = vmatpush1.bf16.msra.mxu0 %v5893
        %5927 = vmatprep.subr.bf16.mxu0 0
        %5928 = vmatpush1.bf16.msra.mxu0 %v5894
        %5929 = vmatprep.subr.bf16.mxu0 0
        %5930 = vmatpush1.bf16.msra.mxu0 %v5895
        %5931 = vmatprep.subr.bf16.mxu0 0
        %5932 = vmatpush1.bf16.msra.mxu0 %v5896
        %5933 = vmatprep.subr.bf16.mxu0 0
        %5934 = vmatpush1.bf16.msra.mxu0 %v5897
        %5935 = vmatprep.subr.bf16.mxu0 0
        %5936 = vmatpush1.bf16.msra.mxu0 %v5898
        %5937 = vmatprep.subr.bf16.mxu0 0
        %5938 = vmatpush1.bf16.msra.mxu0 %v5899
        %5939 = vmatprep.subr.bf16.mxu0 0
        %5940 = vmatpush1.bf16.msra.mxu0 %v5900
        %5941 = vmatprep.subr.bf16.mxu0 0
        %5942 = vmatpush1.bf16.msra.mxu0 %v5901
        %5943 = vmatprep.subr.bf16.mxu0 0
        %5944 = vmatpush1.bf16.msra.mxu0 %v5902
        %5945 = vmatprep.subr.bf16.mxu0 0
        %5946 = vmatpush1.bf16.msra.mxu0 %v5903
        %5947 = vmatprep.subr.bf16.mxu0 0
        %5948 = vmatpush1.bf16.msra.mxu0 %v5904
        %5949 = vmatprep.subr.bf16.mxu0 0
        %5950 = vmatpush1.bf16.msra.mxu0 %v5905
        %5951 = vmatprep.subr.bf16.mxu0 0
        %5952 = vmatpush1.bf16.msra.mxu0 %v5906
        %5953 = vmatprep.subr.bf16.mxu0 0
        %5954 = vmatpush1.bf16.msra.mxu0 %v5907
        %5955 = vmatprep.subr.bf16.mxu0 0
        %5956 = vmatpush1.bf16.msra.mxu0 %v5908
        %5957 = vmatprep.mubr.bf16.mxu0 %v4608
        %5958 = vmatmul.mubr.bf16.gmra.mrb[0].mxu0 %v4607
        %v5959 = vpop.f32.mrb[0].mxu0
        %v5960 = vadd.f32 0.0, %v5959
        %v5961 = vpop.f32.mrb[0].mxu0
        %v5962 = vpop.f32.mrb[0].mxu0
        %v5963 = vpop.f32.mrb[0].mxu0
        %5964 = vdwg.mxu0
        %v5965 = vadd.f32 %v5795, %v5960
        %v5966 = vld [vmem:[%s6] sm:$0x1]
        %v5967 = vadd.f32 %v5965, %v5966
        %v5968 = vmax.f32 %v5967, 0.0
        %v5969 = vpack.c.bf16 %v5968, %v5968
        %v5970 = vld [vmem:[%s7] sm:$0xf]
        %v5971 = vld [vmem:[%s7 + $0x4] sm:$0xf]
        %v5972 = vld [vmem:[%s7 + $0x8] sm:$0xf]
        %v5973 = vld [vmem:[%s7 + $0xc] sm:$0xf]
        %v5974 = vld [vmem:[%s7 + $0x10] sm:$0xf]
        %v5975 = vld [vmem:[%s7 + $0x14] sm:$0xf]
        %v5976 = vld [vmem:[%s7 + $0x18] sm:$0xf]
        %v5977 = vld [vmem:[%s7 + $0x1c] sm:$0xf]
        %v5978 = vld [vmem:[%s7 + $0x20] sm:$0xf]
        %v5979 = vld [vmem:[%s7 + $0x24] sm:$0xf]
        %v5980 = vld [vmem:[%s7 + $0x28] sm:$0xf]
        %v5981 = vld [vmem:[%s7 + $0x2c] sm:$0xf]
        %v5982 = vld [vmem:[%s7 + $0x30] sm:$0xf]
        %v5983 = vld [vmem:[%s7 + $0x34] sm:$0xf]
        %v5984 = vld [vmem:[%s7 + $0x38] sm:$0xf]
        %v5985 = vld [vmem:[%s7 + $0x3c] sm:$0xf]
        %v5986 = vld [vmem:[%s8] sm:$0x1]
        %v6003 = vunpack.c.l.b16 %v5970
        %v6004 = vunpack.c.l.b16 %v5971
        %v6005 = vunpack.c.l.b16 %v5972
        %v6006 = vunpack.c.l.b16 %v5973
        %v6007 = vunpack.c.l.b16 %v5974
        %v6008 = vunpack.c.l.b16 %v5975
        %v6009 = vunpack.c.l.b16 %v5976
        %v6010 = vunpack.c.l.b16 %v5977
        %v6011 = vunpack.c.l.b16 %v5978
        %v6012 = vunpack.c.l.b16 %v5979
        %v6013 = vunpack.c.l.b16 %v5980
        %v6014 = vunpack.c.l.b16 %v5981
        %v6015 = vunpack.c.l.b16 %v5982
        %v6016 = vunpack.c.l.b16 %v5983
        %v6017 = vunpack.c.l.b16 %v5984
        %v6018 = vunpack.c.l.b16 %v5985
        %v6019 = vpack.c.b16 %v6004, %v6003
        %v6020 = vpack.c.b16 %v6006, %v6005
        %v6021 = vpack.c.b16 %v6008, %v6007
        %v6022 = vpack.c.b16 %v6010, %v6009
        %v6023 = vpack.c.b16 %v6012, %v6011
        %v6024 = vpack.c.b16 %v6014, %v6013
        %v6025 = vpack.c.b16 %v6016, %v6015
        %v6026 = vpack.c.b16 %v6018, %v6017
        %6035 = vmatprep.subr.bf16.mxu0 0
        %6036 = vmatpush1.bf16.msra.mxu0 %v6019
        %6037 = vmatprep.subr.bf16.mxu0 0
        %6038 = vmatpush1.bf16.msra.mxu0 %v6020
        %6039 = vmatprep.subr.bf16.mxu0 0
        %6040 = vmatpush1.bf16.msra.mxu0 %v6021
        %6041 = vmatprep.subr.bf16.mxu0 0
        %6042 = vmatpush1.bf16.msra.mxu0 %v6022
        %6043 = vmatprep.subr.bf16.mxu0 0
        %6044 = vmatpush1.bf16.msra.mxu0 %v6023
        %6045 = vmatprep.subr.bf16.mxu0 0
        %6046 = vmatpush1.bf16.msra.mxu0 %v6024
        %6047 = vmatprep.subr.bf16.mxu0 0
        %6048 = vmatpush1.bf16.msra.mxu0 %v6025
        %6049 = vmatprep.subr.bf16.mxu0 0
        %6050 = vmatpush1.bf16.msra.mxu0 %v6026
        %6051 = vmatprep.subr.bf16.mxu0 0
        %6052 = vmatpush1.bf16.msra.mxu0 0
        %6053 = vmatprep.subr.bf16.mxu0 0
        %6054 = vmatpush1.bf16.msra.mxu0 0
        %6055 = vmatprep.subr.bf16.mxu0 0
        %6056 = vmatpush1.bf16.msra.mxu0 0
        %6057 = vmatprep.subr.bf16.mxu0 0
        %6058 = vmatpush1.bf16.msra.mxu0 0
        %6059 = vmatprep.subr.bf16.mxu0 0
        %6060 = vmatpush1.bf16.msra.mxu0 0
        %6061 = vmatprep.subr.bf16.mxu0 0
        %6062 = vmatpush1.bf16.msra.mxu0 0
        %6063 = vmatprep.subr.bf16.mxu0 0
        %6064 = vmatpush1.bf16.msra.mxu0 0
        %6065 = vmatprep.subr.bf16.mxu0 0
        %6066 = vmatpush1.bf16.msra.mxu0 0
        %6067 = vmatprep.mubr.bf16.mxu0 0
        %6068 = vmatmul.mubr.bf16.gmra.mrb[0].mxu0 %v5969
        %v6069 = vpop.f32.mrb[0].mxu0
        %v6070 = vadd.f32 %v5986, %v6069
        %v6071 = vpop.f32.mrb[0].mxu0
        %v6072 = vpop.f32.mrb[0].mxu0
        %v6073 = vpop.f32.mrb[0].mxu0
        %6074 = vdwg.mxu0
        %vm6075 = vcmask 73728
        %6076 = vst.msk [vmem:[%s324] sm:$0x1] %vm6075, %v6070
        %s6077 = sand.u32 %s225, 1
        %s6078 = scalar_lea.sflag [#allocation5], %s6077
        %s6079 = sand.u32 %s225, 1
        %s6080 = scalar_lea.vmem [#allocation4], %s6079
        // Predicated region
        $region57: #{simple_cnn_forward.1} parent=55 // pred_check
          %p6081 = pneg %p235
        $region58: #{simple_cnn_forward.1} parent=55 // pred_check_branch
          %6083 = sbr.rel (%p6081) target = $region60
        $region59: #{simple_cnn_forward.1} parent=55 // pred_region
          %s6085 = ssub.s32 16, 16
          %6086 = vsyncadd %s6078, %s6085
          %s6087 = smul.addr %s23, 16
          %s6088 = scalar_lea.hbm %s9, %s6087
          %s6090 = sshll.u32 %s6080, 4
          %s6091 = int_to_ptr.vmem [resolvable:$true] %s6090
          %6093 = dma.vmem_to_hbm [thread:$0]  %s6091, 16, %s6088, %s6078
        $region60: #{simple_cnn_forward.1} parent=55 // pred_fallthru
          _
      $region56: #{simple_cnn_forward.1} parent=5 // pred_fallthru
        _
      %p6094 = scmp.le.s32.totalorder 2, %s18
      // Predicated region
      $region61: #{simple_cnn_forward.1} parent=5 // pred_check
        %p6095 = pneg %p6094
      $region62: #{simple_cnn_forward.1} parent=5 // pred_check_branch
        %6097 = sbr.rel (%p6095) target = $region64
      $region63: #{simple_cnn_forward.1} parent=5 // pred_region
        %s6098 = ssub.s32 %s18, 2
        // Predicated region
        $region65: #{simple_cnn_forward.1} parent=63 // pred_check
          %p6099 = pneg %p241
        $region66: #{simple_cnn_forward.1} parent=63 // pred_check_branch
          %6101 = sbr.rel (%p6099) target = $region68
        $region67: #{simple_cnn_forward.1} parent=63 // pred_region
          %s6102 = sand.u32 %s226, 1
          %s6103 = scalar_lea.sflag [#allocation5], %s6102
          %s6104 = sand.u32 %s226, 1
          %s6105 = scalar_lea.vmem [#allocation4], %s6104
          %6106 = dma.done %s6103, 16
        $region68: #{simple_cnn_forward.1} parent=63 // pred_fallthru
          _
      $region64: #{simple_cnn_forward.1} parent=5 // pred_fallthru
        _
    $region6: #{simple_cnn_forward.1} parent=1 // loop_footer
      %s22 = sadd.s32 1, %s18
    $region7: #{simple_cnn_forward.1} parent=1 // loop_footer_branch
      %17 = sbr.rel target = $region3
    $region8: #{simple_cnn_forward.1} parent=1 // loop_exit
      _
    %6107 = vsyncpa [#allocation5], 1
    %s6108 = scalar_lea.sflag [#allocation5], 1
    %6109 = vsyncpa %s6108, 1

</llo_original>
